<compile_context>
chip_gen: v7x
topology: tpu7x:2x2x1
jax: 0.10.0
libtpu: 0.0.40
codegen_flags: <defaults>
</compile_context>

<pallas_src>
import functools

import jax
import jax.numpy as jnp
from jax.experimental import pallas as pl
from jax.experimental.pallas import tpu as pltpu

BN_EPS = 1e-3


def _swish(x):
    # MemoryEfficientSwish forward == x * sigmoid(x)
    return x * jax.nn.sigmoid(x)


def _bn_batch(x3, gamma, beta):
    # x3: (N, C, HW); gamma/beta: (1, C, 1).  torch.nn.BatchNorm2d training-mode
    # normalization: per-channel biased batch statistics over (N, H, W).
    cnt = x3.shape[0] * x3.shape[2]
    s1 = jnp.sum(x3, axis=2, keepdims=True)           # lane reduce -> (N, C, 1)
    s2 = jnp.sum(x3 * x3, axis=2, keepdims=True)
    mean = jnp.sum(s1, axis=0, keepdims=True) / cnt   # (1, C, 1)
    ex2 = jnp.sum(s2, axis=0, keepdims=True) / cnt
    var = jnp.maximum(ex2 - mean * mean, 0.0)         # clamp: no rsqrt(<0) from cancellation
    inv = jax.lax.rsqrt(var + BN_EPS)
    return (x3 - mean) * (inv * gamma) + beta


def _shift_hw(v, d):
    # Shifted copy along the flattened-spatial lane axis with a zero halo:
    # y[..., i] = v[..., i + d] if 0 <= i + d < HW else 0.
    if d == 0:
        return v
    zeros = jnp.zeros(v.shape[:-1] + (abs(d),), v.dtype)
    if d > 0:
        return jnp.concatenate([v[..., d:], zeros], axis=-1)
    return jnp.concatenate([zeros, v[..., :d]], axis=-1)


def mbconv_kernel(x_ref, w_exp_ref, g0_ref, b0_ref,
                  w_dw_ref, g1_ref, b1_ref,
                  w_sr_ref, bsr_ref, w_se_ref, bse_ref,
                  w_pr_ref, g2_ref, b2_ref,
                  o_ref, *, img_w):
    _, Cin, HW = x_ref.shape
    Cexp = g0_ref.shape[0]
    Cse = w_sr_ref.shape[0]
    W = img_w

    x = x_ref[...]                                        # (N, Cin, HW)

    # ---- expand 1x1 conv: unrolled VPU broadcast-MAC over Cin (=8) ----------
    w_exp = w_exp_ref[...]                                # (Cin, Cexp, 1)
    xe = x[:, 0:1, :] * w_exp[0][None]                    # (N, Cexp, HW)
    for ci in range(1, Cin):
        xe = xe + x[:, ci:ci + 1, :] * w_exp[ci][None]
    xe = _swish(_bn_batch(xe, g0_ref[...][None], b0_ref[...][None]))

    # ---- depthwise 3x3, stride 1, SAME padding ------------------------------
    # hw = h*W + w lives on the lane axis, so tap (dy, dx) is a lane shift by
    # dy*W + dx.  Build the three dx-shifted, w-masked columns once, then apply
    # the three dy shifts (the zero halo comes for free from the shifted copy).
    w_pos = jax.lax.broadcasted_iota(jnp.int32, (1, 1, HW), 2) % W
    cols = []
    for dx in (-1, 0, 1):
        c = _shift_hw(xe, dx)
        if dx != 0:
            valid = (w_pos + dx >= 0) & (w_pos + dx < W)
            c = jnp.where(valid, c, 0.0)
        cols.append(c)
    w_dw = w_dw_ref[...]                                  # (9, Cexp, 1)
    acc = jnp.zeros_like(xe)
    for ky in range(3):
        for kx in range(3):
            acc = acc + _shift_hw(cols[kx], (ky - 1) * W) * w_dw[ky * 3 + kx][None]
    xd = _swish(_bn_batch(acc, g1_ref[...][None], b1_ref[...][None]))

    # ---- squeeze-and-excite (Cse = 2, fully unrolled on the VPU) ------------
    pooled = jnp.mean(xd, axis=2, keepdims=True)          # (N, Cexp, 1)
    w_sr = w_sr_ref[...]                                  # (Cse, Cexp, 1)
    w_se = w_se_ref[...]                                  # (Cse, Cexp, 1)
    bsr = bsr_ref[...]                                    # (Cse, 1, 1)
    gate_pre = bse_ref[...][None]                         # (1, Cexp, 1)
    for cs in range(Cse):
        s = jnp.sum(pooled * w_sr[cs][None], axis=1, keepdims=True) + bsr[cs]
        gate_pre = gate_pre + _swish(s) * w_se[cs][None]
    xg = xd * jax.nn.sigmoid(gate_pre)                    # (N, Cexp, HW)

    # ---- project 1x1 conv: unrolled VPU broadcast-MAC over Cexp (=32) -------
    w_pr = w_pr_ref[...]                                  # (Cexp, Cout, 1)
    xp = xg[:, 0:1, :] * w_pr[0][None]                    # (N, Cout, HW)
    for ce in range(1, Cexp):
        xp = xp + xg[:, ce:ce + 1, :] * w_pr[ce][None]
    xp = _bn_batch(xp, g2_ref[...][None], b2_ref[...][None])

    # id_skip active: stride == 1 and input_filters == output_filters.
    # TODO(synk): drop_connect (stochastic depth) not implemented; forward is
    # exercised with drop_connect_rate=None so it is a no-op here.
    o_ref[...] = (xp + x).astype(o_ref.dtype)             # lane-dense (N, Cout, HW) store


def _pack_params(p):
    """Rearrange PyTorch-layout weights into the kernel's channel-on-sublane layout."""
    cexp = p["g0"].shape[0]
    col = lambda v: v[:, None]                                        # (C,) -> (C, 1)
    return dict(
        w_exp=jnp.transpose(p["expand_w"][:, :, 0, 0])[..., None],    # (Cin, Cexp, 1)
        g0=col(p["g0"]), b0=col(p["b0"]),
        w_dw=jnp.transpose(p["dw_w"].reshape(cexp, 9))[..., None],    # (9, Cexp, 1), row = ky*3+kx
        g1=col(p["g1"]), b1=col(p["b1"]),
        w_sr=p["sr_w"][:, :, 0, 0][..., None],                        # (Cse, Cexp, 1)
        b_sr=p["sr_b"][:, None, None],                                # (Cse, 1, 1)
        w_se=jnp.transpose(p["se_w"][:, :, 0, 0])[..., None],         # (Cse, Cexp, 1)
        b_se=col(p["se_b"]),                                          # (Cexp, 1)
        w_pr=jnp.transpose(p["pr_w"][:, :, 0, 0])[..., None],         # (Cexp, Cout, 1)
        g2=col(p["g2"]), b2=col(p["b2"]),
    )


@jax.jit
def mbconv_block(x_nchw, params):
    """MBConvBlock forward.  x_nchw: (N, Cin, H, W) float32, PyTorch layout."""
    N, Cin, H, W = x_nchw.shape
    HW = H * W
    kp = _pack_params(params)
    Cout = kp["g2"].shape[0]

    x3 = x_nchw.astype(jnp.float32).reshape(N, Cin, HW)   # free reshape (no transpose)
    args = (x3, kp["w_exp"], kp["g0"], kp["b0"],
            kp["w_dw"], kp["g1"], kp["b1"],
            kp["w_sr"], kp["b_sr"], kp["w_se"], kp["b_se"],
            kp["w_pr"], kp["g2"], kp["b2"])

    def full_spec(shape):
        nd = len(shape)
        return pl.BlockSpec(shape, lambda i, _nd=nd: (0,) * _nd)

    out = pl.pallas_call(
        functools.partial(mbconv_kernel, img_w=W),
        out_shape=jax.ShapeDtypeStruct((N, Cout, HW), jnp.float32),
        grid_spec=pltpu.PrefetchScalarGridSpec(
            num_scalar_prefetch=0,
            grid=(1,),
            in_specs=[full_spec(a.shape) for a in args],
            out_specs=full_spec((N, Cout, HW)),
        ),
        # Single VMEM-resident block: training-mode BN couples all (N,H,W)
        # positions through the per-channel stats.  At real MBConv sizes this
        # would become a spatially tiled grid (parallel axis for the 2nd TC on
        # v7x) with a two-pass BN; unnecessary at 2x8x16x16.
        compiler_params=pltpu.CompilerParams(dimension_semantics=("arbitrary",)),
    )(*args)
    return out.reshape(N, Cout, H, W)                     # free reshape (no transpose)


def init_params(key, cin=8, expand_ratio=4, se_ratio=0.25, cout=8):
    """Parameters in the original PyTorch layouts."""
    cexp = cin * expand_ratio
    cse = max(1, int(cin * se_ratio))
    ks = jax.random.split(key, 13)
    f32 = jnp.float32
    n = lambda k, shape: (0.1 * jax.random.normal(k, shape)).astype(f32)
    g = lambda k, c: (1.0 + 0.1 * jax.random.normal(k, (c,))).astype(f32)
    return dict(
        expand_w=n(ks[0], (cexp, cin, 1, 1)),        # _expand_conv.weight
        g0=g(ks[1], cexp), b0=n(ks[2], (cexp,)),     # _bn0
        dw_w=n(ks[3], (cexp, 1, 3, 3)),              # _depthwise_conv.weight
        g1=g(ks[4], cexp), b1=n(ks[5], (cexp,)),     # _bn1
        sr_w=n(ks[6], (cse, cexp, 1, 1)),            # _se_reduce.weight
        sr_b=n(ks[7], (cse,)),                       # _se_reduce.bias
        se_w=n(ks[8], (cexp, cse, 1, 1)),            # _se_expand.weight
        se_b=n(ks[9], (cexp,)),                      # _se_expand.bias
        pr_w=n(ks[10], (cout, cexp, 1, 1)),          # _project_conv.weight
        g2=g(ks[11], cout), b2=n(ks[12], (cout,)),   # _bn2
    )


def mbconv_reference(x, p):
    """Pure-JAX NCHW reference mirroring MBConvBlock.forward (training-mode BN)."""
    def bn(h, gamma, beta):
        mean = jnp.mean(h, axis=(0, 2, 3), keepdims=True)
        var = jnp.mean(jnp.square(h - mean), axis=(0, 2, 3), keepdims=True)
        return ((h - mean) * jax.lax.rsqrt(var + BN_EPS) * gamma.reshape(1, -1, 1, 1)
                + beta.reshape(1, -1, 1, 1))

    swish = lambda h: h * jax.nn.sigmoid(h)
    conv = functools.partial(jax.lax.conv_general_dilated, window_strides=(1, 1),
                             dimension_numbers=("NCHW", "OIHW", "NCHW"),
                             precision=jax.lax.Precision.HIGHEST)
    h = conv(x, p["expand_w"], padding="VALID")
    h = swish(bn(h, p["g0"], p["b0"]))
    h = conv(h, p["dw_w"], padding=((1, 1), (1, 1)),
             feature_group_count=p["dw_w"].shape[0])
    h = swish(bn(h, p["g1"], p["b1"]))
    s = jnp.mean(h, axis=(2, 3), keepdims=True)
    s = conv(s, p["sr_w"], padding="VALID") + p["sr_b"].reshape(1, -1, 1, 1)
    s = conv(swish(s), p["se_w"], padding="VALID") + p["se_b"].reshape(1, -1, 1, 1)
    h = jax.nn.sigmoid(s) * h
    h = bn(conv(h, p["pr_w"], padding="VALID"), p["g2"], p["b2"])
    return h + x   # id_skip (stride 1, Cin == Cout); drop_connect_rate=None


if __name__ == "__main__":
    key = jax.random.PRNGKey(0)
    k_x, k_p = jax.random.split(key)
    # PyTorch-style NCHW input: batch=2, channels=8, spatial=16x16
    x = jax.random.normal(k_x, (2, 8, 16, 16), jnp.float32)
    params = init_params(k_p, cin=8, expand_ratio=4, se_ratio=0.25, cout=8)

    y = jax.block_until_ready(mbconv_block(x, params))
    assert y.shape == x.shape, y.shape
    assert bool(jnp.all(jnp.isfinite(y)))

    y_ref = mbconv_reference(x, params)
    max_err = float(jnp.max(jnp.abs(y - y_ref)))
    assert max_err < 2e-3, f"kernel deviates from reference: max|err|={max_err}"
    print("KERNEL_OK")
</pallas_src>

<mosaic_0001>
module attributes {stable_mosaic.version = 11 : i64} {
  func.func @mbconv_kernel(%arg0: i32, %arg1: memref<2x8x256xf32, #tpu.memory_space<vmem>>, %arg2: memref<8x32x1xf32, #tpu.memory_space<vmem>>, %arg3: memref<32x1xf32, #tpu.memory_space<vmem>>, %arg4: memref<32x1xf32, #tpu.memory_space<vmem>>, %arg5: memref<9x32x1xf32, #tpu.memory_space<vmem>>, %arg6: memref<32x1xf32, #tpu.memory_space<vmem>>, %arg7: memref<32x1xf32, #tpu.memory_space<vmem>>, %arg8: memref<2x32x1xf32, #tpu.memory_space<vmem>>, %arg9: memref<2x1x1xf32, #tpu.memory_space<vmem>>, %arg10: memref<2x32x1xf32, #tpu.memory_space<vmem>>, %arg11: memref<32x1xf32, #tpu.memory_space<vmem>>, %arg12: memref<32x8x1xf32, #tpu.memory_space<vmem>>, %arg13: memref<8x1xf32, #tpu.memory_space<vmem>>, %arg14: memref<8x1xf32, #tpu.memory_space<vmem>>, %arg15: memref<2x8x256xf32, #tpu.memory_space<vmem>>) attributes {dimension_semantics = [#tpu.dimension_semantics<arbitrary>], iteration_bounds = array<i64: 1>, scalar_prefetch = 0 : i64, scratch_operands = 0 : i64, tpu.core_type = #tpu.core_type<tc>, window_params = [{pipeline_mode = #tpu.pipeline_mode<synchronous>, transform_indices = @transform_0, window_bounds = array<i64: 2, 8, 256>}, {pipeline_mode = #tpu.pipeline_mode<synchronous>, transform_indices = @transform_1, window_bounds = array<i64: 8, 32, 1>}, {pipeline_mode = #tpu.pipeline_mode<synchronous>, transform_indices = @transform_2, window_bounds = array<i64: 32, 1>}, {pipeline_mode = #tpu.pipeline_mode<synchronous>, transform_indices = @transform_3, window_bounds = array<i64: 32, 1>}, {pipeline_mode = #tpu.pipeline_mode<synchronous>, transform_indices = @transform_4, window_bounds = array<i64: 9, 32, 1>}, {pipeline_mode = #tpu.pipeline_mode<synchronous>, transform_indices = @transform_5, window_bounds = array<i64: 32, 1>}, {pipeline_mode = #tpu.pipeline_mode<synchronous>, transform_indices = @transform_6, window_bounds = array<i64: 32, 1>}, {pipeline_mode = #tpu.pipeline_mode<synchronous>, transform_indices = @transform_7, window_bounds = array<i64: 2, 32, 1>}, {pipeline_mode = #tpu.pipeline_mode<synchronous>, transform_indices = @transform_8, window_bounds = array<i64: 2, 1, 1>}, {pipeline_mode = #tpu.pipeline_mode<synchronous>, transform_indices = @transform_9, window_bounds = array<i64: 2, 32, 1>}, {pipeline_mode = #tpu.pipeline_mode<synchronous>, transform_indices = @transform_10, window_bounds = array<i64: 32, 1>}, {pipeline_mode = #tpu.pipeline_mode<synchronous>, transform_indices = @transform_11, window_bounds = array<i64: 32, 8, 1>}, {pipeline_mode = #tpu.pipeline_mode<synchronous>, transform_indices = @transform_12, window_bounds = array<i64: 8, 1>}, {pipeline_mode = #tpu.pipeline_mode<synchronous>, transform_indices = @transform_13, window_bounds = array<i64: 8, 1>}, {pipeline_mode = #tpu.pipeline_mode<synchronous>, transform_indices = @transform_14, window_bounds = array<i64: 2, 8, 256>}]} {
    %c0 = arith.constant 0 : index
    %c0_0 = arith.constant 0 : index
    %c0_1 = arith.constant 0 : index
    %0 = vector.load %arg1[%c0, %c0_0, %c0_1] : memref<2x8x256xf32, #tpu.memory_space<vmem>>, vector<2x8x256xf32>
    %c0_2 = arith.constant 0 : index
    %c0_3 = arith.constant 0 : index
    %c0_4 = arith.constant 0 : index
    %1 = vector.load %arg2[%c0_2, %c0_3, %c0_4] : memref<8x32x1xf32, #tpu.memory_space<vmem>>, vector<8x32x1xf32>
    %2 = vector.extract_strided_slice %0 {offsets = [0, 0, 0], sizes = [2, 1, 256], strides = [1, 1, 1]} : vector<2x8x256xf32> to vector<2x1x256xf32>
    %3 = vector.extract_strided_slice %1 {offsets = [0, 0, 0], sizes = [1, 32, 1], strides = [1, 1, 1]} : vector<8x32x1xf32> to vector<1x32x1xf32>
    %4 = vector.shape_cast %3 : vector<1x32x1xf32> to vector<32x1xf32>
    %5 = vector.shape_cast %4 : vector<32x1xf32> to vector<1x32x1xf32>
    %6 = vector.broadcast %2 : vector<2x1x256xf32> to vector<2x32x256xf32>
    %7 = vector.broadcast %5 : vector<1x32x1xf32> to vector<2x32x256xf32>
    %8 = arith.mulf %6, %7 : vector<2x32x256xf32>
    %9 = vector.extract_strided_slice %0 {offsets = [0, 1, 0], sizes = [2, 1, 256], strides = [1, 1, 1]} : vector<2x8x256xf32> to vector<2x1x256xf32>
    %10 = vector.extract_strided_slice %1 {offsets = [1, 0, 0], sizes = [1, 32, 1], strides = [1, 1, 1]} : vector<8x32x1xf32> to vector<1x32x1xf32>
    %11 = vector.shape_cast %10 : vector<1x32x1xf32> to vector<32x1xf32>
    %12 = vector.shape_cast %11 : vector<32x1xf32> to vector<1x32x1xf32>
    %13 = vector.broadcast %9 : vector<2x1x256xf32> to vector<2x32x256xf32>
    %14 = vector.broadcast %12 : vector<1x32x1xf32> to vector<2x32x256xf32>
    %15 = arith.mulf %13, %14 : vector<2x32x256xf32>
    %16 = arith.addf %8, %15 : vector<2x32x256xf32>
    %17 = vector.extract_strided_slice %0 {offsets = [0, 2, 0], sizes = [2, 1, 256], strides = [1, 1, 1]} : vector<2x8x256xf32> to vector<2x1x256xf32>
    %18 = vector.extract_strided_slice %1 {offsets = [2, 0, 0], sizes = [1, 32, 1], strides = [1, 1, 1]} : vector<8x32x1xf32> to vector<1x32x1xf32>
    %19 = vector.shape_cast %18 : vector<1x32x1xf32> to vector<32x1xf32>
    %20 = vector.shape_cast %19 : vector<32x1xf32> to vector<1x32x1xf32>
    %21 = vector.broadcast %17 : vector<2x1x256xf32> to vector<2x32x256xf32>
    %22 = vector.broadcast %20 : vector<1x32x1xf32> to vector<2x32x256xf32>
    %23 = arith.mulf %21, %22 : vector<2x32x256xf32>
    %24 = arith.addf %16, %23 : vector<2x32x256xf32>
    %25 = vector.extract_strided_slice %0 {offsets = [0, 3, 0], sizes = [2, 1, 256], strides = [1, 1, 1]} : vector<2x8x256xf32> to vector<2x1x256xf32>
    %26 = vector.extract_strided_slice %1 {offsets = [3, 0, 0], sizes = [1, 32, 1], strides = [1, 1, 1]} : vector<8x32x1xf32> to vector<1x32x1xf32>
    %27 = vector.shape_cast %26 : vector<1x32x1xf32> to vector<32x1xf32>
    %28 = vector.shape_cast %27 : vector<32x1xf32> to vector<1x32x1xf32>
    %29 = vector.broadcast %25 : vector<2x1x256xf32> to vector<2x32x256xf32>
    %30 = vector.broadcast %28 : vector<1x32x1xf32> to vector<2x32x256xf32>
    %31 = arith.mulf %29, %30 : vector<2x32x256xf32>
    %32 = arith.addf %24, %31 : vector<2x32x256xf32>
    %33 = vector.extract_strided_slice %0 {offsets = [0, 4, 0], sizes = [2, 1, 256], strides = [1, 1, 1]} : vector<2x8x256xf32> to vector<2x1x256xf32>
    %34 = vector.extract_strided_slice %1 {offsets = [4, 0, 0], sizes = [1, 32, 1], strides = [1, 1, 1]} : vector<8x32x1xf32> to vector<1x32x1xf32>
    %35 = vector.shape_cast %34 : vector<1x32x1xf32> to vector<32x1xf32>
    %36 = vector.shape_cast %35 : vector<32x1xf32> to vector<1x32x1xf32>
    %37 = vector.broadcast %33 : vector<2x1x256xf32> to vector<2x32x256xf32>
    %38 = vector.broadcast %36 : vector<1x32x1xf32> to vector<2x32x256xf32>
    %39 = arith.mulf %37, %38 : vector<2x32x256xf32>
    %40 = arith.addf %32, %39 : vector<2x32x256xf32>
    %41 = vector.extract_strided_slice %0 {offsets = [0, 5, 0], sizes = [2, 1, 256], strides = [1, 1, 1]} : vector<2x8x256xf32> to vector<2x1x256xf32>
    %42 = vector.extract_strided_slice %1 {offsets = [5, 0, 0], sizes = [1, 32, 1], strides = [1, 1, 1]} : vector<8x32x1xf32> to vector<1x32x1xf32>
    %43 = vector.shape_cast %42 : vector<1x32x1xf32> to vector<32x1xf32>
    %44 = vector.shape_cast %43 : vector<32x1xf32> to vector<1x32x1xf32>
    %45 = vector.broadcast %41 : vector<2x1x256xf32> to vector<2x32x256xf32>
    %46 = vector.broadcast %44 : vector<1x32x1xf32> to vector<2x32x256xf32>
    %47 = arith.mulf %45, %46 : vector<2x32x256xf32>
    %48 = arith.addf %40, %47 : vector<2x32x256xf32>
    %49 = vector.extract_strided_slice %0 {offsets = [0, 6, 0], sizes = [2, 1, 256], strides = [1, 1, 1]} : vector<2x8x256xf32> to vector<2x1x256xf32>
    %50 = vector.extract_strided_slice %1 {offsets = [6, 0, 0], sizes = [1, 32, 1], strides = [1, 1, 1]} : vector<8x32x1xf32> to vector<1x32x1xf32>
    %51 = vector.shape_cast %50 : vector<1x32x1xf32> to vector<32x1xf32>
    %52 = vector.shape_cast %51 : vector<32x1xf32> to vector<1x32x1xf32>
    %53 = vector.broadcast %49 : vector<2x1x256xf32> to vector<2x32x256xf32>
    %54 = vector.broadcast %52 : vector<1x32x1xf32> to vector<2x32x256xf32>
    %55 = arith.mulf %53, %54 : vector<2x32x256xf32>
    %56 = arith.addf %48, %55 : vector<2x32x256xf32>
    %57 = vector.extract_strided_slice %0 {offsets = [0, 7, 0], sizes = [2, 1, 256], strides = [1, 1, 1]} : vector<2x8x256xf32> to vector<2x1x256xf32>
    %58 = vector.extract_strided_slice %1 {offsets = [7, 0, 0], sizes = [1, 32, 1], strides = [1, 1, 1]} : vector<8x32x1xf32> to vector<1x32x1xf32>
    %59 = vector.shape_cast %58 : vector<1x32x1xf32> to vector<32x1xf32>
    %60 = vector.shape_cast %59 : vector<32x1xf32> to vector<1x32x1xf32>
    %61 = vector.broadcast %57 : vector<2x1x256xf32> to vector<2x32x256xf32>
    %62 = vector.broadcast %60 : vector<1x32x1xf32> to vector<2x32x256xf32>
    %63 = arith.mulf %61, %62 : vector<2x32x256xf32>
    %64 = arith.addf %56, %63 : vector<2x32x256xf32>
    %c0_5 = arith.constant 0 : index
    %c0_6 = arith.constant 0 : index
    %65 = vector.load %arg3[%c0_5, %c0_6] : memref<32x1xf32, #tpu.memory_space<vmem>>, vector<32x1xf32>
    %66 = vector.shape_cast %65 : vector<32x1xf32> to vector<1x32x1xf32>
    %c0_7 = arith.constant 0 : index
    %c0_8 = arith.constant 0 : index
    %67 = vector.load %arg4[%c0_7, %c0_8] : memref<32x1xf32, #tpu.memory_space<vmem>>, vector<32x1xf32>
    %68 = vector.shape_cast %67 : vector<32x1xf32> to vector<1x32x1xf32>
    %cst = arith.constant dense<0.000000e+00> : vector<2x32xf32>
    %69 = vector.multi_reduction <add>, %64, %cst [2] : vector<2x32x256xf32> to vector<2x32xf32>
    %70 = vector.shape_cast %69 : vector<2x32xf32> to vector<2x32x1xf32>
    %71 = arith.mulf %64, %64 : vector<2x32x256xf32>
    %cst_9 = arith.constant dense<0.000000e+00> : vector<2x32xf32>
    %72 = vector.multi_reduction <add>, %71, %cst_9 [2] : vector<2x32x256xf32> to vector<2x32xf32>
    %73 = vector.shape_cast %72 : vector<2x32xf32> to vector<2x32x1xf32>
    %cst_10 = arith.constant dense<0.000000e+00> : vector<32x1xf32>
    %74 = vector.multi_reduction <add>, %70, %cst_10 [0] : vector<2x32x1xf32> to vector<32x1xf32>
    %75 = vector.shape_cast %74 : vector<32x1xf32> to vector<1x32x1xf32>
    %cst_11 = arith.constant 5.120000e+02 : f32
    %76 = vector.broadcast %cst_11 : f32 to vector<1x32x1xf32>
    %77 = arith.divf %75, %76 : vector<1x32x1xf32>
    %cst_12 = arith.constant dense<0.000000e+00> : vector<32x1xf32>
    %78 = vector.multi_reduction <add>, %73, %cst_12 [0] : vector<2x32x1xf32> to vector<32x1xf32>
    %79 = vector.shape_cast %78 : vector<32x1xf32> to vector<1x32x1xf32>
    %cst_13 = arith.constant 5.120000e+02 : f32
    %80 = vector.broadcast %cst_13 : f32 to vector<1x32x1xf32>
    %81 = arith.divf %79, %80 : vector<1x32x1xf32>
    %82 = arith.mulf %77, %77 : vector<1x32x1xf32>
    %83 = arith.subf %81, %82 : vector<1x32x1xf32>
    %cst_14 = arith.constant 0.000000e+00 : f32
    %84 = vector.broadcast %cst_14 : f32 to vector<1x32x1xf32>
    %85 = arith.maximumf %83, %84 : vector<1x32x1xf32>
    %cst_15 = arith.constant 1.000000e-03 : f32
    %86 = vector.broadcast %cst_15 : f32 to vector<1x32x1xf32>
    %87 = arith.addf %85, %86 : vector<1x32x1xf32>
    %88 = math.rsqrt %87 : vector<1x32x1xf32>
    %89 = vector.broadcast %77 : vector<1x32x1xf32> to vector<2x32x256xf32>
    %90 = arith.subf %64, %89 : vector<2x32x256xf32>
    %91 = arith.mulf %88, %66 : vector<1x32x1xf32>
    %92 = vector.broadcast %91 : vector<1x32x1xf32> to vector<2x32x256xf32>
    %93 = arith.mulf %90, %92 : vector<2x32x256xf32>
    %94 = vector.broadcast %68 : vector<1x32x1xf32> to vector<2x32x256xf32>
    %95 = arith.addf %93, %94 : vector<2x32x256xf32>
    %96 = arith.negf %95 : vector<2x32x256xf32>
    %97 = math.exp %96 : vector<2x32x256xf32>
    %cst_16 = arith.constant 1.000000e+00 : f32
    %98 = vector.broadcast %cst_16 : f32 to vector<2x32x256xf32>
    %99 = arith.addf %98, %97 : vector<2x32x256xf32>
    %100 = arith.divf %98, %99 : vector<2x32x256xf32>
    %101 = arith.mulf %95, %100 : vector<2x32x256xf32>
    %102 = tpu.iota {dimensions = array<i32: 2>} : vector<1x1x256xi32>
    %c16_i32 = arith.constant 16 : i32
    %c0_i32 = arith.constant 0 : i32
    %103 = arith.cmpi eq, %c16_i32, %c0_i32 : i32
    %c1_i32 = arith.constant 1 : i32
    %104 = arith.select %103, %c1_i32, %c16_i32 : i32
    %105 = vector.broadcast %104 : i32 to vector<1x1x256xi32>
    %106 = arith.remsi %102, %105 : vector<1x1x256xi32>
    %c0_i32_17 = arith.constant 0 : i32
    %107 = vector.broadcast %c0_i32_17 : i32 to vector<1x1x256xi32>
    %108 = arith.cmpi ne, %106, %107 : vector<1x1x256xi32>
    %c0_i32_18 = arith.constant 0 : i32
    %109 = vector.broadcast %c0_i32_18 : i32 to vector<1x1x256xi32>
    %110 = arith.cmpi slt, %106, %109 : vector<1x1x256xi32>
    %c0_i32_19 = arith.constant 0 : i32
    %111 = arith.cmpi slt, %104, %c0_i32_19 : i32
    %112 = vector.broadcast %111 : i1 to vector<1x1x256xi1>
    %113 = vector.broadcast %112 : vector<1x1x256xi1> to vector<1x1x256xi1>
    %114 = arith.xori %110, %113 : vector<1x1x256xi1>
    %115 = arith.andi %114, %108 : vector<1x1x256xi1>
    %116 = vector.broadcast %104 : i32 to vector<1x1x256xi32>
    %117 = arith.addi %106, %116 : vector<1x1x256xi32>
    %118 = arith.select %115, %117, %106 : vector<1x1x256xi1>, vector<1x1x256xi32>
    %cst_20 = arith.constant 0.000000e+00 : f32
    %119 = vector.broadcast %cst_20 : f32 to vector<2x32x1xf32>
    %120 = vector.extract_strided_slice %101 {offsets = [0, 0, 0], sizes = [2, 32, 255], strides = [1, 1, 1]} : vector<2x32x256xf32> to vector<2x32x255xf32>
    %121 = tpu.concatenate %119, %120 in 2 : vector<2x32x1xf32>, vector<2x32x255xf32> -> vector<2x32x256xf32>
    %c-1_i32 = arith.constant -1 : i32
    %122 = vector.broadcast %c-1_i32 : i32 to vector<1x1x256xi32>
    %123 = arith.addi %118, %122 : vector<1x1x256xi32>
    %c0_i32_21 = arith.constant 0 : i32
    %124 = vector.broadcast %c0_i32_21 : i32 to vector<1x1x256xi32>
    %125 = arith.cmpi sge, %123, %124 : vector<1x1x256xi32>
    %c-1_i32_22 = arith.constant -1 : i32
    %126 = vector.broadcast %c-1_i32_22 : i32 to vector<1x1x256xi32>
    %127 = arith.addi %118, %126 : vector<1x1x256xi32>
    %c16_i32_23 = arith.constant 16 : i32
    %128 = vector.broadcast %c16_i32_23 : i32 to vector<1x1x256xi32>
    %129 = arith.cmpi slt, %127, %128 : vector<1x1x256xi32>
    %130 = arith.andi %125, %129 : vector<1x1x256xi1>
    %cst_24 = arith.constant 0.000000e+00 : f32
    %131 = vector.shape_cast %130 : vector<1x1x256xi1> to vector<1x1x256xi1>
    %132 = vector.broadcast %131 : vector<1x1x256xi1> to vector<2x32x256xi1>
    %133 = vector.broadcast %cst_24 : f32 to vector<2x32x256xf32>
    %134 = arith.select %132, %121, %133 : vector<2x32x256xi1>, vector<2x32x256xf32>
    %cst_25 = arith.constant 0.000000e+00 : f32
    %135 = vector.broadcast %cst_25 : f32 to vector<2x32x1xf32>
    %136 = vector.extract_strided_slice %101 {offsets = [0, 0, 1], sizes = [2, 32, 255], strides = [1, 1, 1]} : vector<2x32x256xf32> to vector<2x32x255xf32>
    %137 = tpu.concatenate %136, %135 in 2 : vector<2x32x255xf32>, vector<2x32x1xf32> -> vector<2x32x256xf32>
    %c1_i32_26 = arith.constant 1 : i32
    %138 = vector.broadcast %c1_i32_26 : i32 to vector<1x1x256xi32>
    %139 = arith.addi %118, %138 : vector<1x1x256xi32>
    %c0_i32_27 = arith.constant 0 : i32
    %140 = vector.broadcast %c0_i32_27 : i32 to vector<1x1x256xi32>
    %141 = arith.cmpi sge, %139, %140 : vector<1x1x256xi32>
    %c1_i32_28 = arith.constant 1 : i32
    %142 = vector.broadcast %c1_i32_28 : i32 to vector<1x1x256xi32>
    %143 = arith.addi %118, %142 : vector<1x1x256xi32>
    %c16_i32_29 = arith.constant 16 : i32
    %144 = vector.broadcast %c16_i32_29 : i32 to vector<1x1x256xi32>
    %145 = arith.cmpi slt, %143, %144 : vector<1x1x256xi32>
    %146 = arith.andi %141, %145 : vector<1x1x256xi1>
    %cst_30 = arith.constant 0.000000e+00 : f32
    %147 = vector.shape_cast %146 : vector<1x1x256xi1> to vector<1x1x256xi1>
    %148 = vector.broadcast %147 : vector<1x1x256xi1> to vector<2x32x256xi1>
    %149 = vector.broadcast %cst_30 : f32 to vector<2x32x256xf32>
    %150 = arith.select %148, %137, %149 : vector<2x32x256xi1>, vector<2x32x256xf32>
    %c0_31 = arith.constant 0 : index
    %c0_32 = arith.constant 0 : index
    %c0_33 = arith.constant 0 : index
    %151 = vector.load %arg5[%c0_31, %c0_32, %c0_33] : memref<9x32x1xf32, #tpu.memory_space<vmem>>, vector<9x32x1xf32>
    %cst_34 = arith.constant 0.000000e+00 : f32
    %152 = vector.broadcast %cst_34 : f32 to vector<2x32x256xf32>
    %cst_35 = arith.constant 0.000000e+00 : f32
    %153 = vector.broadcast %cst_35 : f32 to vector<2x32x16xf32>
    %154 = vector.extract_strided_slice %134 {offsets = [0, 0, 0], sizes = [2, 32, 240], strides = [1, 1, 1]} : vector<2x32x256xf32> to vector<2x32x240xf32>
    %155 = tpu.concatenate %153, %154 in 2 : vector<2x32x16xf32>, vector<2x32x240xf32> -> vector<2x32x256xf32>
    %156 = vector.extract_strided_slice %151 {offsets = [0, 0, 0], sizes = [1, 32, 1], strides = [1, 1, 1]} : vector<9x32x1xf32> to vector<1x32x1xf32>
    %157 = vector.shape_cast %156 : vector<1x32x1xf32> to vector<32x1xf32>
    %158 = vector.shape_cast %157 : vector<32x1xf32> to vector<1x32x1xf32>
    %159 = vector.broadcast %158 : vector<1x32x1xf32> to vector<2x32x256xf32>
    %160 = arith.mulf %155, %159 : vector<2x32x256xf32>
    %161 = arith.addf %152, %160 : vector<2x32x256xf32>
    %cst_36 = arith.constant 0.000000e+00 : f32
    %162 = vector.broadcast %cst_36 : f32 to vector<2x32x16xf32>
    %163 = vector.extract_strided_slice %101 {offsets = [0, 0, 0], sizes = [2, 32, 240], strides = [1, 1, 1]} : vector<2x32x256xf32> to vector<2x32x240xf32>
    %164 = tpu.concatenate %162, %163 in 2 : vector<2x32x16xf32>, vector<2x32x240xf32> -> vector<2x32x256xf32>
    %165 = vector.extract_strided_slice %151 {offsets = [1, 0, 0], sizes = [1, 32, 1], strides = [1, 1, 1]} : vector<9x32x1xf32> to vector<1x32x1xf32>
    %166 = vector.shape_cast %165 : vector<1x32x1xf32> to vector<32x1xf32>
    %167 = vector.shape_cast %166 : vector<32x1xf32> to vector<1x32x1xf32>
    %168 = vector.broadcast %167 : vector<1x32x1xf32> to vector<2x32x256xf32>
    %169 = arith.mulf %164, %168 : vector<2x32x256xf32>
    %170 = arith.addf %161, %169 : vector<2x32x256xf32>
    %cst_37 = arith.constant 0.000000e+00 : f32
    %171 = vector.broadcast %cst_37 : f32 to vector<2x32x16xf32>
    %172 = vector.extract_strided_slice %150 {offsets = [0, 0, 0], sizes = [2, 32, 240], strides = [1, 1, 1]} : vector<2x32x256xf32> to vector<2x32x240xf32>
    %173 = tpu.concatenate %171, %172 in 2 : vector<2x32x16xf32>, vector<2x32x240xf32> -> vector<2x32x256xf32>
    %174 = vector.extract_strided_slice %151 {offsets = [2, 0, 0], sizes = [1, 32, 1], strides = [1, 1, 1]} : vector<9x32x1xf32> to vector<1x32x1xf32>
    %175 = vector.shape_cast %174 : vector<1x32x1xf32> to vector<32x1xf32>
    %176 = vector.shape_cast %175 : vector<32x1xf32> to vector<1x32x1xf32>
    %177 = vector.broadcast %176 : vector<1x32x1xf32> to vector<2x32x256xf32>
    %178 = arith.mulf %173, %177 : vector<2x32x256xf32>
    %179 = arith.addf %170, %178 : vector<2x32x256xf32>
    %180 = vector.extract_strided_slice %151 {offsets = [3, 0, 0], sizes = [1, 32, 1], strides = [1, 1, 1]} : vector<9x32x1xf32> to vector<1x32x1xf32>
    %181 = vector.shape_cast %180 : vector<1x32x1xf32> to vector<32x1xf32>
    %182 = vector.shape_cast %181 : vector<32x1xf32> to vector<1x32x1xf32>
    %183 = vector.broadcast %182 : vector<1x32x1xf32> to vector<2x32x256xf32>
    %184 = arith.mulf %134, %183 : vector<2x32x256xf32>
    %185 = arith.addf %179, %184 : vector<2x32x256xf32>
    %186 = vector.extract_strided_slice %151 {offsets = [4, 0, 0], sizes = [1, 32, 1], strides = [1, 1, 1]} : vector<9x32x1xf32> to vector<1x32x1xf32>
    %187 = vector.shape_cast %186 : vector<1x32x1xf32> to vector<32x1xf32>
    %188 = vector.shape_cast %187 : vector<32x1xf32> to vector<1x32x1xf32>
    %189 = vector.broadcast %188 : vector<1x32x1xf32> to vector<2x32x256xf32>
    %190 = arith.mulf %101, %189 : vector<2x32x256xf32>
    %191 = arith.addf %185, %190 : vector<2x32x256xf32>
    %192 = vector.extract_strided_slice %151 {offsets = [5, 0, 0], sizes = [1, 32, 1], strides = [1, 1, 1]} : vector<9x32x1xf32> to vector<1x32x1xf32>
    %193 = vector.shape_cast %192 : vector<1x32x1xf32> to vector<32x1xf32>
    %194 = vector.shape_cast %193 : vector<32x1xf32> to vector<1x32x1xf32>
    %195 = vector.broadcast %194 : vector<1x32x1xf32> to vector<2x32x256xf32>
    %196 = arith.mulf %150, %195 : vector<2x32x256xf32>
    %197 = arith.addf %191, %196 : vector<2x32x256xf32>
    %cst_38 = arith.constant 0.000000e+00 : f32
    %198 = vector.broadcast %cst_38 : f32 to vector<2x32x16xf32>
    %199 = vector.extract_strided_slice %134 {offsets = [0, 0, 16], sizes = [2, 32, 240], strides = [1, 1, 1]} : vector<2x32x256xf32> to vector<2x32x240xf32>
    %200 = tpu.concatenate %199, %198 in 2 : vector<2x32x240xf32>, vector<2x32x16xf32> -> vector<2x32x256xf32>
    %201 = vector.extract_strided_slice %151 {offsets = [6, 0, 0], sizes = [1, 32, 1], strides = [1, 1, 1]} : vector<9x32x1xf32> to vector<1x32x1xf32>
    %202 = vector.shape_cast %201 : vector<1x32x1xf32> to vector<32x1xf32>
    %203 = vector.shape_cast %202 : vector<32x1xf32> to vector<1x32x1xf32>
    %204 = vector.broadcast %203 : vector<1x32x1xf32> to vector<2x32x256xf32>
    %205 = arith.mulf %200, %204 : vector<2x32x256xf32>
    %206 = arith.addf %197, %205 : vector<2x32x256xf32>
    %cst_39 = arith.constant 0.000000e+00 : f32
    %207 = vector.broadcast %cst_39 : f32 to vector<2x32x16xf32>
    %208 = vector.extract_strided_slice %101 {offsets = [0, 0, 16], sizes = [2, 32, 240], strides = [1, 1, 1]} : vector<2x32x256xf32> to vector<2x32x240xf32>
    %209 = tpu.concatenate %208, %207 in 2 : vector<2x32x240xf32>, vector<2x32x16xf32> -> vector<2x32x256xf32>
    %210 = vector.extract_strided_slice %151 {offsets = [7, 0, 0], sizes = [1, 32, 1], strides = [1, 1, 1]} : vector<9x32x1xf32> to vector<1x32x1xf32>
    %211 = vector.shape_cast %210 : vector<1x32x1xf32> to vector<32x1xf32>
    %212 = vector.shape_cast %211 : vector<32x1xf32> to vector<1x32x1xf32>
    %213 = vector.broadcast %212 : vector<1x32x1xf32> to vector<2x32x256xf32>
    %214 = arith.mulf %209, %213 : vector<2x32x256xf32>
    %215 = arith.addf %206, %214 : vector<2x32x256xf32>
    %cst_40 = arith.constant 0.000000e+00 : f32
    %216 = vector.broadcast %cst_40 : f32 to vector<2x32x16xf32>
    %217 = vector.extract_strided_slice %150 {offsets = [0, 0, 16], sizes = [2, 32, 240], strides = [1, 1, 1]} : vector<2x32x256xf32> to vector<2x32x240xf32>
    %218 = tpu.concatenate %217, %216 in 2 : vector<2x32x240xf32>, vector<2x32x16xf32> -> vector<2x32x256xf32>
    %219 = vector.extract_strided_slice %151 {offsets = [8, 0, 0], sizes = [1, 32, 1], strides = [1, 1, 1]} : vector<9x32x1xf32> to vector<1x32x1xf32>
    %220 = vector.shape_cast %219 : vector<1x32x1xf32> to vector<32x1xf32>
    %221 = vector.shape_cast %220 : vector<32x1xf32> to vector<1x32x1xf32>
    %222 = vector.broadcast %221 : vector<1x32x1xf32> to vector<2x32x256xf32>
    %223 = arith.mulf %218, %222 : vector<2x32x256xf32>
    %224 = arith.addf %215, %223 : vector<2x32x256xf32>
    %c0_41 = arith.constant 0 : index
    %c0_42 = arith.constant 0 : index
    %225 = vector.load %arg6[%c0_41, %c0_42] : memref<32x1xf32, #tpu.memory_space<vmem>>, vector<32x1xf32>
    %226 = vector.shape_cast %225 : vector<32x1xf32> to vector<1x32x1xf32>
    %c0_43 = arith.constant 0 : index
    %c0_44 = arith.constant 0 : index
    %227 = vector.load %arg7[%c0_43, %c0_44] : memref<32x1xf32, #tpu.memory_space<vmem>>, vector<32x1xf32>
    %228 = vector.shape_cast %227 : vector<32x1xf32> to vector<1x32x1xf32>
    %cst_45 = arith.constant dense<0.000000e+00> : vector<2x32xf32>
    %229 = vector.multi_reduction <add>, %224, %cst_45 [2] : vector<2x32x256xf32> to vector<2x32xf32>
    %230 = vector.shape_cast %229 : vector<2x32xf32> to vector<2x32x1xf32>
    %231 = arith.mulf %224, %224 : vector<2x32x256xf32>
    %cst_46 = arith.constant dense<0.000000e+00> : vector<2x32xf32>
    %232 = vector.multi_reduction <add>, %231, %cst_46 [2] : vector<2x32x256xf32> to vector<2x32xf32>
    %233 = vector.shape_cast %232 : vector<2x32xf32> to vector<2x32x1xf32>
    %cst_47 = arith.constant dense<0.000000e+00> : vector<32x1xf32>
    %234 = vector.multi_reduction <add>, %230, %cst_47 [0] : vector<2x32x1xf32> to vector<32x1xf32>
    %235 = vector.shape_cast %234 : vector<32x1xf32> to vector<1x32x1xf32>
    %cst_48 = arith.constant 5.120000e+02 : f32
    %236 = vector.broadcast %cst_48 : f32 to vector<1x32x1xf32>
    %237 = arith.divf %235, %236 : vector<1x32x1xf32>
    %cst_49 = arith.constant dense<0.000000e+00> : vector<32x1xf32>
    %238 = vector.multi_reduction <add>, %233, %cst_49 [0] : vector<2x32x1xf32> to vector<32x1xf32>
    %239 = vector.shape_cast %238 : vector<32x1xf32> to vector<1x32x1xf32>
    %cst_50 = arith.constant 5.120000e+02 : f32
    %240 = vector.broadcast %cst_50 : f32 to vector<1x32x1xf32>
    %241 = arith.divf %239, %240 : vector<1x32x1xf32>
    %242 = arith.mulf %237, %237 : vector<1x32x1xf32>
    %243 = arith.subf %241, %242 : vector<1x32x1xf32>
    %cst_51 = arith.constant 0.000000e+00 : f32
    %244 = vector.broadcast %cst_51 : f32 to vector<1x32x1xf32>
    %245 = arith.maximumf %243, %244 : vector<1x32x1xf32>
    %cst_52 = arith.constant 1.000000e-03 : f32
    %246 = vector.broadcast %cst_52 : f32 to vector<1x32x1xf32>
    %247 = arith.addf %245, %246 : vector<1x32x1xf32>
    %248 = math.rsqrt %247 : vector<1x32x1xf32>
    %249 = vector.broadcast %237 : vector<1x32x1xf32> to vector<2x32x256xf32>
    %250 = arith.subf %224, %249 : vector<2x32x256xf32>
    %251 = arith.mulf %248, %226 : vector<1x32x1xf32>
    %252 = vector.broadcast %251 : vector<1x32x1xf32> to vector<2x32x256xf32>
    %253 = arith.mulf %250, %252 : vector<2x32x256xf32>
    %254 = vector.broadcast %228 : vector<1x32x1xf32> to vector<2x32x256xf32>
    %255 = arith.addf %253, %254 : vector<2x32x256xf32>
    %256 = arith.negf %255 : vector<2x32x256xf32>
    %257 = math.exp %256 : vector<2x32x256xf32>
    %cst_53 = arith.constant 1.000000e+00 : f32
    %258 = vector.broadcast %cst_53 : f32 to vector<2x32x256xf32>
    %259 = arith.addf %258, %257 : vector<2x32x256xf32>
    %260 = arith.divf %258, %259 : vector<2x32x256xf32>
    %261 = arith.mulf %255, %260 : vector<2x32x256xf32>
    %cst_54 = arith.constant dense<0.000000e+00> : vector<2x32xf32>
    %262 = vector.multi_reduction <add>, %261, %cst_54 [2] : vector<2x32x256xf32> to vector<2x32xf32>
    %263 = vector.shape_cast %262 : vector<2x32xf32> to vector<2x32x1xf32>
    %cst_55 = arith.constant 2.560000e+02 : f32
    %264 = vector.broadcast %cst_55 : f32 to vector<2x32x1xf32>
    %265 = arith.divf %263, %264 : vector<2x32x1xf32>
    %c0_56 = arith.constant 0 : index
    %c0_57 = arith.constant 0 : index
    %c0_58 = arith.constant 0 : index
    %266 = vector.load %arg8[%c0_56, %c0_57, %c0_58] : memref<2x32x1xf32, #tpu.memory_space<vmem>>, vector<2x32x1xf32>
    %c0_59 = arith.constant 0 : index
    %c0_60 = arith.constant 0 : index
    %c0_61 = arith.constant 0 : index
    %267 = vector.load %arg10[%c0_59, %c0_60, %c0_61] : memref<2x32x1xf32, #tpu.memory_space<vmem>>, vector<2x32x1xf32>
    %c0_62 = arith.constant 0 : index
    %c0_63 = arith.constant 0 : index
    %c0_64 = arith.constant 0 : index
    %268 = vector.load %arg9[%c0_62, %c0_63, %c0_64] : memref<2x1x1xf32, #tpu.memory_space<vmem>>, vector<2x1x1xf32>
    %c0_65 = arith.constant 0 : index
    %c0_66 = arith.constant 0 : index
    %269 = vector.load %arg11[%c0_65, %c0_66] : memref<32x1xf32, #tpu.memory_space<vmem>>, vector<32x1xf32>
    %270 = vector.shape_cast %269 : vector<32x1xf32> to vector<1x32x1xf32>
    %271 = vector.extract_strided_slice %266 {offsets = [0, 0, 0], sizes = [1, 32, 1], strides = [1, 1, 1]} : vector<2x32x1xf32> to vector<1x32x1xf32>
    %272 = vector.shape_cast %271 : vector<1x32x1xf32> to vector<32x1xf32>
    %273 = vector.shape_cast %272 : vector<32x1xf32> to vector<1x32x1xf32>
    %274 = vector.broadcast %273 : vector<1x32x1xf32> to vector<2x32x1xf32>
    %275 = arith.mulf %265, %274 : vector<2x32x1xf32>
    %cst_67 = arith.constant dense<0.000000e+00> : vector<2x1xf32>
    %276 = vector.multi_reduction <add>, %275, %cst_67 [1] : vector<2x32x1xf32> to vector<2x1xf32>
    %277 = vector.shape_cast %276 : vector<2x1xf32> to vector<2x1x1xf32>
    %278 = vector.extract_strided_slice %268 {offsets = [0, 0, 0], sizes = [1, 1, 1], strides = [1, 1, 1]} : vector<2x1x1xf32> to vector<1x1x1xf32>
    %279 = vector.shape_cast %278 : vector<1x1x1xf32> to vector<1x1xf32>
    %280 = vector.shape_cast %279 : vector<1x1xf32> to vector<1x1x1xf32>
    %281 = vector.broadcast %280 : vector<1x1x1xf32> to vector<2x1x1xf32>
    %282 = arith.addf %277, %281 : vector<2x1x1xf32>
    %283 = arith.negf %282 : vector<2x1x1xf32>
    %284 = math.exp %283 : vector<2x1x1xf32>
    %cst_68 = arith.constant 1.000000e+00 : f32
    %285 = vector.broadcast %cst_68 : f32 to vector<2x1x1xf32>
    %286 = arith.addf %285, %284 : vector<2x1x1xf32>
    %287 = arith.divf %285, %286 : vector<2x1x1xf32>
    %288 = arith.mulf %282, %287 : vector<2x1x1xf32>
    %289 = vector.extract_strided_slice %267 {offsets = [0, 0, 0], sizes = [1, 32, 1], strides = [1, 1, 1]} : vector<2x32x1xf32> to vector<1x32x1xf32>
    %290 = vector.shape_cast %289 : vector<1x32x1xf32> to vector<32x1xf32>
    %291 = vector.shape_cast %290 : vector<32x1xf32> to vector<1x32x1xf32>
    %292 = vector.broadcast %288 : vector<2x1x1xf32> to vector<2x32x1xf32>
    %293 = vector.broadcast %291 : vector<1x32x1xf32> to vector<2x32x1xf32>
    %294 = arith.mulf %292, %293 : vector<2x32x1xf32>
    %295 = vector.broadcast %270 : vector<1x32x1xf32> to vector<2x32x1xf32>
    %296 = arith.addf %295, %294 : vector<2x32x1xf32>
    %297 = vector.extract_strided_slice %266 {offsets = [1, 0, 0], sizes = [1, 32, 1], strides = [1, 1, 1]} : vector<2x32x1xf32> to vector<1x32x1xf32>
    %298 = vector.shape_cast %297 : vector<1x32x1xf32> to vector<32x1xf32>
    %299 = vector.shape_cast %298 : vector<32x1xf32> to vector<1x32x1xf32>
    %300 = vector.broadcast %299 : vector<1x32x1xf32> to vector<2x32x1xf32>
    %301 = arith.mulf %265, %300 : vector<2x32x1xf32>
    %cst_69 = arith.constant dense<0.000000e+00> : vector<2x1xf32>
    %302 = vector.multi_reduction <add>, %301, %cst_69 [1] : vector<2x32x1xf32> to vector<2x1xf32>
    %303 = vector.shape_cast %302 : vector<2x1xf32> to vector<2x1x1xf32>
    %304 = vector.extract_strided_slice %268 {offsets = [1, 0, 0], sizes = [1, 1, 1], strides = [1, 1, 1]} : vector<2x1x1xf32> to vector<1x1x1xf32>
    %305 = vector.shape_cast %304 : vector<1x1x1xf32> to vector<1x1xf32>
    %306 = vector.shape_cast %305 : vector<1x1xf32> to vector<1x1x1xf32>
    %307 = vector.broadcast %306 : vector<1x1x1xf32> to vector<2x1x1xf32>
    %308 = arith.addf %303, %307 : vector<2x1x1xf32>
    %309 = arith.negf %308 : vector<2x1x1xf32>
    %310 = math.exp %309 : vector<2x1x1xf32>
    %cst_70 = arith.constant 1.000000e+00 : f32
    %311 = vector.broadcast %cst_70 : f32 to vector<2x1x1xf32>
    %312 = arith.addf %311, %310 : vector<2x1x1xf32>
    %313 = arith.divf %311, %312 : vector<2x1x1xf32>
    %314 = arith.mulf %308, %313 : vector<2x1x1xf32>
    %315 = vector.extract_strided_slice %267 {offsets = [1, 0, 0], sizes = [1, 32, 1], strides = [1, 1, 1]} : vector<2x32x1xf32> to vector<1x32x1xf32>
    %316 = vector.shape_cast %315 : vector<1x32x1xf32> to vector<32x1xf32>
    %317 = vector.shape_cast %316 : vector<32x1xf32> to vector<1x32x1xf32>
    %318 = vector.broadcast %314 : vector<2x1x1xf32> to vector<2x32x1xf32>
    %319 = vector.broadcast %317 : vector<1x32x1xf32> to vector<2x32x1xf32>
    %320 = arith.mulf %318, %319 : vector<2x32x1xf32>
    %321 = arith.addf %296, %320 : vector<2x32x1xf32>
    %322 = arith.negf %321 : vector<2x32x1xf32>
    %323 = math.exp %322 : vector<2x32x1xf32>
    %cst_71 = arith.constant 1.000000e+00 : f32
    %324 = vector.broadcast %cst_71 : f32 to vector<2x32x1xf32>
    %325 = arith.addf %324, %323 : vector<2x32x1xf32>
    %326 = arith.divf %324, %325 : vector<2x32x1xf32>
    %327 = vector.broadcast %326 : vector<2x32x1xf32> to vector<2x32x256xf32>
    %328 = arith.mulf %261, %327 : vector<2x32x256xf32>
    %c0_72 = arith.constant 0 : index
    %c0_73 = arith.constant 0 : index
    %c0_74 = arith.constant 0 : index
    %329 = vector.load %arg12[%c0_72, %c0_73, %c0_74] : memref<32x8x1xf32, #tpu.memory_space<vmem>>, vector<32x8x1xf32>
    %330 = vector.extract_strided_slice %328 {offsets = [0, 0, 0], sizes = [2, 1, 256], strides = [1, 1, 1]} : vector<2x32x256xf32> to vector<2x1x256xf32>
    %331 = vector.extract_strided_slice %329 {offsets = [0, 0, 0], sizes = [1, 8, 1], strides = [1, 1, 1]} : vector<32x8x1xf32> to vector<1x8x1xf32>
    %332 = vector.shape_cast %331 : vector<1x8x1xf32> to vector<8x1xf32>
    %333 = vector.shape_cast %332 : vector<8x1xf32> to vector<1x8x1xf32>
    %334 = vector.broadcast %330 : vector<2x1x256xf32> to vector<2x8x256xf32>
    %335 = vector.broadcast %333 : vector<1x8x1xf32> to vector<2x8x256xf32>
    %336 = arith.mulf %334, %335 : vector<2x8x256xf32>
    %337 = vector.extract_strided_slice %328 {offsets = [0, 1, 0], sizes = [2, 1, 256], strides = [1, 1, 1]} : vector<2x32x256xf32> to vector<2x1x256xf32>
    %338 = vector.extract_strided_slice %329 {offsets = [1, 0, 0], sizes = [1, 8, 1], strides = [1, 1, 1]} : vector<32x8x1xf32> to vector<1x8x1xf32>
    %339 = vector.shape_cast %338 : vector<1x8x1xf32> to vector<8x1xf32>
    %340 = vector.shape_cast %339 : vector<8x1xf32> to vector<1x8x1xf32>
    %341 = vector.broadcast %337 : vector<2x1x256xf32> to vector<2x8x256xf32>
    %342 = vector.broadcast %340 : vector<1x8x1xf32> to vector<2x8x256xf32>
    %343 = arith.mulf %341, %342 : vector<2x8x256xf32>
    %344 = arith.addf %336, %343 : vector<2x8x256xf32>
    %345 = vector.extract_strided_slice %328 {offsets = [0, 2, 0], sizes = [2, 1, 256], strides = [1, 1, 1]} : vector<2x32x256xf32> to vector<2x1x256xf32>
    %346 = vector.extract_strided_slice %329 {offsets = [2, 0, 0], sizes = [1, 8, 1], strides = [1, 1, 1]} : vector<32x8x1xf32> to vector<1x8x1xf32>
    %347 = vector.shape_cast %346 : vector<1x8x1xf32> to vector<8x1xf32>
    %348 = vector.shape_cast %347 : vector<8x1xf32> to vector<1x8x1xf32>
    %349 = vector.broadcast %345 : vector<2x1x256xf32> to vector<2x8x256xf32>
    %350 = vector.broadcast %348 : vector<1x8x1xf32> to vector<2x8x256xf32>
    %351 = arith.mulf %349, %350 : vector<2x8x256xf32>
    %352 = arith.addf %344, %351 : vector<2x8x256xf32>
    %353 = vector.extract_strided_slice %328 {offsets = [0, 3, 0], sizes = [2, 1, 256], strides = [1, 1, 1]} : vector<2x32x256xf32> to vector<2x1x256xf32>
    %354 = vector.extract_strided_slice %329 {offsets = [3, 0, 0], sizes = [1, 8, 1], strides = [1, 1, 1]} : vector<32x8x1xf32> to vector<1x8x1xf32>
    %355 = vector.shape_cast %354 : vector<1x8x1xf32> to vector<8x1xf32>
    %356 = vector.shape_cast %355 : vector<8x1xf32> to vector<1x8x1xf32>
    %357 = vector.broadcast %353 : vector<2x1x256xf32> to vector<2x8x256xf32>
    %358 = vector.broadcast %356 : vector<1x8x1xf32> to vector<2x8x256xf32>
    %359 = arith.mulf %357, %358 : vector<2x8x256xf32>
    %360 = arith.addf %352, %359 : vector<2x8x256xf32>
    %361 = vector.extract_strided_slice %328 {offsets = [0, 4, 0], sizes = [2, 1, 256], strides = [1, 1, 1]} : vector<2x32x256xf32> to vector<2x1x256xf32>
    %362 = vector.extract_strided_slice %329 {offsets = [4, 0, 0], sizes = [1, 8, 1], strides = [1, 1, 1]} : vector<32x8x1xf32> to vector<1x8x1xf32>
    %363 = vector.shape_cast %362 : vector<1x8x1xf32> to vector<8x1xf32>
    %364 = vector.shape_cast %363 : vector<8x1xf32> to vector<1x8x1xf32>
    %365 = vector.broadcast %361 : vector<2x1x256xf32> to vector<2x8x256xf32>
    %366 = vector.broadcast %364 : vector<1x8x1xf32> to vector<2x8x256xf32>
    %367 = arith.mulf %365, %366 : vector<2x8x256xf32>
    %368 = arith.addf %360, %367 : vector<2x8x256xf32>
    %369 = vector.extract_strided_slice %328 {offsets = [0, 5, 0], sizes = [2, 1, 256], strides = [1, 1, 1]} : vector<2x32x256xf32> to vector<2x1x256xf32>
    %370 = vector.extract_strided_slice %329 {offsets = [5, 0, 0], sizes = [1, 8, 1], strides = [1, 1, 1]} : vector<32x8x1xf32> to vector<1x8x1xf32>
    %371 = vector.shape_cast %370 : vector<1x8x1xf32> to vector<8x1xf32>
    %372 = vector.shape_cast %371 : vector<8x1xf32> to vector<1x8x1xf32>
    %373 = vector.broadcast %369 : vector<2x1x256xf32> to vector<2x8x256xf32>
    %374 = vector.broadcast %372 : vector<1x8x1xf32> to vector<2x8x256xf32>
    %375 = arith.mulf %373, %374 : vector<2x8x256xf32>
    %376 = arith.addf %368, %375 : vector<2x8x256xf32>
    %377 = vector.extract_strided_slice %328 {offsets = [0, 6, 0], sizes = [2, 1, 256], strides = [1, 1, 1]} : vector<2x32x256xf32> to vector<2x1x256xf32>
    %378 = vector.extract_strided_slice %329 {offsets = [6, 0, 0], sizes = [1, 8, 1], strides = [1, 1, 1]} : vector<32x8x1xf32> to vector<1x8x1xf32>
    %379 = vector.shape_cast %378 : vector<1x8x1xf32> to vector<8x1xf32>
    %380 = vector.shape_cast %379 : vector<8x1xf32> to vector<1x8x1xf32>
    %381 = vector.broadcast %377 : vector<2x1x256xf32> to vector<2x8x256xf32>
    %382 = vector.broadcast %380 : vector<1x8x1xf32> to vector<2x8x256xf32>
    %383 = arith.mulf %381, %382 : vector<2x8x256xf32>
    %384 = arith.addf %376, %383 : vector<2x8x256xf32>
    %385 = vector.extract_strided_slice %328 {offsets = [0, 7, 0], sizes = [2, 1, 256], strides = [1, 1, 1]} : vector<2x32x256xf32> to vector<2x1x256xf32>
    %386 = vector.extract_strided_slice %329 {offsets = [7, 0, 0], sizes = [1, 8, 1], strides = [1, 1, 1]} : vector<32x8x1xf32> to vector<1x8x1xf32>
    %387 = vector.shape_cast %386 : vector<1x8x1xf32> to vector<8x1xf32>
    %388 = vector.shape_cast %387 : vector<8x1xf32> to vector<1x8x1xf32>
    %389 = vector.broadcast %385 : vector<2x1x256xf32> to vector<2x8x256xf32>
    %390 = vector.broadcast %388 : vector<1x8x1xf32> to vector<2x8x256xf32>
    %391 = arith.mulf %389, %390 : vector<2x8x256xf32>
    %392 = arith.addf %384, %391 : vector<2x8x256xf32>
    %393 = vector.extract_strided_slice %328 {offsets = [0, 8, 0], sizes = [2, 1, 256], strides = [1, 1, 1]} : vector<2x32x256xf32> to vector<2x1x256xf32>
    %394 = vector.extract_strided_slice %329 {offsets = [8, 0, 0], sizes = [1, 8, 1], strides = [1, 1, 1]} : vector<32x8x1xf32> to vector<1x8x1xf32>
    %395 = vector.shape_cast %394 : vector<1x8x1xf32> to vector<8x1xf32>
    %396 = vector.shape_cast %395 : vector<8x1xf32> to vector<1x8x1xf32>
    %397 = vector.broadcast %393 : vector<2x1x256xf32> to vector<2x8x256xf32>
    %398 = vector.broadcast %396 : vector<1x8x1xf32> to vector<2x8x256xf32>
    %399 = arith.mulf %397, %398 : vector<2x8x256xf32>
    %400 = arith.addf %392, %399 : vector<2x8x256xf32>
    %401 = vector.extract_strided_slice %328 {offsets = [0, 9, 0], sizes = [2, 1, 256], strides = [1, 1, 1]} : vector<2x32x256xf32> to vector<2x1x256xf32>
    %402 = vector.extract_strided_slice %329 {offsets = [9, 0, 0], sizes = [1, 8, 1], strides = [1, 1, 1]} : vector<32x8x1xf32> to vector<1x8x1xf32>
    %403 = vector.shape_cast %402 : vector<1x8x1xf32> to vector<8x1xf32>
    %404 = vector.shape_cast %403 : vector<8x1xf32> to vector<1x8x1xf32>
    %405 = vector.broadcast %401 : vector<2x1x256xf32> to vector<2x8x256xf32>
    %406 = vector.broadcast %404 : vector<1x8x1xf32> to vector<2x8x256xf32>
    %407 = arith.mulf %405, %406 : vector<2x8x256xf32>
    %408 = arith.addf %400, %407 : vector<2x8x256xf32>
    %409 = vector.extract_strided_slice %328 {offsets = [0, 10, 0], sizes = [2, 1, 256], strides = [1, 1, 1]} : vector<2x32x256xf32> to vector<2x1x256xf32>
    %410 = vector.extract_strided_slice %329 {offsets = [10, 0, 0], sizes = [1, 8, 1], strides = [1, 1, 1]} : vector<32x8x1xf32> to vector<1x8x1xf32>
    %411 = vector.shape_cast %410 : vector<1x8x1xf32> to vector<8x1xf32>
    %412 = vector.shape_cast %411 : vector<8x1xf32> to vector<1x8x1xf32>
    %413 = vector.broadcast %409 : vector<2x1x256xf32> to vector<2x8x256xf32>
    %414 = vector.broadcast %412 : vector<1x8x1xf32> to vector<2x8x256xf32>
    %415 = arith.mulf %413, %414 : vector<2x8x256xf32>
    %416 = arith.addf %408, %415 : vector<2x8x256xf32>
    %417 = vector.extract_strided_slice %328 {offsets = [0, 11, 0], sizes = [2, 1, 256], strides = [1, 1, 1]} : vector<2x32x256xf32> to vector<2x1x256xf32>
    %418 = vector.extract_strided_slice %329 {offsets = [11, 0, 0], sizes = [1, 8, 1], strides = [1, 1, 1]} : vector<32x8x1xf32> to vector<1x8x1xf32>
    %419 = vector.shape_cast %418 : vector<1x8x1xf32> to vector<8x1xf32>
    %420 = vector.shape_cast %419 : vector<8x1xf32> to vector<1x8x1xf32>
    %421 = vector.broadcast %417 : vector<2x1x256xf32> to vector<2x8x256xf32>
    %422 = vector.broadcast %420 : vector<1x8x1xf32> to vector<2x8x256xf32>
    %423 = arith.mulf %421, %422 : vector<2x8x256xf32>
    %424 = arith.addf %416, %423 : vector<2x8x256xf32>
    %425 = vector.extract_strided_slice %328 {offsets = [0, 12, 0], sizes = [2, 1, 256], strides = [1, 1, 1]} : vector<2x32x256xf32> to vector<2x1x256xf32>
    %426 = vector.extract_strided_slice %329 {offsets = [12, 0, 0], sizes = [1, 8, 1], strides = [1, 1, 1]} : vector<32x8x1xf32> to vector<1x8x1xf32>
    %427 = vector.shape_cast %426 : vector<1x8x1xf32> to vector<8x1xf32>
    %428 = vector.shape_cast %427 : vector<8x1xf32> to vector<1x8x1xf32>
    %429 = vector.broadcast %425 : vector<2x1x256xf32> to vector<2x8x256xf32>
    %430 = vector.broadcast %428 : vector<1x8x1xf32> to vector<2x8x256xf32>
    %431 = arith.mulf %429, %430 : vector<2x8x256xf32>
    %432 = arith.addf %424, %431 : vector<2x8x256xf32>
    %433 = vector.extract_strided_slice %328 {offsets = [0, 13, 0], sizes = [2, 1, 256], strides = [1, 1, 1]} : vector<2x32x256xf32> to vector<2x1x256xf32>
    %434 = vector.extract_strided_slice %329 {offsets = [13, 0, 0], sizes = [1, 8, 1], strides = [1, 1, 1]} : vector<32x8x1xf32> to vector<1x8x1xf32>
    %435 = vector.shape_cast %434 : vector<1x8x1xf32> to vector<8x1xf32>
    %436 = vector.shape_cast %435 : vector<8x1xf32> to vector<1x8x1xf32>
    %437 = vector.broadcast %433 : vector<2x1x256xf32> to vector<2x8x256xf32>
    %438 = vector.broadcast %436 : vector<1x8x1xf32> to vector<2x8x256xf32>
    %439 = arith.mulf %437, %438 : vector<2x8x256xf32>
    %440 = arith.addf %432, %439 : vector<2x8x256xf32>
    %441 = vector.extract_strided_slice %328 {offsets = [0, 14, 0], sizes = [2, 1, 256], strides = [1, 1, 1]} : vector<2x32x256xf32> to vector<2x1x256xf32>
    %442 = vector.extract_strided_slice %329 {offsets = [14, 0, 0], sizes = [1, 8, 1], strides = [1, 1, 1]} : vector<32x8x1xf32> to vector<1x8x1xf32>
    %443 = vector.shape_cast %442 : vector<1x8x1xf32> to vector<8x1xf32>
    %444 = vector.shape_cast %443 : vector<8x1xf32> to vector<1x8x1xf32>
    %445 = vector.broadcast %441 : vector<2x1x256xf32> to vector<2x8x256xf32>
    %446 = vector.broadcast %444 : vector<1x8x1xf32> to vector<2x8x256xf32>
    %447 = arith.mulf %445, %446 : vector<2x8x256xf32>
    %448 = arith.addf %440, %447 : vector<2x8x256xf32>
    %449 = vector.extract_strided_slice %328 {offsets = [0, 15, 0], sizes = [2, 1, 256], strides = [1, 1, 1]} : vector<2x32x256xf32> to vector<2x1x256xf32>
    %450 = vector.extract_strided_slice %329 {offsets = [15, 0, 0], sizes = [1, 8, 1], strides = [1, 1, 1]} : vector<32x8x1xf32> to vector<1x8x1xf32>
    %451 = vector.shape_cast %450 : vector<1x8x1xf32> to vector<8x1xf32>
    %452 = vector.shape_cast %451 : vector<8x1xf32> to vector<1x8x1xf32>
    %453 = vector.broadcast %449 : vector<2x1x256xf32> to vector<2x8x256xf32>
    %454 = vector.broadcast %452 : vector<1x8x1xf32> to vector<2x8x256xf32>
    %455 = arith.mulf %453, %454 : vector<2x8x256xf32>
    %456 = arith.addf %448, %455 : vector<2x8x256xf32>
    %457 = vector.extract_strided_slice %328 {offsets = [0, 16, 0], sizes = [2, 1, 256], strides = [1, 1, 1]} : vector<2x32x256xf32> to vector<2x1x256xf32>
    %458 = vector.extract_strided_slice %329 {offsets = [16, 0, 0], sizes = [1, 8, 1], strides = [1, 1, 1]} : vector<32x8x1xf32> to vector<1x8x1xf32>
    %459 = vector.shape_cast %458 : vector<1x8x1xf32> to vector<8x1xf32>
    %460 = vector.shape_cast %459 : vector<8x1xf32> to vector<1x8x1xf32>
    %461 = vector.broadcast %457 : vector<2x1x256xf32> to vector<2x8x256xf32>
    %462 = vector.broadcast %460 : vector<1x8x1xf32> to vector<2x8x256xf32>
    %463 = arith.mulf %461, %462 : vector<2x8x256xf32>
    %464 = arith.addf %456, %463 : vector<2x8x256xf32>
    %465 = vector.extract_strided_slice %328 {offsets = [0, 17, 0], sizes = [2, 1, 256], strides = [1, 1, 1]} : vector<2x32x256xf32> to vector<2x1x256xf32>
    %466 = vector.extract_strided_slice %329 {offsets = [17, 0, 0], sizes = [1, 8, 1], strides = [1, 1, 1]} : vector<32x8x1xf32> to vector<1x8x1xf32>
    %467 = vector.shape_cast %466 : vector<1x8x1xf32> to vector<8x1xf32>
    %468 = vector.shape_cast %467 : vector<8x1xf32> to vector<1x8x1xf32>
    %469 = vector.broadcast %465 : vector<2x1x256xf32> to vector<2x8x256xf32>
    %470 = vector.broadcast %468 : vector<1x8x1xf32> to vector<2x8x256xf32>
    %471 = arith.mulf %469, %470 : vector<2x8x256xf32>
    %472 = arith.addf %464, %471 : vector<2x8x256xf32>
    %473 = vector.extract_strided_slice %328 {offsets = [0, 18, 0], sizes = [2, 1, 256], strides = [1, 1, 1]} : vector<2x32x256xf32> to vector<2x1x256xf32>
    %474 = vector.extract_strided_slice %329 {offsets = [18, 0, 0], sizes = [1, 8, 1], strides = [1, 1, 1]} : vector<32x8x1xf32> to vector<1x8x1xf32>
    %475 = vector.shape_cast %474 : vector<1x8x1xf32> to vector<8x1xf32>
    %476 = vector.shape_cast %475 : vector<8x1xf32> to vector<1x8x1xf32>
    %477 = vector.broadcast %473 : vector<2x1x256xf32> to vector<2x8x256xf32>
    %478 = vector.broadcast %476 : vector<1x8x1xf32> to vector<2x8x256xf32>
    %479 = arith.mulf %477, %478 : vector<2x8x256xf32>
    %480 = arith.addf %472, %479 : vector<2x8x256xf32>
    %481 = vector.extract_strided_slice %328 {offsets = [0, 19, 0], sizes = [2, 1, 256], strides = [1, 1, 1]} : vector<2x32x256xf32> to vector<2x1x256xf32>
    %482 = vector.extract_strided_slice %329 {offsets = [19, 0, 0], sizes = [1, 8, 1], strides = [1, 1, 1]} : vector<32x8x1xf32> to vector<1x8x1xf32>
    %483 = vector.shape_cast %482 : vector<1x8x1xf32> to vector<8x1xf32>
    %484 = vector.shape_cast %483 : vector<8x1xf32> to vector<1x8x1xf32>
    %485 = vector.broadcast %481 : vector<2x1x256xf32> to vector<2x8x256xf32>
    %486 = vector.broadcast %484 : vector<1x8x1xf32> to vector<2x8x256xf32>
    %487 = arith.mulf %485, %486 : vector<2x8x256xf32>
    %488 = arith.addf %480, %487 : vector<2x8x256xf32>
    %489 = vector.extract_strided_slice %328 {offsets = [0, 20, 0], sizes = [2, 1, 256], strides = [1, 1, 1]} : vector<2x32x256xf32> to vector<2x1x256xf32>
    %490 = vector.extract_strided_slice %329 {offsets = [20, 0, 0], sizes = [1, 8, 1], strides = [1, 1, 1]} : vector<32x8x1xf32> to vector<1x8x1xf32>
    %491 = vector.shape_cast %490 : vector<1x8x1xf32> to vector<8x1xf32>
    %492 = vector.shape_cast %491 : vector<8x1xf32> to vector<1x8x1xf32>
    %493 = vector.broadcast %489 : vector<2x1x256xf32> to vector<2x8x256xf32>
    %494 = vector.broadcast %492 : vector<1x8x1xf32> to vector<2x8x256xf32>
    %495 = arith.mulf %493, %494 : vector<2x8x256xf32>
    %496 = arith.addf %488, %495 : vector<2x8x256xf32>
    %497 = vector.extract_strided_slice %328 {offsets = [0, 21, 0], sizes = [2, 1, 256], strides = [1, 1, 1]} : vector<2x32x256xf32> to vector<2x1x256xf32>
    %498 = vector.extract_strided_slice %329 {offsets = [21, 0, 0], sizes = [1, 8, 1], strides = [1, 1, 1]} : vector<32x8x1xf32> to vector<1x8x1xf32>
    %499 = vector.shape_cast %498 : vector<1x8x1xf32> to vector<8x1xf32>
    %500 = vector.shape_cast %499 : vector<8x1xf32> to vector<1x8x1xf32>
    %501 = vector.broadcast %497 : vector<2x1x256xf32> to vector<2x8x256xf32>
    %502 = vector.broadcast %500 : vector<1x8x1xf32> to vector<2x8x256xf32>
    %503 = arith.mulf %501, %502 : vector<2x8x256xf32>
    %504 = arith.addf %496, %503 : vector<2x8x256xf32>
    %505 = vector.extract_strided_slice %328 {offsets = [0, 22, 0], sizes = [2, 1, 256], strides = [1, 1, 1]} : vector<2x32x256xf32> to vector<2x1x256xf32>
    %506 = vector.extract_strided_slice %329 {offsets = [22, 0, 0], sizes = [1, 8, 1], strides = [1, 1, 1]} : vector<32x8x1xf32> to vector<1x8x1xf32>
    %507 = vector.shape_cast %506 : vector<1x8x1xf32> to vector<8x1xf32>
    %508 = vector.shape_cast %507 : vector<8x1xf32> to vector<1x8x1xf32>
    %509 = vector.broadcast %505 : vector<2x1x256xf32> to vector<2x8x256xf32>
    %510 = vector.broadcast %508 : vector<1x8x1xf32> to vector<2x8x256xf32>
    %511 = arith.mulf %509, %510 : vector<2x8x256xf32>
    %512 = arith.addf %504, %511 : vector<2x8x256xf32>
    %513 = vector.extract_strided_slice %328 {offsets = [0, 23, 0], sizes = [2, 1, 256], strides = [1, 1, 1]} : vector<2x32x256xf32> to vector<2x1x256xf32>
    %514 = vector.extract_strided_slice %329 {offsets = [23, 0, 0], sizes = [1, 8, 1], strides = [1, 1, 1]} : vector<32x8x1xf32> to vector<1x8x1xf32>
    %515 = vector.shape_cast %514 : vector<1x8x1xf32> to vector<8x1xf32>
    %516 = vector.shape_cast %515 : vector<8x1xf32> to vector<1x8x1xf32>
    %517 = vector.broadcast %513 : vector<2x1x256xf32> to vector<2x8x256xf32>
    %518 = vector.broadcast %516 : vector<1x8x1xf32> to vector<2x8x256xf32>
    %519 = arith.mulf %517, %518 : vector<2x8x256xf32>
    %520 = arith.addf %512, %519 : vector<2x8x256xf32>
    %521 = vector.extract_strided_slice %328 {offsets = [0, 24, 0], sizes = [2, 1, 256], strides = [1, 1, 1]} : vector<2x32x256xf32> to vector<2x1x256xf32>
    %522 = vector.extract_strided_slice %329 {offsets = [24, 0, 0], sizes = [1, 8, 1], strides = [1, 1, 1]} : vector<32x8x1xf32> to vector<1x8x1xf32>
    %523 = vector.shape_cast %522 : vector<1x8x1xf32> to vector<8x1xf32>
    %524 = vector.shape_cast %523 : vector<8x1xf32> to vector<1x8x1xf32>
    %525 = vector.broadcast %521 : vector<2x1x256xf32> to vector<2x8x256xf32>
    %526 = vector.broadcast %524 : vector<1x8x1xf32> to vector<2x8x256xf32>
    %527 = arith.mulf %525, %526 : vector<2x8x256xf32>
    %528 = arith.addf %520, %527 : vector<2x8x256xf32>
    %529 = vector.extract_strided_slice %328 {offsets = [0, 25, 0], sizes = [2, 1, 256], strides = [1, 1, 1]} : vector<2x32x256xf32> to vector<2x1x256xf32>
    %530 = vector.extract_strided_slice %329 {offsets = [25, 0, 0], sizes = [1, 8, 1], strides = [1, 1, 1]} : vector<32x8x1xf32> to vector<1x8x1xf32>
    %531 = vector.shape_cast %530 : vector<1x8x1xf32> to vector<8x1xf32>
    %532 = vector.shape_cast %531 : vector<8x1xf32> to vector<1x8x1xf32>
    %533 = vector.broadcast %529 : vector<2x1x256xf32> to vector<2x8x256xf32>
    %534 = vector.broadcast %532 : vector<1x8x1xf32> to vector<2x8x256xf32>
    %535 = arith.mulf %533, %534 : vector<2x8x256xf32>
    %536 = arith.addf %528, %535 : vector<2x8x256xf32>
    %537 = vector.extract_strided_slice %328 {offsets = [0, 26, 0], sizes = [2, 1, 256], strides = [1, 1, 1]} : vector<2x32x256xf32> to vector<2x1x256xf32>
    %538 = vector.extract_strided_slice %329 {offsets = [26, 0, 0], sizes = [1, 8, 1], strides = [1, 1, 1]} : vector<32x8x1xf32> to vector<1x8x1xf32>
    %539 = vector.shape_cast %538 : vector<1x8x1xf32> to vector<8x1xf32>
    %540 = vector.shape_cast %539 : vector<8x1xf32> to vector<1x8x1xf32>
    %541 = vector.broadcast %537 : vector<2x1x256xf32> to vector<2x8x256xf32>
    %542 = vector.broadcast %540 : vector<1x8x1xf32> to vector<2x8x256xf32>
    %543 = arith.mulf %541, %542 : vector<2x8x256xf32>
    %544 = arith.addf %536, %543 : vector<2x8x256xf32>
    %545 = vector.extract_strided_slice %328 {offsets = [0, 27, 0], sizes = [2, 1, 256], strides = [1, 1, 1]} : vector<2x32x256xf32> to vector<2x1x256xf32>
    %546 = vector.extract_strided_slice %329 {offsets = [27, 0, 0], sizes = [1, 8, 1], strides = [1, 1, 1]} : vector<32x8x1xf32> to vector<1x8x1xf32>
    %547 = vector.shape_cast %546 : vector<1x8x1xf32> to vector<8x1xf32>
    %548 = vector.shape_cast %547 : vector<8x1xf32> to vector<1x8x1xf32>
    %549 = vector.broadcast %545 : vector<2x1x256xf32> to vector<2x8x256xf32>
    %550 = vector.broadcast %548 : vector<1x8x1xf32> to vector<2x8x256xf32>
    %551 = arith.mulf %549, %550 : vector<2x8x256xf32>
    %552 = arith.addf %544, %551 : vector<2x8x256xf32>
    %553 = vector.extract_strided_slice %328 {offsets = [0, 28, 0], sizes = [2, 1, 256], strides = [1, 1, 1]} : vector<2x32x256xf32> to vector<2x1x256xf32>
    %554 = vector.extract_strided_slice %329 {offsets = [28, 0, 0], sizes = [1, 8, 1], strides = [1, 1, 1]} : vector<32x8x1xf32> to vector<1x8x1xf32>
    %555 = vector.shape_cast %554 : vector<1x8x1xf32> to vector<8x1xf32>
    %556 = vector.shape_cast %555 : vector<8x1xf32> to vector<1x8x1xf32>
    %557 = vector.broadcast %553 : vector<2x1x256xf32> to vector<2x8x256xf32>
    %558 = vector.broadcast %556 : vector<1x8x1xf32> to vector<2x8x256xf32>
    %559 = arith.mulf %557, %558 : vector<2x8x256xf32>
    %560 = arith.addf %552, %559 : vector<2x8x256xf32>
    %561 = vector.extract_strided_slice %328 {offsets = [0, 29, 0], sizes = [2, 1, 256], strides = [1, 1, 1]} : vector<2x32x256xf32> to vector<2x1x256xf32>
    %562 = vector.extract_strided_slice %329 {offsets = [29, 0, 0], sizes = [1, 8, 1], strides = [1, 1, 1]} : vector<32x8x1xf32> to vector<1x8x1xf32>
    %563 = vector.shape_cast %562 : vector<1x8x1xf32> to vector<8x1xf32>
    %564 = vector.shape_cast %563 : vector<8x1xf32> to vector<1x8x1xf32>
    %565 = vector.broadcast %561 : vector<2x1x256xf32> to vector<2x8x256xf32>
    %566 = vector.broadcast %564 : vector<1x8x1xf32> to vector<2x8x256xf32>
    %567 = arith.mulf %565, %566 : vector<2x8x256xf32>
    %568 = arith.addf %560, %567 : vector<2x8x256xf32>
    %569 = vector.extract_strided_slice %328 {offsets = [0, 30, 0], sizes = [2, 1, 256], strides = [1, 1, 1]} : vector<2x32x256xf32> to vector<2x1x256xf32>
    %570 = vector.extract_strided_slice %329 {offsets = [30, 0, 0], sizes = [1, 8, 1], strides = [1, 1, 1]} : vector<32x8x1xf32> to vector<1x8x1xf32>
    %571 = vector.shape_cast %570 : vector<1x8x1xf32> to vector<8x1xf32>
    %572 = vector.shape_cast %571 : vector<8x1xf32> to vector<1x8x1xf32>
    %573 = vector.broadcast %569 : vector<2x1x256xf32> to vector<2x8x256xf32>
    %574 = vector.broadcast %572 : vector<1x8x1xf32> to vector<2x8x256xf32>
    %575 = arith.mulf %573, %574 : vector<2x8x256xf32>
    %576 = arith.addf %568, %575 : vector<2x8x256xf32>
    %577 = vector.extract_strided_slice %328 {offsets = [0, 31, 0], sizes = [2, 1, 256], strides = [1, 1, 1]} : vector<2x32x256xf32> to vector<2x1x256xf32>
    %578 = vector.extract_strided_slice %329 {offsets = [31, 0, 0], sizes = [1, 8, 1], strides = [1, 1, 1]} : vector<32x8x1xf32> to vector<1x8x1xf32>
    %579 = vector.shape_cast %578 : vector<1x8x1xf32> to vector<8x1xf32>
    %580 = vector.shape_cast %579 : vector<8x1xf32> to vector<1x8x1xf32>
    %581 = vector.broadcast %577 : vector<2x1x256xf32> to vector<2x8x256xf32>
    %582 = vector.broadcast %580 : vector<1x8x1xf32> to vector<2x8x256xf32>
    %583 = arith.mulf %581, %582 : vector<2x8x256xf32>
    %584 = arith.addf %576, %583 : vector<2x8x256xf32>
    %c0_75 = arith.constant 0 : index
    %c0_76 = arith.constant 0 : index
    %585 = vector.load %arg13[%c0_75, %c0_76] : memref<8x1xf32, #tpu.memory_space<vmem>>, vector<8x1xf32>
    %586 = vector.shape_cast %585 : vector<8x1xf32> to vector<1x8x1xf32>
    %c0_77 = arith.constant 0 : index
    %c0_78 = arith.constant 0 : index
    %587 = vector.load %arg14[%c0_77, %c0_78] : memref<8x1xf32, #tpu.memory_space<vmem>>, vector<8x1xf32>
    %588 = vector.shape_cast %587 : vector<8x1xf32> to vector<1x8x1xf32>
    %cst_79 = arith.constant dense<0.000000e+00> : vector<2x8xf32>
    %589 = vector.multi_reduction <add>, %584, %cst_79 [2] : vector<2x8x256xf32> to vector<2x8xf32>
    %590 = vector.shape_cast %589 : vector<2x8xf32> to vector<2x8x1xf32>
    %591 = arith.mulf %584, %584 : vector<2x8x256xf32>
    %cst_80 = arith.constant dense<0.000000e+00> : vector<2x8xf32>
    %592 = vector.multi_reduction <add>, %591, %cst_80 [2] : vector<2x8x256xf32> to vector<2x8xf32>
    %593 = vector.shape_cast %592 : vector<2x8xf32> to vector<2x8x1xf32>
    %cst_81 = arith.constant dense<0.000000e+00> : vector<8x1xf32>
    %594 = vector.multi_reduction <add>, %590, %cst_81 [0] : vector<2x8x1xf32> to vector<8x1xf32>
    %595 = vector.shape_cast %594 : vector<8x1xf32> to vector<1x8x1xf32>
    %cst_82 = arith.constant 5.120000e+02 : f32
    %596 = vector.broadcast %cst_82 : f32 to vector<1x8x1xf32>
    %597 = arith.divf %595, %596 : vector<1x8x1xf32>
    %cst_83 = arith.constant dense<0.000000e+00> : vector<8x1xf32>
    %598 = vector.multi_reduction <add>, %593, %cst_83 [0] : vector<2x8x1xf32> to vector<8x1xf32>
    %599 = vector.shape_cast %598 : vector<8x1xf32> to vector<1x8x1xf32>
    %cst_84 = arith.constant 5.120000e+02 : f32
    %600 = vector.broadcast %cst_84 : f32 to vector<1x8x1xf32>
    %601 = arith.divf %599, %600 : vector<1x8x1xf32>
    %602 = arith.mulf %597, %597 : vector<1x8x1xf32>
    %603 = arith.subf %601, %602 : vector<1x8x1xf32>
    %cst_85 = arith.constant 0.000000e+00 : f32
    %604 = vector.broadcast %cst_85 : f32 to vector<1x8x1xf32>
    %605 = arith.maximumf %603, %604 : vector<1x8x1xf32>
    %cst_86 = arith.constant 1.000000e-03 : f32
    %606 = vector.broadcast %cst_86 : f32 to vector<1x8x1xf32>
    %607 = arith.addf %605, %606 : vector<1x8x1xf32>
    %608 = math.rsqrt %607 : vector<1x8x1xf32>
    %609 = vector.broadcast %597 : vector<1x8x1xf32> to vector<2x8x256xf32>
    %610 = arith.subf %584, %609 : vector<2x8x256xf32>
    %611 = arith.mulf %608, %586 : vector<1x8x1xf32>
    %612 = vector.broadcast %611 : vector<1x8x1xf32> to vector<2x8x256xf32>
    %613 = arith.mulf %610, %612 : vector<2x8x256xf32>
    %614 = vector.broadcast %588 : vector<1x8x1xf32> to vector<2x8x256xf32>
    %615 = arith.addf %613, %614 : vector<2x8x256xf32>
    %616 = arith.addf %615, %0 : vector<2x8x256xf32>
    %c0_87 = arith.constant 0 : index
    %c0_88 = arith.constant 0 : index
    %c0_89 = arith.constant 0 : index
    %617 = vector.load %arg15[%c0_87, %c0_88, %c0_89] : memref<2x8x256xf32, #tpu.memory_space<vmem>>, vector<2x8x256xf32>
    tpu.vector_store %arg15[%c0_87, %c0_88, %c0_89], %616 {strides = array<i32>} : memref<2x8x256xf32, #tpu.memory_space<vmem>>, vector<2x8x256xf32>,
    return
  }
  func.func @transform_0(%arg0: i32) -> (i32, i32, i32) {
    %c0_i32 = arith.constant 0 : i32
    %c0_i32_0 = arith.constant 0 : i32
    %c0_i32_1 = arith.constant 0 : i32
    %c0_i32_2 = arith.constant 0 : i32
    return %c0_i32, %c0_i32_0, %c0_i32_1 : i32, i32, i32
  }
  func.func @transform_1(%arg0: i32) -> (i32, i32, i32) {
    %c0_i32 = arith.constant 0 : i32
    %c0_i32_0 = arith.constant 0 : i32
    %c0_i32_1 = arith.constant 0 : i32
    %c0_i32_2 = arith.constant 0 : i32
    return %c0_i32, %c0_i32_0, %c0_i32_1 : i32, i32, i32
  }
  func.func @transform_2(%arg0: i32) -> (i32, i32) {
    %c0_i32 = arith.constant 0 : i32
    %c0_i32_0 = arith.constant 0 : i32
    %c0_i32_1 = arith.constant 0 : i32
    return %c0_i32, %c0_i32_0 : i32, i32
  }
  func.func @transform_3(%arg0: i32) -> (i32, i32) {
    %c0_i32 = arith.constant 0 : i32
    %c0_i32_0 = arith.constant 0 : i32
    %c0_i32_1 = arith.constant 0 : i32
    return %c0_i32, %c0_i32_0 : i32, i32
  }
  func.func @transform_4(%arg0: i32) -> (i32, i32, i32) {
    %c0_i32 = arith.constant 0 : i32
    %c0_i32_0 = arith.constant 0 : i32
    %c0_i32_1 = arith.constant 0 : i32
    %c0_i32_2 = arith.constant 0 : i32
    return %c0_i32, %c0_i32_0, %c0_i32_1 : i32, i32, i32
  }
  func.func @transform_5(%arg0: i32) -> (i32, i32) {
    %c0_i32 = arith.constant 0 : i32
    %c0_i32_0 = arith.constant 0 : i32
    %c0_i32_1 = arith.constant 0 : i32
    return %c0_i32, %c0_i32_0 : i32, i32
  }
  func.func @transform_6(%arg0: i32) -> (i32, i32) {
    %c0_i32 = arith.constant 0 : i32
    %c0_i32_0 = arith.constant 0 : i32
    %c0_i32_1 = arith.constant 0 : i32
    return %c0_i32, %c0_i32_0 : i32, i32
  }
  func.func @transform_7(%arg0: i32) -> (i32, i32, i32) {
    %c0_i32 = arith.constant 0 : i32
    %c0_i32_0 = arith.constant 0 : i32
    %c0_i32_1 = arith.constant 0 : i32
    %c0_i32_2 = arith.constant 0 : i32
    return %c0_i32, %c0_i32_0, %c0_i32_1 : i32, i32, i32
  }
  func.func @transform_8(%arg0: i32) -> (i32, i32, i32) {
    %c0_i32 = arith.constant 0 : i32
    %c0_i32_0 = arith.constant 0 : i32
    %c0_i32_1 = arith.constant 0 : i32
    %c0_i32_2 = arith.constant 0 : i32
    return %c0_i32, %c0_i32_0, %c0_i32_1 : i32, i32, i32
  }
  func.func @transform_9(%arg0: i32) -> (i32, i32, i32) {
    %c0_i32 = arith.constant 0 : i32
    %c0_i32_0 = arith.constant 0 : i32
    %c0_i32_1 = arith.constant 0 : i32
    %c0_i32_2 = arith.constant 0 : i32
    return %c0_i32, %c0_i32_0, %c0_i32_1 : i32, i32, i32
  }
  func.func @transform_10(%arg0: i32) -> (i32, i32) {
    %c0_i32 = arith.constant 0 : i32
    %c0_i32_0 = arith.constant 0 : i32
    %c0_i32_1 = arith.constant 0 : i32
    return %c0_i32, %c0_i32_0 : i32, i32
  }
  func.func @transform_11(%arg0: i32) -> (i32, i32, i32) {
    %c0_i32 = arith.constant 0 : i32
    %c0_i32_0 = arith.constant 0 : i32
    %c0_i32_1 = arith.constant 0 : i32
    %c0_i32_2 = arith.constant 0 : i32
    return %c0_i32, %c0_i32_0, %c0_i32_1 : i32, i32, i32
  }
  func.func @transform_12(%arg0: i32) -> (i32, i32) {
    %c0_i32 = arith.constant 0 : i32
    %c0_i32_0 = arith.constant 0 : i32
    %c0_i32_1 = arith.constant 0 : i32
    return %c0_i32, %c0_i32_0 : i32, i32
  }
  func.func @transform_13(%arg0: i32) -> (i32, i32) {
    %c0_i32 = arith.constant 0 : i32
    %c0_i32_0 = arith.constant 0 : i32
    %c0_i32_1 = arith.constant 0 : i32
    return %c0_i32, %c0_i32_0 : i32, i32
  }
  func.func @transform_14(%arg0: i32) -> (i32, i32, i32) {
    %c0_i32 = arith.constant 0 : i32
    %c0_i32_0 = arith.constant 0 : i32
    %c0_i32_1 = arith.constant 0 : i32
    %c0_i32_2 = arith.constant 0 : i32
    return %c0_i32, %c0_i32_0, %c0_i32_1 : i32, i32, i32
  }
}

</mosaic_0001>

<llo_original>
// kernel: mbconv_block.1
$region0: #{mbconv_block.1}
  #allocation0 [shape = 'u32[]', space=smem, size = 0x4, offset = 0x4, fixed_abs, tag = 'smem constant byte address 0x4 - core index']
  #allocation1 [shape = 'u32[144,128]{1,0:T(1,128)}', space=vmem, size = 0x12000, scoped, tag = 'internal scratch']
  %s0 = inlined_call_operand.vmem [shape: f32[2,8,256], index: 0, kind: input, shape index: {}]
  %s1 = inlined_call_operand.vmem [shape: f32[8,32,1], index: 1, kind: input, shape index: {}]
  %s2 = inlined_call_operand.vmem [shape: f32[32,1], index: 2, kind: input, shape index: {}]
  %s3 = inlined_call_operand.vmem [shape: f32[32,1], index: 3, kind: input, shape index: {}]
  %s4 = inlined_call_operand.vmem [shape: f32[9,32,1], index: 4, kind: input, shape index: {}]
  %s5 = inlined_call_operand.vmem [shape: f32[32,1], index: 5, kind: input, shape index: {}]
  %s6 = inlined_call_operand.vmem [shape: f32[32,1], index: 6, kind: input, shape index: {}]
  %s7 = inlined_call_operand.vmem [shape: f32[2,32,1], index: 7, kind: input, shape index: {}]
  %s8 = inlined_call_operand.vmem [shape: f32[2,1,1], index: 8, kind: input, shape index: {}]
  %s9 = inlined_call_operand.vmem [shape: f32[2,32,1], index: 9, kind: input, shape index: {}]
  %s10 = inlined_call_operand.vmem [shape: f32[32,1], index: 10, kind: input, shape index: {}]
  %s11 = inlined_call_operand.vmem [shape: f32[32,8,1], index: 11, kind: input, shape index: {}]
  %s12 = inlined_call_operand.vmem [shape: f32[8,1], index: 12, kind: input, shape index: {}]
  %s13 = inlined_call_operand.vmem [shape: f32[8,1], index: 13, kind: input, shape index: {}]
  %s14 = inlined_call_operand.vmem [shape: f32[2,8,256], index: 14, kind: output, shape index: {}]
  %s15 = sld [smem:[#allocation0]]
  $region66: #{mbconv_block.1} parent=0
    _
  %s17 = ssub.s32 1, %s15
  %s18 = scalar_select 0, %s17, %s15
  // Predicated region
  $region2: #{mbconv_block.1} parent=0 // pred_check
    _
  $region3: #{mbconv_block.1} parent=0 // pred_check_branch
    %20 = sbr.rel (0) target = $region5
  $region4: #{mbconv_block.1} parent=0 // pred_region
    _
  $region5: #{mbconv_block.1} parent=0 // pred_fallthru
    _
  // Predicated region
  $region6: #{mbconv_block.1} parent=0 // pred_check
    _
  $region7: #{mbconv_block.1} parent=0 // pred_check_branch
    %22 = sbr.rel (0) target = $region9
  $region8: #{mbconv_block.1} parent=0 // pred_region
    _
  $region9: #{mbconv_block.1} parent=0 // pred_fallthru
    _
  // Predicated region
  $region10: #{mbconv_block.1} parent=0 // pred_check
    _
  $region11: #{mbconv_block.1} parent=0 // pred_check_branch
    %24 = sbr.rel (0) target = $region13
  $region12: #{mbconv_block.1} parent=0 // pred_region
    _
  $region13: #{mbconv_block.1} parent=0 // pred_fallthru
    _
  // Predicated region
  $region14: #{mbconv_block.1} parent=0 // pred_check
    _
  $region15: #{mbconv_block.1} parent=0 // pred_check_branch
    %26 = sbr.rel (0) target = $region17
  $region16: #{mbconv_block.1} parent=0 // pred_region
    _
  $region17: #{mbconv_block.1} parent=0 // pred_fallthru
    _
  // Predicated region
  $region18: #{mbconv_block.1} parent=0 // pred_check
    _
  $region19: #{mbconv_block.1} parent=0 // pred_check_branch
    %28 = sbr.rel (0) target = $region21
  $region20: #{mbconv_block.1} parent=0 // pred_region
    _
  $region21: #{mbconv_block.1} parent=0 // pred_fallthru
    _
  // Predicated region
  $region22: #{mbconv_block.1} parent=0 // pred_check
    _
  $region23: #{mbconv_block.1} parent=0 // pred_check_branch
    %30 = sbr.rel (0) target = $region25
  $region24: #{mbconv_block.1} parent=0 // pred_region
    _
  $region25: #{mbconv_block.1} parent=0 // pred_fallthru
    _
  // Predicated region
  $region26: #{mbconv_block.1} parent=0 // pred_check
    _
  $region27: #{mbconv_block.1} parent=0 // pred_check_branch
    %32 = sbr.rel (0) target = $region29
  $region28: #{mbconv_block.1} parent=0 // pred_region
    _
  $region29: #{mbconv_block.1} parent=0 // pred_fallthru
    _
  // Predicated region
  $region30: #{mbconv_block.1} parent=0 // pred_check
    _
  $region31: #{mbconv_block.1} parent=0 // pred_check_branch
    %34 = sbr.rel (0) target = $region33
  $region32: #{mbconv_block.1} parent=0 // pred_region
    _
  $region33: #{mbconv_block.1} parent=0 // pred_fallthru
    _
  // Predicated region
  $region34: #{mbconv_block.1} parent=0 // pred_check
    _
  $region35: #{mbconv_block.1} parent=0 // pred_check_branch
    %36 = sbr.rel (0) target = $region37
  $region36: #{mbconv_block.1} parent=0 // pred_region
    _
  $region37: #{mbconv_block.1} parent=0 // pred_fallthru
    _
  // Predicated region
  $region38: #{mbconv_block.1} parent=0 // pred_check
    _
  $region39: #{mbconv_block.1} parent=0 // pred_check_branch
    %38 = sbr.rel (0) target = $region41
  $region40: #{mbconv_block.1} parent=0 // pred_region
    _
  $region41: #{mbconv_block.1} parent=0 // pred_fallthru
    _
  // Predicated region
  $region42: #{mbconv_block.1} parent=0 // pred_check
    _
  $region43: #{mbconv_block.1} parent=0 // pred_check_branch
    %40 = sbr.rel (0) target = $region45
  $region44: #{mbconv_block.1} parent=0 // pred_region
    _
  $region45: #{mbconv_block.1} parent=0 // pred_fallthru
    _
  // Predicated region
  $region46: #{mbconv_block.1} parent=0 // pred_check
    _
  $region47: #{mbconv_block.1} parent=0 // pred_check_branch
    %42 = sbr.rel (0) target = $region49
  $region48: #{mbconv_block.1} parent=0 // pred_region
    _
  $region49: #{mbconv_block.1} parent=0 // pred_fallthru
    _
  // Predicated region
  $region50: #{mbconv_block.1} parent=0 // pred_check
    _
  $region51: #{mbconv_block.1} parent=0 // pred_check_branch
    %44 = sbr.rel (0) target = $region53
  $region52: #{mbconv_block.1} parent=0 // pred_region
    _
  $region53: #{mbconv_block.1} parent=0 // pred_fallthru
    _
  // Predicated region
  $region54: #{mbconv_block.1} parent=0 // pred_check
    _
  $region55: #{mbconv_block.1} parent=0 // pred_check_branch
    %46 = sbr.rel (0) target = $region57
  $region56: #{mbconv_block.1} parent=0 // pred_region
    _
  $region57: #{mbconv_block.1} parent=0 // pred_fallthru
    _
  %v47 = vld [vmem:[%s0] sm:$0xff]
  %v48 = vld [vmem:[%s0 + $0x8] sm:$0xff]
  %v49 = vld [vmem:[%s0 + $0x10] sm:$0xff]
  %v50 = vld [vmem:[%s0 + $0x18] sm:$0xff]
  %v51 = vld [vmem:[%s1] sm:$0xff]
  %v52 = vld [vmem:[%s1 + $0x8] sm:$0xff]
  %v53 = vld [vmem:[%s1 + $0x10] sm:$0xff]
  %v54 = vld [vmem:[%s1 + $0x18] sm:$0xff]
  %v55 = vld [vmem:[%s1 + $0x20] sm:$0xff]
  %v56 = vld [vmem:[%s1 + $0x28] sm:$0xff]
  %v57 = vld [vmem:[%s1 + $0x30] sm:$0xff]
  %v58 = vld [vmem:[%s1 + $0x38] sm:$0xff]
  %v59 = vld [vmem:[%s1 + $0x40] sm:$0xff]
  %v60 = vld [vmem:[%s1 + $0x48] sm:$0xff]
  %v61 = vld [vmem:[%s1 + $0x50] sm:$0xff]
  %v62 = vld [vmem:[%s1 + $0x58] sm:$0xff]
  %v63 = vld [vmem:[%s1 + $0x60] sm:$0xff]
  %v64 = vld [vmem:[%s1 + $0x68] sm:$0xff]
  %v65 = vld [vmem:[%s1 + $0x70] sm:$0xff]
  %v66 = vld [vmem:[%s1 + $0x78] sm:$0xff]
  %v67 = vld [vmem:[%s1 + $0x80] sm:$0xff]
  %v68 = vld [vmem:[%s1 + $0x88] sm:$0xff]
  %v69 = vld [vmem:[%s1 + $0x90] sm:$0xff]
  %v70 = vld [vmem:[%s1 + $0x98] sm:$0xff]
  %v71 = vld [vmem:[%s1 + $0xa0] sm:$0xff]
  %v72 = vld [vmem:[%s1 + $0xa8] sm:$0xff]
  %v73 = vld [vmem:[%s1 + $0xb0] sm:$0xff]
  %v74 = vld [vmem:[%s1 + $0xb8] sm:$0xff]
  %v75 = vld [vmem:[%s1 + $0xc0] sm:$0xff]
  %v76 = vld [vmem:[%s1 + $0xc8] sm:$0xff]
  %v77 = vld [vmem:[%s1 + $0xd0] sm:$0xff]
  %v78 = vld [vmem:[%s1 + $0xd8] sm:$0xff]
  %v79 = vld [vmem:[%s1 + $0xe0] sm:$0xff]
  %v80 = vld [vmem:[%s1 + $0xe8] sm:$0xff]
  %v81 = vld [vmem:[%s1 + $0xf0] sm:$0xff]
  %v82 = vld [vmem:[%s1 + $0xf8] sm:$0xff]
  %v83 = vlaneseq
  %v84 = vshrl.u32 %v83, 7
  %v85 = vsub.s32 0, %v84
  %v86 = vrot.slane %v47, %v85
  %v87 = vlaneseq
  %v88 = vshrl.u32 %v87, 7
  %v89 = vsub.s32 0, %v88
  %v90 = vrot.slane %v48, %v89
  %v91 = vlaneseq
  %v92 = vshrl.u32 %v91, 7
  %v93 = vsub.s32 0, %v92
  %v94 = vrot.slane %v49, %v93
  %v95 = vlaneseq
  %v96 = vshrl.u32 %v95, 7
  %v97 = vsub.s32 0, %v96
  %v98 = vrot.slane %v50, %v97
  %100 = vset.pattern.permute.xlu0 0
  %101 = vperm.xlu0 %100, %v51
  %v102 = vpop.permute.xlu0 %101
  %105 = vset.pattern.permute.xlu0 0
  %106 = vperm.xlu0 %105, %v52
  %v107 = vpop.permute.xlu0 %106
  %110 = vset.pattern.permute.xlu0 0
  %111 = vperm.xlu0 %110, %v53
  %v112 = vpop.permute.xlu0 %111
  %115 = vset.pattern.permute.xlu0 0
  %116 = vperm.xlu0 %115, %v54
  %v117 = vpop.permute.xlu0 %116
  %v119 = vmul.f32 %v86, %v102
  %v120 = vmul.f32 %v90, %v102
  %v121 = vmul.f32 %v86, %v107
  %v122 = vmul.f32 %v90, %v107
  %v123 = vmul.f32 %v86, %v112
  %v124 = vmul.f32 %v90, %v112
  %v125 = vmul.f32 %v86, %v117
  %v126 = vmul.f32 %v90, %v117
  %v127 = vmul.f32 %v94, %v102
  %v128 = vmul.f32 %v98, %v102
  %v129 = vmul.f32 %v94, %v107
  %v130 = vmul.f32 %v98, %v107
  %v131 = vmul.f32 %v94, %v112
  %v132 = vmul.f32 %v98, %v112
  %v133 = vmul.f32 %v94, %v117
  %v134 = vmul.f32 %v98, %v117
  %v135 = vlaneseq
  %v136 = vshrl.u32 %v135, 7
  %v137 = vsub.s32 1, %v136
  %v138 = vrot.slane %v47, %v137
  %v139 = vlaneseq
  %v140 = vshrl.u32 %v139, 7
  %v141 = vsub.s32 1, %v140
  %v142 = vrot.slane %v48, %v141
  %v143 = vlaneseq
  %v144 = vshrl.u32 %v143, 7
  %v145 = vsub.s32 1, %v144
  %v146 = vrot.slane %v49, %v145
  %v147 = vlaneseq
  %v148 = vshrl.u32 %v147, 7
  %v149 = vsub.s32 1, %v148
  %v150 = vrot.slane %v50, %v149
  %152 = vset.pattern.permute.xlu0 0
  %153 = vperm.xlu0 %152, %v55
  %v154 = vpop.permute.xlu0 %153
  %157 = vset.pattern.permute.xlu0 0
  %158 = vperm.xlu0 %157, %v56
  %v159 = vpop.permute.xlu0 %158
  %162 = vset.pattern.permute.xlu0 0
  %163 = vperm.xlu0 %162, %v57
  %v164 = vpop.permute.xlu0 %163
  %167 = vset.pattern.permute.xlu0 0
  %168 = vperm.xlu0 %167, %v58
  %v169 = vpop.permute.xlu0 %168
  %v171 = vmul.f32 %v138, %v154
  %v172 = vmul.f32 %v142, %v154
  %v173 = vmul.f32 %v138, %v159
  %v174 = vmul.f32 %v142, %v159
  %v175 = vmul.f32 %v138, %v164
  %v176 = vmul.f32 %v142, %v164
  %v177 = vmul.f32 %v138, %v169
  %v178 = vmul.f32 %v142, %v169
  %v179 = vmul.f32 %v146, %v154
  %v180 = vmul.f32 %v150, %v154
  %v181 = vmul.f32 %v146, %v159
  %v182 = vmul.f32 %v150, %v159
  %v183 = vmul.f32 %v146, %v164
  %v184 = vmul.f32 %v150, %v164
  %v185 = vmul.f32 %v146, %v169
  %v186 = vmul.f32 %v150, %v169
  %v187 = vadd.f32 %v119, %v171
  %v188 = vadd.f32 %v120, %v172
  %v189 = vadd.f32 %v121, %v173
  %v190 = vadd.f32 %v122, %v174
  %v191 = vadd.f32 %v123, %v175
  %v192 = vadd.f32 %v124, %v176
  %v193 = vadd.f32 %v125, %v177
  %v194 = vadd.f32 %v126, %v178
  %v195 = vadd.f32 %v127, %v179
  %v196 = vadd.f32 %v128, %v180
  %v197 = vadd.f32 %v129, %v181
  %v198 = vadd.f32 %v130, %v182
  %v199 = vadd.f32 %v131, %v183
  %v200 = vadd.f32 %v132, %v184
  %v201 = vadd.f32 %v133, %v185
  %v202 = vadd.f32 %v134, %v186
  %v203 = vlaneseq
  %v204 = vshrl.u32 %v203, 7
  %v205 = vsub.s32 2, %v204
  %v206 = vrot.slane %v47, %v205
  %v207 = vlaneseq
  %v208 = vshrl.u32 %v207, 7
  %v209 = vsub.s32 2, %v208
  %v210 = vrot.slane %v48, %v209
  %v211 = vlaneseq
  %v212 = vshrl.u32 %v211, 7
  %v213 = vsub.s32 2, %v212
  %v214 = vrot.slane %v49, %v213
  %v215 = vlaneseq
  %v216 = vshrl.u32 %v215, 7
  %v217 = vsub.s32 2, %v216
  %v218 = vrot.slane %v50, %v217
  %220 = vset.pattern.permute.xlu0 0
  %221 = vperm.xlu0 %220, %v59
  %v222 = vpop.permute.xlu0 %221
  %225 = vset.pattern.permute.xlu0 0
  %226 = vperm.xlu0 %225, %v60
  %v227 = vpop.permute.xlu0 %226
  %230 = vset.pattern.permute.xlu0 0
  %231 = vperm.xlu0 %230, %v61
  %v232 = vpop.permute.xlu0 %231
  %235 = vset.pattern.permute.xlu0 0
  %236 = vperm.xlu0 %235, %v62
  %v237 = vpop.permute.xlu0 %236
  %v239 = vmul.f32 %v206, %v222
  %v240 = vmul.f32 %v210, %v222
  %v241 = vmul.f32 %v206, %v227
  %v242 = vmul.f32 %v210, %v227
  %v243 = vmul.f32 %v206, %v232
  %v244 = vmul.f32 %v210, %v232
  %v245 = vmul.f32 %v206, %v237
  %v246 = vmul.f32 %v210, %v237
  %v247 = vmul.f32 %v214, %v222
  %v248 = vmul.f32 %v218, %v222
  %v249 = vmul.f32 %v214, %v227
  %v250 = vmul.f32 %v218, %v227
  %v251 = vmul.f32 %v214, %v232
  %v252 = vmul.f32 %v218, %v232
  %v253 = vmul.f32 %v214, %v237
  %v254 = vmul.f32 %v218, %v237
  %v255 = vadd.f32 %v187, %v239
  %v256 = vadd.f32 %v188, %v240
  %v257 = vadd.f32 %v189, %v241
  %v258 = vadd.f32 %v190, %v242
  %v259 = vadd.f32 %v191, %v243
  %v260 = vadd.f32 %v192, %v244
  %v261 = vadd.f32 %v193, %v245
  %v262 = vadd.f32 %v194, %v246
  %v263 = vadd.f32 %v195, %v247
  %v264 = vadd.f32 %v196, %v248
  %v265 = vadd.f32 %v197, %v249
  %v266 = vadd.f32 %v198, %v250
  %v267 = vadd.f32 %v199, %v251
  %v268 = vadd.f32 %v200, %v252
  %v269 = vadd.f32 %v201, %v253
  %v270 = vadd.f32 %v202, %v254
  %v271 = vlaneseq
  %v272 = vshrl.u32 %v271, 7
  %v273 = vsub.s32 3, %v272
  %v274 = vrot.slane %v47, %v273
  %v275 = vlaneseq
  %v276 = vshrl.u32 %v275, 7
  %v277 = vsub.s32 3, %v276
  %v278 = vrot.slane %v48, %v277
  %v279 = vlaneseq
  %v280 = vshrl.u32 %v279, 7
  %v281 = vsub.s32 3, %v280
  %v282 = vrot.slane %v49, %v281
  %v283 = vlaneseq
  %v284 = vshrl.u32 %v283, 7
  %v285 = vsub.s32 3, %v284
  %v286 = vrot.slane %v50, %v285
  %288 = vset.pattern.permute.xlu0 0
  %289 = vperm.xlu0 %288, %v63
  %v290 = vpop.permute.xlu0 %289
  %293 = vset.pattern.permute.xlu0 0
  %294 = vperm.xlu0 %293, %v64
  %v295 = vpop.permute.xlu0 %294
  %298 = vset.pattern.permute.xlu0 0
  %299 = vperm.xlu0 %298, %v65
  %v300 = vpop.permute.xlu0 %299
  %303 = vset.pattern.permute.xlu0 0
  %304 = vperm.xlu0 %303, %v66
  %v305 = vpop.permute.xlu0 %304
  %v307 = vmul.f32 %v274, %v290
  %v308 = vmul.f32 %v278, %v290
  %v309 = vmul.f32 %v274, %v295
  %v310 = vmul.f32 %v278, %v295
  %v311 = vmul.f32 %v274, %v300
  %v312 = vmul.f32 %v278, %v300
  %v313 = vmul.f32 %v274, %v305
  %v314 = vmul.f32 %v278, %v305
  %v315 = vmul.f32 %v282, %v290
  %v316 = vmul.f32 %v286, %v290
  %v317 = vmul.f32 %v282, %v295
  %v318 = vmul.f32 %v286, %v295
  %v319 = vmul.f32 %v282, %v300
  %v320 = vmul.f32 %v286, %v300
  %v321 = vmul.f32 %v282, %v305
  %v322 = vmul.f32 %v286, %v305
  %v323 = vadd.f32 %v255, %v307
  %v324 = vadd.f32 %v256, %v308
  %v325 = vadd.f32 %v257, %v309
  %v326 = vadd.f32 %v258, %v310
  %v327 = vadd.f32 %v259, %v311
  %v328 = vadd.f32 %v260, %v312
  %v329 = vadd.f32 %v261, %v313
  %v330 = vadd.f32 %v262, %v314
  %v331 = vadd.f32 %v263, %v315
  %v332 = vadd.f32 %v264, %v316
  %v333 = vadd.f32 %v265, %v317
  %v334 = vadd.f32 %v266, %v318
  %v335 = vadd.f32 %v267, %v319
  %v336 = vadd.f32 %v268, %v320
  %v337 = vadd.f32 %v269, %v321
  %v338 = vadd.f32 %v270, %v322
  %v339 = vlaneseq
  %v340 = vshrl.u32 %v339, 7
  %v341 = vsub.s32 4, %v340
  %v342 = vrot.slane %v47, %v341
  %v343 = vlaneseq
  %v344 = vshrl.u32 %v343, 7
  %v345 = vsub.s32 4, %v344
  %v346 = vrot.slane %v48, %v345
  %v347 = vlaneseq
  %v348 = vshrl.u32 %v347, 7
  %v349 = vsub.s32 4, %v348
  %v350 = vrot.slane %v49, %v349
  %v351 = vlaneseq
  %v352 = vshrl.u32 %v351, 7
  %v353 = vsub.s32 4, %v352
  %v354 = vrot.slane %v50, %v353
  %356 = vset.pattern.permute.xlu0 0
  %357 = vperm.xlu0 %356, %v67
  %v358 = vpop.permute.xlu0 %357
  %361 = vset.pattern.permute.xlu0 0
  %362 = vperm.xlu0 %361, %v68
  %v363 = vpop.permute.xlu0 %362
  %366 = vset.pattern.permute.xlu0 0
  %367 = vperm.xlu0 %366, %v69
  %v368 = vpop.permute.xlu0 %367
  %371 = vset.pattern.permute.xlu0 0
  %372 = vperm.xlu0 %371, %v70
  %v373 = vpop.permute.xlu0 %372
  %v375 = vmul.f32 %v342, %v358
  %v376 = vmul.f32 %v346, %v358
  %v377 = vmul.f32 %v342, %v363
  %v378 = vmul.f32 %v346, %v363
  %v379 = vmul.f32 %v342, %v368
  %v380 = vmul.f32 %v346, %v368
  %v381 = vmul.f32 %v342, %v373
  %v382 = vmul.f32 %v346, %v373
  %v383 = vmul.f32 %v350, %v358
  %v384 = vmul.f32 %v354, %v358
  %v385 = vmul.f32 %v350, %v363
  %v386 = vmul.f32 %v354, %v363
  %v387 = vmul.f32 %v350, %v368
  %v388 = vmul.f32 %v354, %v368
  %v389 = vmul.f32 %v350, %v373
  %v390 = vmul.f32 %v354, %v373
  %v391 = vadd.f32 %v323, %v375
  %v392 = vadd.f32 %v324, %v376
  %v393 = vadd.f32 %v325, %v377
  %v394 = vadd.f32 %v326, %v378
  %v395 = vadd.f32 %v327, %v379
  %v396 = vadd.f32 %v328, %v380
  %v397 = vadd.f32 %v329, %v381
  %v398 = vadd.f32 %v330, %v382
  %v399 = vadd.f32 %v331, %v383
  %v400 = vadd.f32 %v332, %v384
  %v401 = vadd.f32 %v333, %v385
  %v402 = vadd.f32 %v334, %v386
  %v403 = vadd.f32 %v335, %v387
  %v404 = vadd.f32 %v336, %v388
  %v405 = vadd.f32 %v337, %v389
  %v406 = vadd.f32 %v338, %v390
  %v407 = vlaneseq
  %v408 = vshrl.u32 %v407, 7
  %v409 = vsub.s32 5, %v408
  %v410 = vrot.slane %v47, %v409
  %v411 = vlaneseq
  %v412 = vshrl.u32 %v411, 7
  %v413 = vsub.s32 5, %v412
  %v414 = vrot.slane %v48, %v413
  %v415 = vlaneseq
  %v416 = vshrl.u32 %v415, 7
  %v417 = vsub.s32 5, %v416
  %v418 = vrot.slane %v49, %v417
  %v419 = vlaneseq
  %v420 = vshrl.u32 %v419, 7
  %v421 = vsub.s32 5, %v420
  %v422 = vrot.slane %v50, %v421
  %424 = vset.pattern.permute.xlu0 0
  %425 = vperm.xlu0 %424, %v71
  %v426 = vpop.permute.xlu0 %425
  %429 = vset.pattern.permute.xlu0 0
  %430 = vperm.xlu0 %429, %v72
  %v431 = vpop.permute.xlu0 %430
  %434 = vset.pattern.permute.xlu0 0
  %435 = vperm.xlu0 %434, %v73
  %v436 = vpop.permute.xlu0 %435
  %439 = vset.pattern.permute.xlu0 0
  %440 = vperm.xlu0 %439, %v74
  %v441 = vpop.permute.xlu0 %440
  %v443 = vmul.f32 %v410, %v426
  %v444 = vmul.f32 %v414, %v426
  %v445 = vmul.f32 %v410, %v431
  %v446 = vmul.f32 %v414, %v431
  %v447 = vmul.f32 %v410, %v436
  %v448 = vmul.f32 %v414, %v436
  %v449 = vmul.f32 %v410, %v441
  %v450 = vmul.f32 %v414, %v441
  %v451 = vmul.f32 %v418, %v426
  %v452 = vmul.f32 %v422, %v426
  %v453 = vmul.f32 %v418, %v431
  %v454 = vmul.f32 %v422, %v431
  %v455 = vmul.f32 %v418, %v436
  %v456 = vmul.f32 %v422, %v436
  %v457 = vmul.f32 %v418, %v441
  %v458 = vmul.f32 %v422, %v441
  %v459 = vadd.f32 %v391, %v443
  %v460 = vadd.f32 %v392, %v444
  %v461 = vadd.f32 %v393, %v445
  %v462 = vadd.f32 %v394, %v446
  %v463 = vadd.f32 %v395, %v447
  %v464 = vadd.f32 %v396, %v448
  %v465 = vadd.f32 %v397, %v449
  %v466 = vadd.f32 %v398, %v450
  %v467 = vadd.f32 %v399, %v451
  %v468 = vadd.f32 %v400, %v452
  %v469 = vadd.f32 %v401, %v453
  %v470 = vadd.f32 %v402, %v454
  %v471 = vadd.f32 %v403, %v455
  %v472 = vadd.f32 %v404, %v456
  %v473 = vadd.f32 %v405, %v457
  %v474 = vadd.f32 %v406, %v458
  %v475 = vlaneseq
  %v476 = vshrl.u32 %v475, 7
  %v477 = vsub.s32 6, %v476
  %v478 = vrot.slane %v47, %v477
  %v479 = vlaneseq
  %v480 = vshrl.u32 %v479, 7
  %v481 = vsub.s32 6, %v480
  %v482 = vrot.slane %v48, %v481
  %v483 = vlaneseq
  %v484 = vshrl.u32 %v483, 7
  %v485 = vsub.s32 6, %v484
  %v486 = vrot.slane %v49, %v485
  %v487 = vlaneseq
  %v488 = vshrl.u32 %v487, 7
  %v489 = vsub.s32 6, %v488
  %v490 = vrot.slane %v50, %v489
  %492 = vset.pattern.permute.xlu0 0
  %493 = vperm.xlu0 %492, %v75
  %v494 = vpop.permute.xlu0 %493
  %497 = vset.pattern.permute.xlu0 0
  %498 = vperm.xlu0 %497, %v76
  %v499 = vpop.permute.xlu0 %498
  %502 = vset.pattern.permute.xlu0 0
  %503 = vperm.xlu0 %502, %v77
  %v504 = vpop.permute.xlu0 %503
  %507 = vset.pattern.permute.xlu0 0
  %508 = vperm.xlu0 %507, %v78
  %v509 = vpop.permute.xlu0 %508
  %v511 = vmul.f32 %v478, %v494
  %v512 = vmul.f32 %v482, %v494
  %v513 = vmul.f32 %v478, %v499
  %v514 = vmul.f32 %v482, %v499
  %v515 = vmul.f32 %v478, %v504
  %v516 = vmul.f32 %v482, %v504
  %v517 = vmul.f32 %v478, %v509
  %v518 = vmul.f32 %v482, %v509
  %v519 = vmul.f32 %v486, %v494
  %v520 = vmul.f32 %v490, %v494
  %v521 = vmul.f32 %v486, %v499
  %v522 = vmul.f32 %v490, %v499
  %v523 = vmul.f32 %v486, %v504
  %v524 = vmul.f32 %v490, %v504
  %v525 = vmul.f32 %v486, %v509
  %v526 = vmul.f32 %v490, %v509
  %v527 = vadd.f32 %v459, %v511
  %v528 = vadd.f32 %v460, %v512
  %v529 = vadd.f32 %v461, %v513
  %v530 = vadd.f32 %v462, %v514
  %v531 = vadd.f32 %v463, %v515
  %v532 = vadd.f32 %v464, %v516
  %v533 = vadd.f32 %v465, %v517
  %v534 = vadd.f32 %v466, %v518
  %v535 = vadd.f32 %v467, %v519
  %v536 = vadd.f32 %v468, %v520
  %v537 = vadd.f32 %v469, %v521
  %v538 = vadd.f32 %v470, %v522
  %v539 = vadd.f32 %v471, %v523
  %v540 = vadd.f32 %v472, %v524
  %v541 = vadd.f32 %v473, %v525
  %v542 = vadd.f32 %v474, %v526
  %v543 = vlaneseq
  %v544 = vshrl.u32 %v543, 7
  %v545 = vsub.s32 7, %v544
  %v546 = vrot.slane %v47, %v545
  %v547 = vlaneseq
  %v548 = vshrl.u32 %v547, 7
  %v549 = vsub.s32 7, %v548
  %v550 = vrot.slane %v48, %v549
  %v551 = vlaneseq
  %v552 = vshrl.u32 %v551, 7
  %v553 = vsub.s32 7, %v552
  %v554 = vrot.slane %v49, %v553
  %v555 = vlaneseq
  %v556 = vshrl.u32 %v555, 7
  %v557 = vsub.s32 7, %v556
  %v558 = vrot.slane %v50, %v557
  %560 = vset.pattern.permute.xlu0 0
  %561 = vperm.xlu0 %560, %v79
  %v562 = vpop.permute.xlu0 %561
  %565 = vset.pattern.permute.xlu0 0
  %566 = vperm.xlu0 %565, %v80
  %v567 = vpop.permute.xlu0 %566
  %570 = vset.pattern.permute.xlu0 0
  %571 = vperm.xlu0 %570, %v81
  %v572 = vpop.permute.xlu0 %571
  %575 = vset.pattern.permute.xlu0 0
  %576 = vperm.xlu0 %575, %v82
  %v577 = vpop.permute.xlu0 %576
  %v579 = vmul.f32 %v546, %v562
  %v580 = vmul.f32 %v550, %v562
  %v581 = vmul.f32 %v546, %v567
  %v582 = vmul.f32 %v550, %v567
  %v583 = vmul.f32 %v546, %v572
  %v584 = vmul.f32 %v550, %v572
  %v585 = vmul.f32 %v546, %v577
  %v586 = vmul.f32 %v550, %v577
  %v587 = vmul.f32 %v554, %v562
  %v588 = vmul.f32 %v558, %v562
  %v589 = vmul.f32 %v554, %v567
  %v590 = vmul.f32 %v558, %v567
  %v591 = vmul.f32 %v554, %v572
  %v592 = vmul.f32 %v558, %v572
  %v593 = vmul.f32 %v554, %v577
  %v594 = vmul.f32 %v558, %v577
  %v595 = vadd.f32 %v527, %v579
  %v596 = vadd.f32 %v528, %v580
  %v597 = vadd.f32 %v529, %v581
  %v598 = vadd.f32 %v530, %v582
  %v599 = vadd.f32 %v531, %v583
  %v600 = vadd.f32 %v532, %v584
  %v601 = vadd.f32 %v533, %v585
  %v602 = vadd.f32 %v534, %v586
  %v603 = vadd.f32 %v535, %v587
  %v604 = vadd.f32 %v536, %v588
  %v605 = vadd.f32 %v537, %v589
  %v606 = vadd.f32 %v538, %v590
  %v607 = vadd.f32 %v539, %v591
  %v608 = vadd.f32 %v540, %v592
  %v609 = vadd.f32 %v541, %v593
  %v610 = vadd.f32 %v542, %v594
  %v611 = vld [vmem:[%s2] sm:$0xff]
  %v612 = vld [vmem:[%s2 + $0x8] sm:$0xff]
  %v613 = vld [vmem:[%s2 + $0x10] sm:$0xff]
  %v614 = vld [vmem:[%s2 + $0x18] sm:$0xff]
  %v615 = vld [vmem:[%s3] sm:$0xff]
  %v616 = vld [vmem:[%s3 + $0x8] sm:$0xff]
  %v617 = vld [vmem:[%s3 + $0x10] sm:$0xff]
  %v618 = vld [vmem:[%s3 + $0x18] sm:$0xff]
  %v619 = vadd.f32 %v595, %v596
  %620 = vadd.xlane.f32.xlu0 %v619
  %v621 = vpop.xlane.xlu0 %620
  %v622 = vadd.f32 %v597, %v598
  %623 = vadd.xlane.f32.xlu0 %v622
  %v624 = vpop.xlane.xlu0 %623
  %v625 = vadd.f32 %v599, %v600
  %626 = vadd.xlane.f32.xlu0 %v625
  %v627 = vpop.xlane.xlu0 %626
  %v628 = vadd.f32 %v601, %v602
  %629 = vadd.xlane.f32.xlu0 %v628
  %v630 = vpop.xlane.xlu0 %629
  %v631 = vadd.f32 %v603, %v604
  %632 = vadd.xlane.f32.xlu0 %v631
  %v633 = vpop.xlane.xlu0 %632
  %v634 = vadd.f32 %v605, %v606
  %635 = vadd.xlane.f32.xlu0 %v634
  %v636 = vpop.xlane.xlu0 %635
  %v637 = vadd.f32 %v607, %v608
  %638 = vadd.xlane.f32.xlu0 %v637
  %v639 = vpop.xlane.xlu0 %638
  %v640 = vadd.f32 %v609, %v610
  %641 = vadd.xlane.f32.xlu0 %v640
  %v642 = vpop.xlane.xlu0 %641
  %v643 = vmul.f32 %v595, %v595
  %v644 = vmul.f32 %v596, %v596
  %v645 = vmul.f32 %v597, %v597
  %v646 = vmul.f32 %v598, %v598
  %v647 = vmul.f32 %v599, %v599
  %v648 = vmul.f32 %v600, %v600
  %v649 = vmul.f32 %v601, %v601
  %v650 = vmul.f32 %v602, %v602
  %v651 = vmul.f32 %v603, %v603
  %v652 = vmul.f32 %v604, %v604
  %v653 = vmul.f32 %v605, %v605
  %v654 = vmul.f32 %v606, %v606
  %v655 = vmul.f32 %v607, %v607
  %v656 = vmul.f32 %v608, %v608
  %v657 = vmul.f32 %v609, %v609
  %v658 = vmul.f32 %v610, %v610
  %v659 = vadd.f32 %v643, %v644
  %660 = vadd.xlane.f32.xlu0 %v659
  %v661 = vpop.xlane.xlu0 %660
  %v662 = vadd.f32 %v645, %v646
  %663 = vadd.xlane.f32.xlu0 %v662
  %v664 = vpop.xlane.xlu0 %663
  %v665 = vadd.f32 %v647, %v648
  %666 = vadd.xlane.f32.xlu0 %v665
  %v667 = vpop.xlane.xlu0 %666
  %v668 = vadd.f32 %v649, %v650
  %669 = vadd.xlane.f32.xlu0 %v668
  %v670 = vpop.xlane.xlu0 %669
  %v671 = vadd.f32 %v651, %v652
  %672 = vadd.xlane.f32.xlu0 %v671
  %v673 = vpop.xlane.xlu0 %672
  %v674 = vadd.f32 %v653, %v654
  %675 = vadd.xlane.f32.xlu0 %v674
  %v676 = vpop.xlane.xlu0 %675
  %v677 = vadd.f32 %v655, %v656
  %678 = vadd.xlane.f32.xlu0 %v677
  %v679 = vpop.xlane.xlu0 %678
  %v680 = vadd.f32 %v657, %v658
  %681 = vadd.xlane.f32.xlu0 %v680
  %v682 = vpop.xlane.xlu0 %681
  %v683 = vadd.f32 %v621, %v633
  %v684 = vadd.f32 %v624, %v636
  %v685 = vadd.f32 %v627, %v639
  %v686 = vadd.f32 %v630, %v642
  %v687 = vrcp.pop 512.0
  %v688 = vmul.f32 %v683, %v687
  %v689 = vmul.f32 %v684, %v687
  %v690 = vmul.f32 %v685, %v687
  %v691 = vmul.f32 %v686, %v687
  %v692 = vadd.f32 %v661, %v673
  %v693 = vadd.f32 %v664, %v676
  %v694 = vadd.f32 %v667, %v679
  %v695 = vadd.f32 %v670, %v682
  %v696 = vmul.f32 %v692, %v687
  %v697 = vmul.f32 %v693, %v687
  %v698 = vmul.f32 %v694, %v687
  %v699 = vmul.f32 %v695, %v687
  %v700 = vmul.f32 %v688, %v688
  %v701 = vmul.f32 %v689, %v689
  %v702 = vmul.f32 %v690, %v690
  %v703 = vmul.f32 %v691, %v691
  %v704 = vsub.f32 %v696, %v700
  %v705 = vsub.f32 %v697, %v701
  %v706 = vsub.f32 %v698, %v702
  %v707 = vsub.f32 %v699, %v703
  %v708 = vmax.f32 %v704, 0.0
  %v709 = vmax.f32 %v705, 0.0
  %v710 = vmax.f32 %v706, 0.0
  %v711 = vmax.f32 %v707, 0.0
  %v712 = vadd.f32 %v708, 0.001
  %v713 = vadd.f32 %v709, 0.001
  %v714 = vadd.f32 %v710, 0.001
  %v715 = vadd.f32 %v711, 0.001
  %v716 = vrsqrt.pop %v712
  %v717 = vrsqrt.pop %v713
  %v718 = vrsqrt.pop %v714
  %v719 = vrsqrt.pop %v715
  %v720 = vsub.f32 %v595, %v688
  %v721 = vsub.f32 %v596, %v688
  %v722 = vsub.f32 %v597, %v689
  %v723 = vsub.f32 %v598, %v689
  %v724 = vsub.f32 %v599, %v690
  %v725 = vsub.f32 %v600, %v690
  %v726 = vsub.f32 %v601, %v691
  %v727 = vsub.f32 %v602, %v691
  %v728 = vsub.f32 %v603, %v688
  %v729 = vsub.f32 %v604, %v688
  %v730 = vsub.f32 %v605, %v689
  %v731 = vsub.f32 %v606, %v689
  %v732 = vsub.f32 %v607, %v690
  %v733 = vsub.f32 %v608, %v690
  %v734 = vsub.f32 %v609, %v691
  %v735 = vsub.f32 %v610, %v691
  %v736 = vmul.f32 %v716, %v611
  %v737 = vmul.f32 %v717, %v612
  %v738 = vmul.f32 %v718, %v613
  %v739 = vmul.f32 %v719, %v614
  %741 = vset.pattern.permute.xlu0 0
  %742 = vperm.xlu0 %741, %v736
  %v743 = vpop.permute.xlu0 %742
  %746 = vset.pattern.permute.xlu0 0
  %747 = vperm.xlu0 %746, %v737
  %v748 = vpop.permute.xlu0 %747
  %751 = vset.pattern.permute.xlu0 0
  %752 = vperm.xlu0 %751, %v738
  %v753 = vpop.permute.xlu0 %752
  %756 = vset.pattern.permute.xlu0 0
  %757 = vperm.xlu0 %756, %v739
  %v758 = vpop.permute.xlu0 %757
  %v760 = vmul.f32 %v720, %v743
  %v761 = vmul.f32 %v721, %v743
  %v762 = vmul.f32 %v722, %v748
  %v763 = vmul.f32 %v723, %v748
  %v764 = vmul.f32 %v724, %v753
  %v765 = vmul.f32 %v725, %v753
  %v766 = vmul.f32 %v726, %v758
  %v767 = vmul.f32 %v727, %v758
  %v768 = vmul.f32 %v728, %v743
  %v769 = vmul.f32 %v729, %v743
  %v770 = vmul.f32 %v730, %v748
  %v771 = vmul.f32 %v731, %v748
  %v772 = vmul.f32 %v732, %v753
  %v773 = vmul.f32 %v733, %v753
  %v774 = vmul.f32 %v734, %v758
  %v775 = vmul.f32 %v735, %v758
  %777 = vset.pattern.permute.xlu0 0
  %778 = vperm.xlu0 %777, %v615
  %v779 = vpop.permute.xlu0 %778
  %782 = vset.pattern.permute.xlu0 0
  %783 = vperm.xlu0 %782, %v616
  %v784 = vpop.permute.xlu0 %783
  %787 = vset.pattern.permute.xlu0 0
  %788 = vperm.xlu0 %787, %v617
  %v789 = vpop.permute.xlu0 %788
  %792 = vset.pattern.permute.xlu0 0
  %793 = vperm.xlu0 %792, %v618
  %v794 = vpop.permute.xlu0 %793
  %v796 = vadd.f32 %v760, %v779
  %v797 = vadd.f32 %v761, %v779
  %v798 = vadd.f32 %v762, %v784
  %v799 = vadd.f32 %v763, %v784
  %v800 = vadd.f32 %v764, %v789
  %v801 = vadd.f32 %v765, %v789
  %v802 = vadd.f32 %v766, %v794
  %v803 = vadd.f32 %v767, %v794
  %v804 = vadd.f32 %v768, %v779
  %v805 = vadd.f32 %v769, %v779
  %v806 = vadd.f32 %v770, %v784
  %v807 = vadd.f32 %v771, %v784
  %v808 = vadd.f32 %v772, %v789
  %v809 = vadd.f32 %v773, %v789
  %v810 = vadd.f32 %v774, %v794
  %v811 = vadd.f32 %v775, %v794
  %v812 = vxor.u32 %v796, 2147483648
  %v813 = vxor.u32 %v797, 2147483648
  %v814 = vxor.u32 %v798, 2147483648
  %v815 = vxor.u32 %v799, 2147483648
  %v816 = vxor.u32 %v800, 2147483648
  %v817 = vxor.u32 %v801, 2147483648
  %v818 = vxor.u32 %v802, 2147483648
  %v819 = vxor.u32 %v803, 2147483648
  %v820 = vxor.u32 %v804, 2147483648
  %v821 = vxor.u32 %v805, 2147483648
  %v822 = vxor.u32 %v806, 2147483648
  %v823 = vxor.u32 %v807, 2147483648
  %v824 = vxor.u32 %v808, 2147483648
  %v825 = vxor.u32 %v809, 2147483648
  %v826 = vxor.u32 %v810, 2147483648
  %v827 = vxor.u32 %v811, 2147483648
  %v828 = vmul.f32 %v812, 1.442695
  %v829 = vpow.pop %v828
  %v830 = vmul.f32 %v813, 1.442695
  %v831 = vpow.pop %v830
  %v832 = vmul.f32 %v814, 1.442695
  %v833 = vpow.pop %v832
  %v834 = vmul.f32 %v815, 1.442695
  %v835 = vpow.pop %v834
  %v836 = vmul.f32 %v816, 1.442695
  %v837 = vpow.pop %v836
  %v838 = vmul.f32 %v817, 1.442695
  %v839 = vpow.pop %v838
  %v840 = vmul.f32 %v818, 1.442695
  %v841 = vpow.pop %v840
  %v842 = vmul.f32 %v819, 1.442695
  %v843 = vpow.pop %v842
  %v844 = vmul.f32 %v820, 1.442695
  %v845 = vpow.pop %v844
  %v846 = vmul.f32 %v821, 1.442695
  %v847 = vpow.pop %v846
  %v848 = vmul.f32 %v822, 1.442695
  %v849 = vpow.pop %v848
  %v850 = vmul.f32 %v823, 1.442695
  %v851 = vpow.pop %v850
  %v852 = vmul.f32 %v824, 1.442695
  %v853 = vpow.pop %v852
  %v854 = vmul.f32 %v825, 1.442695
  %v855 = vpow.pop %v854
  %v856 = vmul.f32 %v826, 1.442695
  %v857 = vpow.pop %v856
  %v858 = vmul.f32 %v827, 1.442695
  %v859 = vpow.pop %v858
  %v860 = vadd.f32 %v829, 1.0
  %v861 = vadd.f32 %v831, 1.0
  %v862 = vadd.f32 %v833, 1.0
  %v863 = vadd.f32 %v835, 1.0
  %v864 = vadd.f32 %v837, 1.0
  %v865 = vadd.f32 %v839, 1.0
  %v866 = vadd.f32 %v841, 1.0
  %v867 = vadd.f32 %v843, 1.0
  %v868 = vadd.f32 %v845, 1.0
  %v869 = vadd.f32 %v847, 1.0
  %v870 = vadd.f32 %v849, 1.0
  %v871 = vadd.f32 %v851, 1.0
  %v872 = vadd.f32 %v853, 1.0
  %v873 = vadd.f32 %v855, 1.0
  %v874 = vadd.f32 %v857, 1.0
  %v875 = vadd.f32 %v859, 1.0
  %v876 = vrcp.pop %v860
  %v877 = vmul.f32 1.0, %v876
  %v878 = vrcp.pop %v861
  %v879 = vmul.f32 1.0, %v878
  %v880 = vrcp.pop %v862
  %v881 = vmul.f32 1.0, %v880
  %v882 = vrcp.pop %v863
  %v883 = vmul.f32 1.0, %v882
  %v884 = vrcp.pop %v864
  %v885 = vmul.f32 1.0, %v884
  %v886 = vrcp.pop %v865
  %v887 = vmul.f32 1.0, %v886
  %v888 = vrcp.pop %v866
  %v889 = vmul.f32 1.0, %v888
  %v890 = vrcp.pop %v867
  %v891 = vmul.f32 1.0, %v890
  %v892 = vrcp.pop %v868
  %v893 = vmul.f32 1.0, %v892
  %v894 = vrcp.pop %v869
  %v895 = vmul.f32 1.0, %v894
  %v896 = vrcp.pop %v870
  %v897 = vmul.f32 1.0, %v896
  %v898 = vrcp.pop %v871
  %v899 = vmul.f32 1.0, %v898
  %v900 = vrcp.pop %v872
  %v901 = vmul.f32 1.0, %v900
  %v902 = vrcp.pop %v873
  %v903 = vmul.f32 1.0, %v902
  %v904 = vrcp.pop %v874
  %v905 = vmul.f32 1.0, %v904
  %v906 = vrcp.pop %v875
  %v907 = vmul.f32 1.0, %v906
  %v908 = vmul.f32 %v796, %v877
  %v909 = vmul.f32 %v797, %v879
  %v910 = vmul.f32 %v798, %v881
  %v911 = vmul.f32 %v799, %v883
  %v912 = vmul.f32 %v800, %v885
  %v913 = vmul.f32 %v801, %v887
  %v914 = vmul.f32 %v802, %v889
  %v915 = vmul.f32 %v803, %v891
  %v916 = vmul.f32 %v804, %v893
  %v917 = vmul.f32 %v805, %v895
  %v918 = vmul.f32 %v806, %v897
  %v919 = vmul.f32 %v807, %v899
  %v920 = vmul.f32 %v808, %v901
  %v921 = vmul.f32 %v809, %v903
  %v922 = vmul.f32 %v810, %v905
  %v923 = vmul.f32 %v811, %v907
  %v924 = vlaneseq
  %v925 = vand.u32 %v924, 127
  %v926 = vadd.s32 %v925, 128
  %vm927 = vcmp.lt.s32.totalorder %v925, 0
  %v928 = vsub.s32 0, %v925
  %v929 = vsel %vm927, %v928, %v925
  %v930 = vshrl.u32 %v929, 4
  %v931 = vand.u32 %v929, 15
  %v932 = vsub.s32 0, %v931
  %v933 = vsel %vm927, %v932, %v931
  %vm934 = vcmp.lt.s32.totalorder %v926, 0
  %v935 = vsub.s32 0, %v926
  %v936 = vsel %vm934, %v935, %v926
  %v937 = vshrl.u32 %v936, 4
  %v938 = vand.u32 %v936, 15
  %v939 = vsub.s32 0, %v938
  %v940 = vsel %vm934, %v939, %v938
  %vm941 = vcmp.ne.s32.totalorder %v933, 0
  %vm942 = vcmp.ne.s32.totalorder %v940, 0
  %vm943 = vcmp.lt.s32.totalorder %v933, 0
  %vm944 = vcmp.lt.s32.totalorder %v940, 0
  %vm945 = vmand %vm943, %vm941
  %vm946 = vmand %vm944, %vm942
  %v947 = vadd.s32 %v933, 16
  %v948 = vadd.s32 %v940, 16
  %v949 = vsel %vm945, %v947, %v933
  %v950 = vsel %vm946, %v948, %v940
  %967 = vrot.lane.b32.xlu0 %v908, 1
  %v968 = vpop.permute.xlu0 %967
  %969 = vrot.lane.b32.xlu0 %v909, 1
  %v970 = vpop.permute.xlu0 %969
  %971 = vrot.lane.b32.xlu0 %v910, 1
  %v972 = vpop.permute.xlu0 %971
  %973 = vrot.lane.b32.xlu0 %v911, 1
  %v974 = vpop.permute.xlu0 %973
  %975 = vrot.lane.b32.xlu0 %v912, 1
  %v976 = vpop.permute.xlu0 %975
  %977 = vrot.lane.b32.xlu0 %v913, 1
  %v978 = vpop.permute.xlu0 %977
  %979 = vrot.lane.b32.xlu0 %v914, 1
  %v980 = vpop.permute.xlu0 %979
  %981 = vrot.lane.b32.xlu0 %v915, 1
  %v982 = vpop.permute.xlu0 %981
  %983 = vrot.lane.b32.xlu0 %v916, 1
  %v984 = vpop.permute.xlu0 %983
  %985 = vrot.lane.b32.xlu0 %v917, 1
  %v986 = vpop.permute.xlu0 %985
  %987 = vrot.lane.b32.xlu0 %v918, 1
  %v988 = vpop.permute.xlu0 %987
  %989 = vrot.lane.b32.xlu0 %v919, 1
  %v990 = vpop.permute.xlu0 %989
  %991 = vrot.lane.b32.xlu0 %v920, 1
  %v992 = vpop.permute.xlu0 %991
  %993 = vrot.lane.b32.xlu0 %v921, 1
  %v994 = vpop.permute.xlu0 %993
  %995 = vrot.lane.b32.xlu0 %v922, 1
  %v996 = vpop.permute.xlu0 %995
  %997 = vrot.lane.b32.xlu0 %v923, 1
  %v998 = vpop.permute.xlu0 %997
  %vm999 = vcmask 7168
  %v1000 = vsel %vm999, %v968, %v970
  %v1001 = vsel %vm999, %v972, %v974
  %v1002 = vsel %vm999, %v976, %v978
  %v1003 = vsel %vm999, %v980, %v982
  %v1004 = vsel %vm999, %v984, %v986
  %v1005 = vsel %vm999, %v988, %v990
  %v1006 = vsel %vm999, %v992, %v994
  %v1007 = vsel %vm999, %v996, %v998
  %v1024 = vsel %vm999, 0.0, %v968
  %v1025 = vsel %vm999, 0.0, %v972
  %v1026 = vsel %vm999, 0.0, %v976
  %v1027 = vsel %vm999, 0.0, %v980
  %v1028 = vsel %vm999, 0.0, %v984
  %v1029 = vsel %vm999, 0.0, %v988
  %v1030 = vsel %vm999, 0.0, %v992
  %v1031 = vsel %vm999, 0.0, %v996
  %v1032 = vadd.s32 %v949, 4294967295
  %v1033 = vadd.s32 %v950, 4294967295
  %vm1034 = vcmp.ge.s32.totalorder %v1032, 0
  %vm1035 = vcmp.ge.s32.totalorder %v1033, 0
  %vm1036 = vcmp.lt.s32.totalorder %v1032, 16
  %vm1037 = vcmp.lt.s32.totalorder %v1033, 16
  %vm1038 = vmand %vm1034, %vm1036
  %vm1039 = vmand %vm1035, %vm1037
  %v1040 = vsel %vm1038, 1, 0
  %v1041 = vsel %vm1039, 1, 0
  %vm1042 = vcmp.eq.s32.totalorder %v1040, 1
  %vm1043 = vcmp.eq.s32.totalorder %v1041, 1
  %v1044 = vsel %vm1042, %v1024, 0.0
  %v1045 = vsel %vm1043, %v1000, 0.0
  %v1046 = vsel %vm1042, %v1025, 0.0
  %v1047 = vsel %vm1043, %v1001, 0.0
  %v1048 = vsel %vm1042, %v1026, 0.0
  %v1049 = vsel %vm1043, %v1002, 0.0
  %v1050 = vsel %vm1042, %v1027, 0.0
  %v1051 = vsel %vm1043, %v1003, 0.0
  %v1052 = vsel %vm1042, %v1028, 0.0
  %v1053 = vsel %vm1043, %v1004, 0.0
  %v1054 = vsel %vm1042, %v1029, 0.0
  %v1055 = vsel %vm1043, %v1005, 0.0
  %v1056 = vsel %vm1042, %v1030, 0.0
  %v1057 = vsel %vm1043, %v1006, 0.0
  %v1058 = vsel %vm1042, %v1031, 0.0
  %v1059 = vsel %vm1043, %v1007, 0.0
  %1060 = vrot.lane.b32.xlu0 %v908, 127
  %v1061 = vpop.permute.xlu0 %1060
  %1062 = vrot.lane.b32.xlu0 %v909, 127
  %v1063 = vpop.permute.xlu0 %1062
  %1064 = vrot.lane.b32.xlu0 %v910, 127
  %v1065 = vpop.permute.xlu0 %1064
  %1066 = vrot.lane.b32.xlu0 %v911, 127
  %v1067 = vpop.permute.xlu0 %1066
  %1068 = vrot.lane.b32.xlu0 %v912, 127
  %v1069 = vpop.permute.xlu0 %1068
  %1070 = vrot.lane.b32.xlu0 %v913, 127
  %v1071 = vpop.permute.xlu0 %1070
  %1072 = vrot.lane.b32.xlu0 %v914, 127
  %v1073 = vpop.permute.xlu0 %1072
  %1074 = vrot.lane.b32.xlu0 %v915, 127
  %v1075 = vpop.permute.xlu0 %1074
  %1076 = vrot.lane.b32.xlu0 %v916, 127
  %v1077 = vpop.permute.xlu0 %1076
  %1078 = vrot.lane.b32.xlu0 %v917, 127
  %v1079 = vpop.permute.xlu0 %1078
  %1080 = vrot.lane.b32.xlu0 %v918, 127
  %v1081 = vpop.permute.xlu0 %1080
  %1082 = vrot.lane.b32.xlu0 %v919, 127
  %v1083 = vpop.permute.xlu0 %1082
  %1084 = vrot.lane.b32.xlu0 %v920, 127
  %v1085 = vpop.permute.xlu0 %1084
  %1086 = vrot.lane.b32.xlu0 %v921, 127
  %v1087 = vpop.permute.xlu0 %1086
  %1088 = vrot.lane.b32.xlu0 %v922, 127
  %v1089 = vpop.permute.xlu0 %1088
  %1090 = vrot.lane.b32.xlu0 %v923, 127
  %v1091 = vpop.permute.xlu0 %1090
  %vm1092 = vcmask 1039360
  %v1093 = vsel %vm1092, %v1061, %v1063
  %v1094 = vsel %vm1092, %v1065, %v1067
  %v1095 = vsel %vm1092, %v1069, %v1071
  %v1096 = vsel %vm1092, %v1073, %v1075
  %v1097 = vsel %vm1092, %v1077, %v1079
  %v1098 = vsel %vm1092, %v1081, %v1083
  %v1099 = vsel %vm1092, %v1085, %v1087
  %v1100 = vsel %vm1092, %v1089, %v1091
  %v1117 = vsel %vm1092, %v1063, 0.0
  %v1118 = vsel %vm1092, %v1067, 0.0
  %v1119 = vsel %vm1092, %v1071, 0.0
  %v1120 = vsel %vm1092, %v1075, 0.0
  %v1121 = vsel %vm1092, %v1079, 0.0
  %v1122 = vsel %vm1092, %v1083, 0.0
  %v1123 = vsel %vm1092, %v1087, 0.0
  %v1124 = vsel %vm1092, %v1091, 0.0
  %v1125 = vadd.s32 %v949, 1
  %v1126 = vadd.s32 %v950, 1
  %vm1127 = vcmp.ge.s32.totalorder %v1125, 0
  %vm1128 = vcmp.ge.s32.totalorder %v1126, 0
  %vm1129 = vcmp.lt.s32.totalorder %v1125, 16
  %vm1130 = vcmp.lt.s32.totalorder %v1126, 16
  %vm1131 = vmand %vm1127, %vm1129
  %vm1132 = vmand %vm1128, %vm1130
  %v1133 = vsel %vm1131, 1, 0
  %v1134 = vsel %vm1132, 1, 0
  %vm1135 = vcmp.eq.s32.totalorder %v1133, 1
  %vm1136 = vcmp.eq.s32.totalorder %v1134, 1
  %v1137 = vsel %vm1135, %v1093, 0.0
  %v1138 = vsel %vm1136, %v1117, 0.0
  %v1139 = vsel %vm1135, %v1094, 0.0
  %v1140 = vsel %vm1136, %v1118, 0.0
  %v1141 = vsel %vm1135, %v1095, 0.0
  %v1142 = vsel %vm1136, %v1119, 0.0
  %v1143 = vsel %vm1135, %v1096, 0.0
  %v1144 = vsel %vm1136, %v1120, 0.0
  %v1145 = vsel %vm1135, %v1097, 0.0
  %v1146 = vsel %vm1136, %v1121, 0.0
  %v1147 = vsel %vm1135, %v1098, 0.0
  %v1148 = vsel %vm1136, %v1122, 0.0
  %v1149 = vsel %vm1135, %v1099, 0.0
  %v1150 = vsel %vm1136, %v1123, 0.0
  %v1151 = vsel %vm1135, %v1100, 0.0
  %v1152 = vsel %vm1136, %v1124, 0.0
  %v1153 = vld [vmem:[%s4] sm:$0xff]
  %v1154 = vld [vmem:[%s4 + $0x8] sm:$0xff]
  %v1155 = vld [vmem:[%s4 + $0x10] sm:$0xff]
  %v1156 = vld [vmem:[%s4 + $0x18] sm:$0xff]
  %v1157 = vld [vmem:[%s4 + $0x20] sm:$0xff]
  %v1158 = vld [vmem:[%s4 + $0x28] sm:$0xff]
  %v1159 = vld [vmem:[%s4 + $0x30] sm:$0xff]
  %v1160 = vld [vmem:[%s4 + $0x38] sm:$0xff]
  %v1161 = vld [vmem:[%s4 + $0x40] sm:$0xff]
  %v1162 = vld [vmem:[%s4 + $0x48] sm:$0xff]
  %v1163 = vld [vmem:[%s4 + $0x50] sm:$0xff]
  %v1164 = vld [vmem:[%s4 + $0x58] sm:$0xff]
  %v1165 = vld [vmem:[%s4 + $0x60] sm:$0xff]
  %v1166 = vld [vmem:[%s4 + $0x68] sm:$0xff]
  %v1167 = vld [vmem:[%s4 + $0x70] sm:$0xff]
  %v1168 = vld [vmem:[%s4 + $0x78] sm:$0xff]
  %v1169 = vld [vmem:[%s4 + $0x80] sm:$0xff]
  %v1170 = vld [vmem:[%s4 + $0x88] sm:$0xff]
  %v1171 = vld [vmem:[%s4 + $0x90] sm:$0xff]
  %v1172 = vld [vmem:[%s4 + $0x98] sm:$0xff]
  %v1173 = vld [vmem:[%s4 + $0xa0] sm:$0xff]
  %v1174 = vld [vmem:[%s4 + $0xa8] sm:$0xff]
  %v1175 = vld [vmem:[%s4 + $0xb0] sm:$0xff]
  %v1176 = vld [vmem:[%s4 + $0xb8] sm:$0xff]
  %v1177 = vld [vmem:[%s4 + $0xc0] sm:$0xff]
  %v1178 = vld [vmem:[%s4 + $0xc8] sm:$0xff]
  %v1179 = vld [vmem:[%s4 + $0xd0] sm:$0xff]
  %v1180 = vld [vmem:[%s4 + $0xd8] sm:$0xff]
  %v1181 = vld [vmem:[%s4 + $0xe0] sm:$0xff]
  %v1182 = vld [vmem:[%s4 + $0xe8] sm:$0xff]
  %v1183 = vld [vmem:[%s4 + $0xf0] sm:$0xff]
  %v1184 = vld [vmem:[%s4 + $0xf8] sm:$0xff]
  %v1185 = vld [vmem:[%s4 + $0x100] sm:$0xff]
  %v1186 = vld [vmem:[%s4 + $0x108] sm:$0xff]
  %v1187 = vld [vmem:[%s4 + $0x110] sm:$0xff]
  %v1188 = vld [vmem:[%s4 + $0x118] sm:$0xff]
  %1205 = vrot.lane.b32.xlu0 %v1044, 16
  %v1206 = vpop.permute.xlu0 %1205
  %1207 = vrot.lane.b32.xlu0 %v1045, 16
  %v1208 = vpop.permute.xlu0 %1207
  %1209 = vrot.lane.b32.xlu0 %v1046, 16
  %v1210 = vpop.permute.xlu0 %1209
  %1211 = vrot.lane.b32.xlu0 %v1047, 16
  %v1212 = vpop.permute.xlu0 %1211
  %1213 = vrot.lane.b32.xlu0 %v1048, 16
  %v1214 = vpop.permute.xlu0 %1213
  %1215 = vrot.lane.b32.xlu0 %v1049, 16
  %v1216 = vpop.permute.xlu0 %1215
  %1217 = vrot.lane.b32.xlu0 %v1050, 16
  %v1218 = vpop.permute.xlu0 %1217
  %1219 = vrot.lane.b32.xlu0 %v1051, 16
  %v1220 = vpop.permute.xlu0 %1219
  %1221 = vrot.lane.b32.xlu0 %v1052, 16
  %v1222 = vpop.permute.xlu0 %1221
  %1223 = vrot.lane.b32.xlu0 %v1053, 16
  %v1224 = vpop.permute.xlu0 %1223
  %1225 = vrot.lane.b32.xlu0 %v1054, 16
  %v1226 = vpop.permute.xlu0 %1225
  %1227 = vrot.lane.b32.xlu0 %v1055, 16
  %v1228 = vpop.permute.xlu0 %1227
  %1229 = vrot.lane.b32.xlu0 %v1056, 16
  %v1230 = vpop.permute.xlu0 %1229
  %1231 = vrot.lane.b32.xlu0 %v1057, 16
  %v1232 = vpop.permute.xlu0 %1231
  %1233 = vrot.lane.b32.xlu0 %v1058, 16
  %v1234 = vpop.permute.xlu0 %1233
  %1235 = vrot.lane.b32.xlu0 %v1059, 16
  %v1236 = vpop.permute.xlu0 %1235
  %vm1237 = vcmask 130048
  %v1238 = vsel %vm1237, %v1206, %v1208
  %v1239 = vsel %vm1237, %v1210, %v1212
  %v1240 = vsel %vm1237, %v1214, %v1216
  %v1241 = vsel %vm1237, %v1218, %v1220
  %v1242 = vsel %vm1237, %v1222, %v1224
  %v1243 = vsel %vm1237, %v1226, %v1228
  %v1244 = vsel %vm1237, %v1230, %v1232
  %v1245 = vsel %vm1237, %v1234, %v1236
  %v1262 = vsel %vm1237, 0.0, %v1206
  %v1263 = vsel %vm1237, 0.0, %v1210
  %v1264 = vsel %vm1237, 0.0, %v1214
  %v1265 = vsel %vm1237, 0.0, %v1218
  %v1266 = vsel %vm1237, 0.0, %v1222
  %v1267 = vsel %vm1237, 0.0, %v1226
  %v1268 = vsel %vm1237, 0.0, %v1230
  %v1269 = vsel %vm1237, 0.0, %v1234
  %1271 = vset.pattern.permute.xlu0 0
  %1272 = vperm.xlu0 %1271, %v1153
  %v1273 = vpop.permute.xlu0 %1272
  %1276 = vset.pattern.permute.xlu0 0
  %1277 = vperm.xlu0 %1276, %v1154
  %v1278 = vpop.permute.xlu0 %1277
  %1281 = vset.pattern.permute.xlu0 0
  %1282 = vperm.xlu0 %1281, %v1155
  %v1283 = vpop.permute.xlu0 %1282
  %1286 = vset.pattern.permute.xlu0 0
  %1287 = vperm.xlu0 %1286, %v1156
  %v1288 = vpop.permute.xlu0 %1287
  %v1290 = vmul.f32 %v1262, %v1273
  %v1291 = vmul.f32 %v1238, %v1273
  %v1292 = vmul.f32 %v1263, %v1278
  %v1293 = vmul.f32 %v1239, %v1278
  %v1294 = vmul.f32 %v1264, %v1283
  %v1295 = vmul.f32 %v1240, %v1283
  %v1296 = vmul.f32 %v1265, %v1288
  %v1297 = vmul.f32 %v1241, %v1288
  %v1298 = vmul.f32 %v1266, %v1273
  %v1299 = vmul.f32 %v1242, %v1273
  %v1300 = vmul.f32 %v1267, %v1278
  %v1301 = vmul.f32 %v1243, %v1278
  %v1302 = vmul.f32 %v1268, %v1283
  %v1303 = vmul.f32 %v1244, %v1283
  %v1304 = vmul.f32 %v1269, %v1288
  %v1305 = vmul.f32 %v1245, %v1288
  %v1306 = vadd.f32 %v1290, 0.0
  %v1307 = vadd.f32 %v1291, 0.0
  %v1308 = vadd.f32 %v1292, 0.0
  %v1309 = vadd.f32 %v1293, 0.0
  %v1310 = vadd.f32 %v1294, 0.0
  %v1311 = vadd.f32 %v1295, 0.0
  %v1312 = vadd.f32 %v1296, 0.0
  %v1313 = vadd.f32 %v1297, 0.0
  %v1314 = vadd.f32 %v1298, 0.0
  %v1315 = vadd.f32 %v1299, 0.0
  %v1316 = vadd.f32 %v1300, 0.0
  %v1317 = vadd.f32 %v1301, 0.0
  %v1318 = vadd.f32 %v1302, 0.0
  %v1319 = vadd.f32 %v1303, 0.0
  %v1320 = vadd.f32 %v1304, 0.0
  %v1321 = vadd.f32 %v1305, 0.0
  %1322 = vrot.lane.b32.xlu0 %v908, 16
  %v1323 = vpop.permute.xlu0 %1322
  %1324 = vrot.lane.b32.xlu0 %v909, 16
  %v1325 = vpop.permute.xlu0 %1324
  %1326 = vrot.lane.b32.xlu0 %v910, 16
  %v1327 = vpop.permute.xlu0 %1326
  %1328 = vrot.lane.b32.xlu0 %v911, 16
  %v1329 = vpop.permute.xlu0 %1328
  %1330 = vrot.lane.b32.xlu0 %v912, 16
  %v1331 = vpop.permute.xlu0 %1330
  %1332 = vrot.lane.b32.xlu0 %v913, 16
  %v1333 = vpop.permute.xlu0 %1332
  %1334 = vrot.lane.b32.xlu0 %v914, 16
  %v1335 = vpop.permute.xlu0 %1334
  %1336 = vrot.lane.b32.xlu0 %v915, 16
  %v1337 = vpop.permute.xlu0 %1336
  %1338 = vrot.lane.b32.xlu0 %v916, 16
  %v1339 = vpop.permute.xlu0 %1338
  %1340 = vrot.lane.b32.xlu0 %v917, 16
  %v1341 = vpop.permute.xlu0 %1340
  %1342 = vrot.lane.b32.xlu0 %v918, 16
  %v1343 = vpop.permute.xlu0 %1342
  %1344 = vrot.lane.b32.xlu0 %v919, 16
  %v1345 = vpop.permute.xlu0 %1344
  %1346 = vrot.lane.b32.xlu0 %v920, 16
  %v1347 = vpop.permute.xlu0 %1346
  %1348 = vrot.lane.b32.xlu0 %v921, 16
  %v1349 = vpop.permute.xlu0 %1348
  %1350 = vrot.lane.b32.xlu0 %v922, 16
  %v1351 = vpop.permute.xlu0 %1350
  %1352 = vrot.lane.b32.xlu0 %v923, 16
  %v1353 = vpop.permute.xlu0 %1352
  %v1354 = vsel %vm1237, %v1323, %v1325
  %v1355 = vsel %vm1237, %v1327, %v1329
  %v1356 = vsel %vm1237, %v1331, %v1333
  %v1357 = vsel %vm1237, %v1335, %v1337
  %v1358 = vsel %vm1237, %v1339, %v1341
  %v1359 = vsel %vm1237, %v1343, %v1345
  %v1360 = vsel %vm1237, %v1347, %v1349
  %v1361 = vsel %vm1237, %v1351, %v1353
  %v1378 = vsel %vm1237, 0.0, %v1323
  %v1379 = vsel %vm1237, 0.0, %v1327
  %v1380 = vsel %vm1237, 0.0, %v1331
  %v1381 = vsel %vm1237, 0.0, %v1335
  %v1382 = vsel %vm1237, 0.0, %v1339
  %v1383 = vsel %vm1237, 0.0, %v1343
  %v1384 = vsel %vm1237, 0.0, %v1347
  %v1385 = vsel %vm1237, 0.0, %v1351
  %1387 = vset.pattern.permute.xlu0 0
  %1388 = vperm.xlu0 %1387, %v1157
  %v1389 = vpop.permute.xlu0 %1388
  %1392 = vset.pattern.permute.xlu0 0
  %1393 = vperm.xlu0 %1392, %v1158
  %v1394 = vpop.permute.xlu0 %1393
  %1397 = vset.pattern.permute.xlu0 0
  %1398 = vperm.xlu0 %1397, %v1159
  %v1399 = vpop.permute.xlu0 %1398
  %1402 = vset.pattern.permute.xlu0 0
  %1403 = vperm.xlu0 %1402, %v1160
  %v1404 = vpop.permute.xlu0 %1403
  %v1406 = vmul.f32 %v1378, %v1389
  %v1407 = vmul.f32 %v1354, %v1389
  %v1408 = vmul.f32 %v1379, %v1394
  %v1409 = vmul.f32 %v1355, %v1394
  %v1410 = vmul.f32 %v1380, %v1399
  %v1411 = vmul.f32 %v1356, %v1399
  %v1412 = vmul.f32 %v1381, %v1404
  %v1413 = vmul.f32 %v1357, %v1404
  %v1414 = vmul.f32 %v1382, %v1389
  %v1415 = vmul.f32 %v1358, %v1389
  %v1416 = vmul.f32 %v1383, %v1394
  %v1417 = vmul.f32 %v1359, %v1394
  %v1418 = vmul.f32 %v1384, %v1399
  %v1419 = vmul.f32 %v1360, %v1399
  %v1420 = vmul.f32 %v1385, %v1404
  %v1421 = vmul.f32 %v1361, %v1404
  %v1422 = vadd.f32 %v1306, %v1406
  %v1423 = vadd.f32 %v1307, %v1407
  %v1424 = vadd.f32 %v1308, %v1408
  %v1425 = vadd.f32 %v1309, %v1409
  %v1426 = vadd.f32 %v1310, %v1410
  %v1427 = vadd.f32 %v1311, %v1411
  %v1428 = vadd.f32 %v1312, %v1412
  %v1429 = vadd.f32 %v1313, %v1413
  %v1430 = vadd.f32 %v1314, %v1414
  %v1431 = vadd.f32 %v1315, %v1415
  %v1432 = vadd.f32 %v1316, %v1416
  %v1433 = vadd.f32 %v1317, %v1417
  %v1434 = vadd.f32 %v1318, %v1418
  %v1435 = vadd.f32 %v1319, %v1419
  %v1436 = vadd.f32 %v1320, %v1420
  %v1437 = vadd.f32 %v1321, %v1421
  %1454 = vrot.lane.b32.xlu0 %v1137, 16
  %v1455 = vpop.permute.xlu0 %1454
  %1456 = vrot.lane.b32.xlu0 %v1138, 16
  %v1457 = vpop.permute.xlu0 %1456
  %1458 = vrot.lane.b32.xlu0 %v1139, 16
  %v1459 = vpop.permute.xlu0 %1458
  %1460 = vrot.lane.b32.xlu0 %v1140, 16
  %v1461 = vpop.permute.xlu0 %1460
  %1462 = vrot.lane.b32.xlu0 %v1141, 16
  %v1463 = vpop.permute.xlu0 %1462
  %1464 = vrot.lane.b32.xlu0 %v1142, 16
  %v1465 = vpop.permute.xlu0 %1464
  %1466 = vrot.lane.b32.xlu0 %v1143, 16
  %v1467 = vpop.permute.xlu0 %1466
  %1468 = vrot.lane.b32.xlu0 %v1144, 16
  %v1469 = vpop.permute.xlu0 %1468
  %1470 = vrot.lane.b32.xlu0 %v1145, 16
  %v1471 = vpop.permute.xlu0 %1470
  %1472 = vrot.lane.b32.xlu0 %v1146, 16
  %v1473 = vpop.permute.xlu0 %1472
  %1474 = vrot.lane.b32.xlu0 %v1147, 16
  %v1475 = vpop.permute.xlu0 %1474
  %1476 = vrot.lane.b32.xlu0 %v1148, 16
  %v1477 = vpop.permute.xlu0 %1476
  %1478 = vrot.lane.b32.xlu0 %v1149, 16
  %v1479 = vpop.permute.xlu0 %1478
  %1480 = vrot.lane.b32.xlu0 %v1150, 16
  %v1481 = vpop.permute.xlu0 %1480
  %1482 = vrot.lane.b32.xlu0 %v1151, 16
  %v1483 = vpop.permute.xlu0 %1482
  %1484 = vrot.lane.b32.xlu0 %v1152, 16
  %v1485 = vpop.permute.xlu0 %1484
  %v1486 = vsel %vm1237, %v1455, %v1457
  %v1487 = vsel %vm1237, %v1459, %v1461
  %v1488 = vsel %vm1237, %v1463, %v1465
  %v1489 = vsel %vm1237, %v1467, %v1469
  %v1490 = vsel %vm1237, %v1471, %v1473
  %v1491 = vsel %vm1237, %v1475, %v1477
  %v1492 = vsel %vm1237, %v1479, %v1481
  %v1493 = vsel %vm1237, %v1483, %v1485
  %v1510 = vsel %vm1237, 0.0, %v1455
  %v1511 = vsel %vm1237, 0.0, %v1459
  %v1512 = vsel %vm1237, 0.0, %v1463
  %v1513 = vsel %vm1237, 0.0, %v1467
  %v1514 = vsel %vm1237, 0.0, %v1471
  %v1515 = vsel %vm1237, 0.0, %v1475
  %v1516 = vsel %vm1237, 0.0, %v1479
  %v1517 = vsel %vm1237, 0.0, %v1483
  %1519 = vset.pattern.permute.xlu0 0
  %1520 = vperm.xlu0 %1519, %v1161
  %v1521 = vpop.permute.xlu0 %1520
  %1524 = vset.pattern.permute.xlu0 0
  %1525 = vperm.xlu0 %1524, %v1162
  %v1526 = vpop.permute.xlu0 %1525
  %1529 = vset.pattern.permute.xlu0 0
  %1530 = vperm.xlu0 %1529, %v1163
  %v1531 = vpop.permute.xlu0 %1530
  %1534 = vset.pattern.permute.xlu0 0
  %1535 = vperm.xlu0 %1534, %v1164
  %v1536 = vpop.permute.xlu0 %1535
  %v1538 = vmul.f32 %v1510, %v1521
  %v1539 = vmul.f32 %v1486, %v1521
  %v1540 = vmul.f32 %v1511, %v1526
  %v1541 = vmul.f32 %v1487, %v1526
  %v1542 = vmul.f32 %v1512, %v1531
  %v1543 = vmul.f32 %v1488, %v1531
  %v1544 = vmul.f32 %v1513, %v1536
  %v1545 = vmul.f32 %v1489, %v1536
  %v1546 = vmul.f32 %v1514, %v1521
  %v1547 = vmul.f32 %v1490, %v1521
  %v1548 = vmul.f32 %v1515, %v1526
  %v1549 = vmul.f32 %v1491, %v1526
  %v1550 = vmul.f32 %v1516, %v1531
  %v1551 = vmul.f32 %v1492, %v1531
  %v1552 = vmul.f32 %v1517, %v1536
  %v1553 = vmul.f32 %v1493, %v1536
  %v1554 = vadd.f32 %v1422, %v1538
  %v1555 = vadd.f32 %v1423, %v1539
  %v1556 = vadd.f32 %v1424, %v1540
  %v1557 = vadd.f32 %v1425, %v1541
  %v1558 = vadd.f32 %v1426, %v1542
  %v1559 = vadd.f32 %v1427, %v1543
  %v1560 = vadd.f32 %v1428, %v1544
  %v1561 = vadd.f32 %v1429, %v1545
  %v1562 = vadd.f32 %v1430, %v1546
  %v1563 = vadd.f32 %v1431, %v1547
  %v1564 = vadd.f32 %v1432, %v1548
  %v1565 = vadd.f32 %v1433, %v1549
  %v1566 = vadd.f32 %v1434, %v1550
  %v1567 = vadd.f32 %v1435, %v1551
  %v1568 = vadd.f32 %v1436, %v1552
  %v1569 = vadd.f32 %v1437, %v1553
  %1571 = vset.pattern.permute.xlu0 0
  %1572 = vperm.xlu0 %1571, %v1165
  %v1573 = vpop.permute.xlu0 %1572
  %1576 = vset.pattern.permute.xlu0 0
  %1577 = vperm.xlu0 %1576, %v1166
  %v1578 = vpop.permute.xlu0 %1577
  %1581 = vset.pattern.permute.xlu0 0
  %1582 = vperm.xlu0 %1581, %v1167
  %v1583 = vpop.permute.xlu0 %1582
  %1586 = vset.pattern.permute.xlu0 0
  %1587 = vperm.xlu0 %1586, %v1168
  %v1588 = vpop.permute.xlu0 %1587
  %v1590 = vmul.f32 %v1044, %v1573
  %v1591 = vmul.f32 %v1045, %v1573
  %v1592 = vmul.f32 %v1046, %v1578
  %v1593 = vmul.f32 %v1047, %v1578
  %v1594 = vmul.f32 %v1048, %v1583
  %v1595 = vmul.f32 %v1049, %v1583
  %v1596 = vmul.f32 %v1050, %v1588
  %v1597 = vmul.f32 %v1051, %v1588
  %v1598 = vmul.f32 %v1052, %v1573
  %v1599 = vmul.f32 %v1053, %v1573
  %v1600 = vmul.f32 %v1054, %v1578
  %v1601 = vmul.f32 %v1055, %v1578
  %v1602 = vmul.f32 %v1056, %v1583
  %v1603 = vmul.f32 %v1057, %v1583
  %v1604 = vmul.f32 %v1058, %v1588
  %v1605 = vmul.f32 %v1059, %v1588
  %v1606 = vadd.f32 %v1554, %v1590
  %v1607 = vadd.f32 %v1555, %v1591
  %v1608 = vadd.f32 %v1556, %v1592
  %v1609 = vadd.f32 %v1557, %v1593
  %v1610 = vadd.f32 %v1558, %v1594
  %v1611 = vadd.f32 %v1559, %v1595
  %v1612 = vadd.f32 %v1560, %v1596
  %v1613 = vadd.f32 %v1561, %v1597
  %v1614 = vadd.f32 %v1562, %v1598
  %v1615 = vadd.f32 %v1563, %v1599
  %v1616 = vadd.f32 %v1564, %v1600
  %v1617 = vadd.f32 %v1565, %v1601
  %v1618 = vadd.f32 %v1566, %v1602
  %v1619 = vadd.f32 %v1567, %v1603
  %v1620 = vadd.f32 %v1568, %v1604
  %v1621 = vadd.f32 %v1569, %v1605
  %1623 = vset.pattern.permute.xlu0 0
  %1624 = vperm.xlu0 %1623, %v1169
  %v1625 = vpop.permute.xlu0 %1624
  %1628 = vset.pattern.permute.xlu0 0
  %1629 = vperm.xlu0 %1628, %v1170
  %v1630 = vpop.permute.xlu0 %1629
  %1633 = vset.pattern.permute.xlu0 0
  %1634 = vperm.xlu0 %1633, %v1171
  %v1635 = vpop.permute.xlu0 %1634
  %1638 = vset.pattern.permute.xlu0 0
  %1639 = vperm.xlu0 %1638, %v1172
  %v1640 = vpop.permute.xlu0 %1639
  %v1642 = vmul.f32 %v908, %v1625
  %v1643 = vmul.f32 %v909, %v1625
  %v1644 = vmul.f32 %v910, %v1630
  %v1645 = vmul.f32 %v911, %v1630
  %v1646 = vmul.f32 %v912, %v1635
  %v1647 = vmul.f32 %v913, %v1635
  %v1648 = vmul.f32 %v914, %v1640
  %v1649 = vmul.f32 %v915, %v1640
  %v1650 = vmul.f32 %v916, %v1625
  %v1651 = vmul.f32 %v917, %v1625
  %v1652 = vmul.f32 %v918, %v1630
  %v1653 = vmul.f32 %v919, %v1630
  %v1654 = vmul.f32 %v920, %v1635
  %v1655 = vmul.f32 %v921, %v1635
  %v1656 = vmul.f32 %v922, %v1640
  %v1657 = vmul.f32 %v923, %v1640
  %v1658 = vadd.f32 %v1606, %v1642
  %v1659 = vadd.f32 %v1607, %v1643
  %v1660 = vadd.f32 %v1608, %v1644
  %v1661 = vadd.f32 %v1609, %v1645
  %v1662 = vadd.f32 %v1610, %v1646
  %v1663 = vadd.f32 %v1611, %v1647
  %v1664 = vadd.f32 %v1612, %v1648
  %v1665 = vadd.f32 %v1613, %v1649
  %v1666 = vadd.f32 %v1614, %v1650
  %v1667 = vadd.f32 %v1615, %v1651
  %v1668 = vadd.f32 %v1616, %v1652
  %v1669 = vadd.f32 %v1617, %v1653
  %v1670 = vadd.f32 %v1618, %v1654
  %v1671 = vadd.f32 %v1619, %v1655
  %v1672 = vadd.f32 %v1620, %v1656
  %v1673 = vadd.f32 %v1621, %v1657
  %1675 = vset.pattern.permute.xlu0 0
  %1676 = vperm.xlu0 %1675, %v1173
  %v1677 = vpop.permute.xlu0 %1676
  %1680 = vset.pattern.permute.xlu0 0
  %1681 = vperm.xlu0 %1680, %v1174
  %v1682 = vpop.permute.xlu0 %1681
  %1685 = vset.pattern.permute.xlu0 0
  %1686 = vperm.xlu0 %1685, %v1175
  %v1687 = vpop.permute.xlu0 %1686
  %1690 = vset.pattern.permute.xlu0 0
  %1691 = vperm.xlu0 %1690, %v1176
  %v1692 = vpop.permute.xlu0 %1691
  %v1694 = vmul.f32 %v1137, %v1677
  %v1695 = vmul.f32 %v1138, %v1677
  %v1696 = vmul.f32 %v1139, %v1682
  %v1697 = vmul.f32 %v1140, %v1682
  %v1698 = vmul.f32 %v1141, %v1687
  %v1699 = vmul.f32 %v1142, %v1687
  %v1700 = vmul.f32 %v1143, %v1692
  %v1701 = vmul.f32 %v1144, %v1692
  %v1702 = vmul.f32 %v1145, %v1677
  %v1703 = vmul.f32 %v1146, %v1677
  %v1704 = vmul.f32 %v1147, %v1682
  %v1705 = vmul.f32 %v1148, %v1682
  %v1706 = vmul.f32 %v1149, %v1687
  %v1707 = vmul.f32 %v1150, %v1687
  %v1708 = vmul.f32 %v1151, %v1692
  %v1709 = vmul.f32 %v1152, %v1692
  %v1710 = vadd.f32 %v1658, %v1694
  %v1711 = vadd.f32 %v1659, %v1695
  %v1712 = vadd.f32 %v1660, %v1696
  %v1713 = vadd.f32 %v1661, %v1697
  %v1714 = vadd.f32 %v1662, %v1698
  %v1715 = vadd.f32 %v1663, %v1699
  %v1716 = vadd.f32 %v1664, %v1700
  %v1717 = vadd.f32 %v1665, %v1701
  %v1718 = vadd.f32 %v1666, %v1702
  %v1719 = vadd.f32 %v1667, %v1703
  %v1720 = vadd.f32 %v1668, %v1704
  %v1721 = vadd.f32 %v1669, %v1705
  %v1722 = vadd.f32 %v1670, %v1706
  %v1723 = vadd.f32 %v1671, %v1707
  %v1724 = vadd.f32 %v1672, %v1708
  %v1725 = vadd.f32 %v1673, %v1709
  %1726 = vrot.lane.b32.xlu0 %v1044, 112
  %v1727 = vpop.permute.xlu0 %1726
  %1728 = vrot.lane.b32.xlu0 %v1045, 112
  %v1729 = vpop.permute.xlu0 %1728
  %1730 = vrot.lane.b32.xlu0 %v1046, 112
  %v1731 = vpop.permute.xlu0 %1730
  %1732 = vrot.lane.b32.xlu0 %v1047, 112
  %v1733 = vpop.permute.xlu0 %1732
  %1734 = vrot.lane.b32.xlu0 %v1048, 112
  %v1735 = vpop.permute.xlu0 %1734
  %1736 = vrot.lane.b32.xlu0 %v1049, 112
  %v1737 = vpop.permute.xlu0 %1736
  %1738 = vrot.lane.b32.xlu0 %v1050, 112
  %v1739 = vpop.permute.xlu0 %1738
  %1740 = vrot.lane.b32.xlu0 %v1051, 112
  %v1741 = vpop.permute.xlu0 %1740
  %1742 = vrot.lane.b32.xlu0 %v1052, 112
  %v1743 = vpop.permute.xlu0 %1742
  %1744 = vrot.lane.b32.xlu0 %v1053, 112
  %v1745 = vpop.permute.xlu0 %1744
  %1746 = vrot.lane.b32.xlu0 %v1054, 112
  %v1747 = vpop.permute.xlu0 %1746
  %1748 = vrot.lane.b32.xlu0 %v1055, 112
  %v1749 = vpop.permute.xlu0 %1748
  %1750 = vrot.lane.b32.xlu0 %v1056, 112
  %v1751 = vpop.permute.xlu0 %1750
  %1752 = vrot.lane.b32.xlu0 %v1057, 112
  %v1753 = vpop.permute.xlu0 %1752
  %1754 = vrot.lane.b32.xlu0 %v1058, 112
  %v1755 = vpop.permute.xlu0 %1754
  %1756 = vrot.lane.b32.xlu0 %v1059, 112
  %v1757 = vpop.permute.xlu0 %1756
  %vm1758 = vcmask 916480
  %v1759 = vsel %vm1758, %v1727, %v1729
  %v1760 = vsel %vm1758, %v1731, %v1733
  %v1761 = vsel %vm1758, %v1735, %v1737
  %v1762 = vsel %vm1758, %v1739, %v1741
  %v1763 = vsel %vm1758, %v1743, %v1745
  %v1764 = vsel %vm1758, %v1747, %v1749
  %v1765 = vsel %vm1758, %v1751, %v1753
  %v1766 = vsel %vm1758, %v1755, %v1757
  %v1783 = vsel %vm1758, %v1729, 0.0
  %v1784 = vsel %vm1758, %v1733, 0.0
  %v1785 = vsel %vm1758, %v1737, 0.0
  %v1786 = vsel %vm1758, %v1741, 0.0
  %v1787 = vsel %vm1758, %v1745, 0.0
  %v1788 = vsel %vm1758, %v1749, 0.0
  %v1789 = vsel %vm1758, %v1753, 0.0
  %v1790 = vsel %vm1758, %v1757, 0.0
  %1792 = vset.pattern.permute.xlu0 0
  %1793 = vperm.xlu0 %1792, %v1177
  %v1794 = vpop.permute.xlu0 %1793
  %1797 = vset.pattern.permute.xlu0 0
  %1798 = vperm.xlu0 %1797, %v1178
  %v1799 = vpop.permute.xlu0 %1798
  %1802 = vset.pattern.permute.xlu0 0
  %1803 = vperm.xlu0 %1802, %v1179
  %v1804 = vpop.permute.xlu0 %1803
  %1807 = vset.pattern.permute.xlu0 0
  %1808 = vperm.xlu0 %1807, %v1180
  %v1809 = vpop.permute.xlu0 %1808
  %v1811 = vmul.f32 %v1759, %v1794
  %v1812 = vmul.f32 %v1783, %v1794
  %v1813 = vmul.f32 %v1760, %v1799
  %v1814 = vmul.f32 %v1784, %v1799
  %v1815 = vmul.f32 %v1761, %v1804
  %v1816 = vmul.f32 %v1785, %v1804
  %v1817 = vmul.f32 %v1762, %v1809
  %v1818 = vmul.f32 %v1786, %v1809
  %v1819 = vmul.f32 %v1763, %v1794
  %v1820 = vmul.f32 %v1787, %v1794
  %v1821 = vmul.f32 %v1764, %v1799
  %v1822 = vmul.f32 %v1788, %v1799
  %v1823 = vmul.f32 %v1765, %v1804
  %v1824 = vmul.f32 %v1789, %v1804
  %v1825 = vmul.f32 %v1766, %v1809
  %v1826 = vmul.f32 %v1790, %v1809
  %v1827 = vadd.f32 %v1710, %v1811
  %v1828 = vadd.f32 %v1711, %v1812
  %v1829 = vadd.f32 %v1712, %v1813
  %v1830 = vadd.f32 %v1713, %v1814
  %v1831 = vadd.f32 %v1714, %v1815
  %v1832 = vadd.f32 %v1715, %v1816
  %v1833 = vadd.f32 %v1716, %v1817
  %v1834 = vadd.f32 %v1717, %v1818
  %v1835 = vadd.f32 %v1718, %v1819
  %v1836 = vadd.f32 %v1719, %v1820
  %v1837 = vadd.f32 %v1720, %v1821
  %v1838 = vadd.f32 %v1721, %v1822
  %v1839 = vadd.f32 %v1722, %v1823
  %v1840 = vadd.f32 %v1723, %v1824
  %v1841 = vadd.f32 %v1724, %v1825
  %v1842 = vadd.f32 %v1725, %v1826
  %1843 = vrot.lane.b32.xlu0 %v908, 112
  %v1844 = vpop.permute.xlu0 %1843
  %1845 = vrot.lane.b32.xlu0 %v909, 112
  %v1846 = vpop.permute.xlu0 %1845
  %1847 = vrot.lane.b32.xlu0 %v910, 112
  %v1848 = vpop.permute.xlu0 %1847
  %1849 = vrot.lane.b32.xlu0 %v911, 112
  %v1850 = vpop.permute.xlu0 %1849
  %1851 = vrot.lane.b32.xlu0 %v912, 112
  %v1852 = vpop.permute.xlu0 %1851
  %1853 = vrot.lane.b32.xlu0 %v913, 112
  %v1854 = vpop.permute.xlu0 %1853
  %1855 = vrot.lane.b32.xlu0 %v914, 112
  %v1856 = vpop.permute.xlu0 %1855
  %1857 = vrot.lane.b32.xlu0 %v915, 112
  %v1858 = vpop.permute.xlu0 %1857
  %1859 = vrot.lane.b32.xlu0 %v916, 112
  %v1860 = vpop.permute.xlu0 %1859
  %1861 = vrot.lane.b32.xlu0 %v917, 112
  %v1862 = vpop.permute.xlu0 %1861
  %1863 = vrot.lane.b32.xlu0 %v918, 112
  %v1864 = vpop.permute.xlu0 %1863
  %1865 = vrot.lane.b32.xlu0 %v919, 112
  %v1866 = vpop.permute.xlu0 %1865
  %1867 = vrot.lane.b32.xlu0 %v920, 112
  %v1868 = vpop.permute.xlu0 %1867
  %1869 = vrot.lane.b32.xlu0 %v921, 112
  %v1870 = vpop.permute.xlu0 %1869
  %1871 = vrot.lane.b32.xlu0 %v922, 112
  %v1872 = vpop.permute.xlu0 %1871
  %1873 = vrot.lane.b32.xlu0 %v923, 112
  %v1874 = vpop.permute.xlu0 %1873
  %v1875 = vsel %vm1758, %v1844, %v1846
  %v1876 = vsel %vm1758, %v1848, %v1850
  %v1877 = vsel %vm1758, %v1852, %v1854
  %v1878 = vsel %vm1758, %v1856, %v1858
  %v1879 = vsel %vm1758, %v1860, %v1862
  %v1880 = vsel %vm1758, %v1864, %v1866
  %v1881 = vsel %vm1758, %v1868, %v1870
  %v1882 = vsel %vm1758, %v1872, %v1874
  %v1899 = vsel %vm1758, %v1846, 0.0
  %v1900 = vsel %vm1758, %v1850, 0.0
  %v1901 = vsel %vm1758, %v1854, 0.0
  %v1902 = vsel %vm1758, %v1858, 0.0
  %v1903 = vsel %vm1758, %v1862, 0.0
  %v1904 = vsel %vm1758, %v1866, 0.0
  %v1905 = vsel %vm1758, %v1870, 0.0
  %v1906 = vsel %vm1758, %v1874, 0.0
  %1908 = vset.pattern.permute.xlu0 0
  %1909 = vperm.xlu0 %1908, %v1181
  %v1910 = vpop.permute.xlu0 %1909
  %1913 = vset.pattern.permute.xlu0 0
  %1914 = vperm.xlu0 %1913, %v1182
  %v1915 = vpop.permute.xlu0 %1914
  %1918 = vset.pattern.permute.xlu0 0
  %1919 = vperm.xlu0 %1918, %v1183
  %v1920 = vpop.permute.xlu0 %1919
  %1923 = vset.pattern.permute.xlu0 0
  %1924 = vperm.xlu0 %1923, %v1184
  %v1925 = vpop.permute.xlu0 %1924
  %v1927 = vmul.f32 %v1875, %v1910
  %v1928 = vmul.f32 %v1899, %v1910
  %v1929 = vmul.f32 %v1876, %v1915
  %v1930 = vmul.f32 %v1900, %v1915
  %v1931 = vmul.f32 %v1877, %v1920
  %v1932 = vmul.f32 %v1901, %v1920
  %v1933 = vmul.f32 %v1878, %v1925
  %v1934 = vmul.f32 %v1902, %v1925
  %v1935 = vmul.f32 %v1879, %v1910
  %v1936 = vmul.f32 %v1903, %v1910
  %v1937 = vmul.f32 %v1880, %v1915
  %v1938 = vmul.f32 %v1904, %v1915
  %v1939 = vmul.f32 %v1881, %v1920
  %v1940 = vmul.f32 %v1905, %v1920
  %v1941 = vmul.f32 %v1882, %v1925
  %v1942 = vmul.f32 %v1906, %v1925
  %v1943 = vadd.f32 %v1827, %v1927
  %v1944 = vadd.f32 %v1828, %v1928
  %v1945 = vadd.f32 %v1829, %v1929
  %v1946 = vadd.f32 %v1830, %v1930
  %v1947 = vadd.f32 %v1831, %v1931
  %v1948 = vadd.f32 %v1832, %v1932
  %v1949 = vadd.f32 %v1833, %v1933
  %v1950 = vadd.f32 %v1834, %v1934
  %v1951 = vadd.f32 %v1835, %v1935
  %v1952 = vadd.f32 %v1836, %v1936
  %v1953 = vadd.f32 %v1837, %v1937
  %v1954 = vadd.f32 %v1838, %v1938
  %v1955 = vadd.f32 %v1839, %v1939
  %v1956 = vadd.f32 %v1840, %v1940
  %v1957 = vadd.f32 %v1841, %v1941
  %v1958 = vadd.f32 %v1842, %v1942
  %1959 = vrot.lane.b32.xlu0 %v1137, 112
  %v1960 = vpop.permute.xlu0 %1959
  %1961 = vrot.lane.b32.xlu0 %v1138, 112
  %v1962 = vpop.permute.xlu0 %1961
  %1963 = vrot.lane.b32.xlu0 %v1139, 112
  %v1964 = vpop.permute.xlu0 %1963
  %1965 = vrot.lane.b32.xlu0 %v1140, 112
  %v1966 = vpop.permute.xlu0 %1965
  %1967 = vrot.lane.b32.xlu0 %v1141, 112
  %v1968 = vpop.permute.xlu0 %1967
  %1969 = vrot.lane.b32.xlu0 %v1142, 112
  %v1970 = vpop.permute.xlu0 %1969
  %1971 = vrot.lane.b32.xlu0 %v1143, 112
  %v1972 = vpop.permute.xlu0 %1971
  %1973 = vrot.lane.b32.xlu0 %v1144, 112
  %v1974 = vpop.permute.xlu0 %1973
  %1975 = vrot.lane.b32.xlu0 %v1145, 112
  %v1976 = vpop.permute.xlu0 %1975
  %1977 = vrot.lane.b32.xlu0 %v1146, 112
  %v1978 = vpop.permute.xlu0 %1977
  %1979 = vrot.lane.b32.xlu0 %v1147, 112
  %v1980 = vpop.permute.xlu0 %1979
  %1981 = vrot.lane.b32.xlu0 %v1148, 112
  %v1982 = vpop.permute.xlu0 %1981
  %1983 = vrot.lane.b32.xlu0 %v1149, 112
  %v1984 = vpop.permute.xlu0 %1983
  %1985 = vrot.lane.b32.xlu0 %v1150, 112
  %v1986 = vpop.permute.xlu0 %1985
  %1987 = vrot.lane.b32.xlu0 %v1151, 112
  %v1988 = vpop.permute.xlu0 %1987
  %1989 = vrot.lane.b32.xlu0 %v1152, 112
  %v1990 = vpop.permute.xlu0 %1989
  %v1991 = vsel %vm1758, %v1960, %v1962
  %v1992 = vsel %vm1758, %v1964, %v1966
  %v1993 = vsel %vm1758, %v1968, %v1970
  %v1994 = vsel %vm1758, %v1972, %v1974
  %v1995 = vsel %vm1758, %v1976, %v1978
  %v1996 = vsel %vm1758, %v1980, %v1982
  %v1997 = vsel %vm1758, %v1984, %v1986
  %v1998 = vsel %vm1758, %v1988, %v1990
  %v2015 = vsel %vm1758, %v1962, 0.0
  %v2016 = vsel %vm1758, %v1966, 0.0
  %v2017 = vsel %vm1758, %v1970, 0.0
  %v2018 = vsel %vm1758, %v1974, 0.0
  %v2019 = vsel %vm1758, %v1978, 0.0
  %v2020 = vsel %vm1758, %v1982, 0.0
  %v2021 = vsel %vm1758, %v1986, 0.0
  %v2022 = vsel %vm1758, %v1990, 0.0
  %2024 = vset.pattern.permute.xlu0 0
  %2025 = vperm.xlu0 %2024, %v1185
  %v2026 = vpop.permute.xlu0 %2025
  %2029 = vset.pattern.permute.xlu0 0
  %2030 = vperm.xlu0 %2029, %v1186
  %v2031 = vpop.permute.xlu0 %2030
  %2034 = vset.pattern.permute.xlu0 0
  %2035 = vperm.xlu0 %2034, %v1187
  %v2036 = vpop.permute.xlu0 %2035
  %2039 = vset.pattern.permute.xlu0 0
  %2040 = vperm.xlu0 %2039, %v1188
  %v2041 = vpop.permute.xlu0 %2040
  %v2043 = vmul.f32 %v1991, %v2026
  %v2044 = vmul.f32 %v2015, %v2026
  %v2045 = vmul.f32 %v1992, %v2031
  %v2046 = vmul.f32 %v2016, %v2031
  %v2047 = vmul.f32 %v1993, %v2036
  %v2048 = vmul.f32 %v2017, %v2036
  %v2049 = vmul.f32 %v1994, %v2041
  %v2050 = vmul.f32 %v2018, %v2041
  %v2051 = vmul.f32 %v1995, %v2026
  %v2052 = vmul.f32 %v2019, %v2026
  %v2053 = vmul.f32 %v1996, %v2031
  %v2054 = vmul.f32 %v2020, %v2031
  %v2055 = vmul.f32 %v1997, %v2036
  %v2056 = vmul.f32 %v2021, %v2036
  %v2057 = vmul.f32 %v1998, %v2041
  %v2058 = vmul.f32 %v2022, %v2041
  %v2059 = vadd.f32 %v1943, %v2043
  %v2060 = vadd.f32 %v1944, %v2044
  %v2061 = vadd.f32 %v1945, %v2045
  %v2062 = vadd.f32 %v1946, %v2046
  %v2063 = vadd.f32 %v1947, %v2047
  %v2064 = vadd.f32 %v1948, %v2048
  %v2065 = vadd.f32 %v1949, %v2049
  %v2066 = vadd.f32 %v1950, %v2050
  %v2067 = vadd.f32 %v1951, %v2051
  %v2068 = vadd.f32 %v1952, %v2052
  %v2069 = vadd.f32 %v1953, %v2053
  %v2070 = vadd.f32 %v1954, %v2054
  %v2071 = vadd.f32 %v1955, %v2055
  %v2072 = vadd.f32 %v1956, %v2056
  %v2073 = vadd.f32 %v1957, %v2057
  %v2074 = vadd.f32 %v1958, %v2058
  %v2075 = vld [vmem:[%s5] sm:$0xff]
  %v2076 = vld [vmem:[%s5 + $0x8] sm:$0xff]
  %v2077 = vld [vmem:[%s5 + $0x10] sm:$0xff]
  %v2078 = vld [vmem:[%s5 + $0x18] sm:$0xff]
  %v2079 = vld [vmem:[%s6] sm:$0xff]
  %v2080 = vld [vmem:[%s6 + $0x8] sm:$0xff]
  %v2081 = vld [vmem:[%s6 + $0x10] sm:$0xff]
  %v2082 = vld [vmem:[%s6 + $0x18] sm:$0xff]
  %v2083 = vadd.f32 %v2059, %v2060
  %2084 = vadd.xlane.f32.xlu0 %v2083
  %v2085 = vpop.xlane.xlu0 %2084
  %v2086 = vadd.f32 %v2061, %v2062
  %2087 = vadd.xlane.f32.xlu0 %v2086
  %v2088 = vpop.xlane.xlu0 %2087
  %v2089 = vadd.f32 %v2063, %v2064
  %2090 = vadd.xlane.f32.xlu0 %v2089
  %v2091 = vpop.xlane.xlu0 %2090
  %v2092 = vadd.f32 %v2065, %v2066
  %2093 = vadd.xlane.f32.xlu0 %v2092
  %v2094 = vpop.xlane.xlu0 %2093
  %v2095 = vadd.f32 %v2067, %v2068
  %2096 = vadd.xlane.f32.xlu0 %v2095
  %v2097 = vpop.xlane.xlu0 %2096
  %v2098 = vadd.f32 %v2069, %v2070
  %2099 = vadd.xlane.f32.xlu0 %v2098
  %v2100 = vpop.xlane.xlu0 %2099
  %v2101 = vadd.f32 %v2071, %v2072
  %2102 = vadd.xlane.f32.xlu0 %v2101
  %v2103 = vpop.xlane.xlu0 %2102
  %v2104 = vadd.f32 %v2073, %v2074
  %2105 = vadd.xlane.f32.xlu0 %v2104
  %v2106 = vpop.xlane.xlu0 %2105
  %v2107 = vmul.f32 %v2059, %v2059
  %v2108 = vmul.f32 %v2060, %v2060
  %v2109 = vmul.f32 %v2061, %v2061
  %v2110 = vmul.f32 %v2062, %v2062
  %v2111 = vmul.f32 %v2063, %v2063
  %v2112 = vmul.f32 %v2064, %v2064
  %v2113 = vmul.f32 %v2065, %v2065
  %v2114 = vmul.f32 %v2066, %v2066
  %v2115 = vmul.f32 %v2067, %v2067
  %v2116 = vmul.f32 %v2068, %v2068
  %v2117 = vmul.f32 %v2069, %v2069
  %v2118 = vmul.f32 %v2070, %v2070
  %v2119 = vmul.f32 %v2071, %v2071
  %v2120 = vmul.f32 %v2072, %v2072
  %v2121 = vmul.f32 %v2073, %v2073
  %v2122 = vmul.f32 %v2074, %v2074
  %v2123 = vadd.f32 %v2107, %v2108
  %2124 = vadd.xlane.f32.xlu0 %v2123
  %v2125 = vpop.xlane.xlu0 %2124
  %v2126 = vadd.f32 %v2109, %v2110
  %2127 = vadd.xlane.f32.xlu0 %v2126
  %v2128 = vpop.xlane.xlu0 %2127
  %v2129 = vadd.f32 %v2111, %v2112
  %2130 = vadd.xlane.f32.xlu0 %v2129
  %v2131 = vpop.xlane.xlu0 %2130
  %v2132 = vadd.f32 %v2113, %v2114
  %2133 = vadd.xlane.f32.xlu0 %v2132
  %v2134 = vpop.xlane.xlu0 %2133
  %v2135 = vadd.f32 %v2115, %v2116
  %2136 = vadd.xlane.f32.xlu0 %v2135
  %v2137 = vpop.xlane.xlu0 %2136
  %v2138 = vadd.f32 %v2117, %v2118
  %2139 = vadd.xlane.f32.xlu0 %v2138
  %v2140 = vpop.xlane.xlu0 %2139
  %v2141 = vadd.f32 %v2119, %v2120
  %2142 = vadd.xlane.f32.xlu0 %v2141
  %v2143 = vpop.xlane.xlu0 %2142
  %v2144 = vadd.f32 %v2121, %v2122
  %2145 = vadd.xlane.f32.xlu0 %v2144
  %v2146 = vpop.xlane.xlu0 %2145
  %v2147 = vadd.f32 %v2085, %v2097
  %v2148 = vadd.f32 %v2088, %v2100
  %v2149 = vadd.f32 %v2091, %v2103
  %v2150 = vadd.f32 %v2094, %v2106
  %v2151 = vmul.f32 %v2147, %v687
  %v2152 = vmul.f32 %v2148, %v687
  %v2153 = vmul.f32 %v2149, %v687
  %v2154 = vmul.f32 %v2150, %v687
  %v2155 = vadd.f32 %v2125, %v2137
  %v2156 = vadd.f32 %v2128, %v2140
  %v2157 = vadd.f32 %v2131, %v2143
  %v2158 = vadd.f32 %v2134, %v2146
  %v2159 = vmul.f32 %v2155, %v687
  %v2160 = vmul.f32 %v2156, %v687
  %v2161 = vmul.f32 %v2157, %v687
  %v2162 = vmul.f32 %v2158, %v687
  %v2163 = vmul.f32 %v2151, %v2151
  %v2164 = vmul.f32 %v2152, %v2152
  %v2165 = vmul.f32 %v2153, %v2153
  %v2166 = vmul.f32 %v2154, %v2154
  %v2167 = vsub.f32 %v2159, %v2163
  %v2168 = vsub.f32 %v2160, %v2164
  %v2169 = vsub.f32 %v2161, %v2165
  %v2170 = vsub.f32 %v2162, %v2166
  %v2171 = vmax.f32 %v2167, 0.0
  %v2172 = vmax.f32 %v2168, 0.0
  %v2173 = vmax.f32 %v2169, 0.0
  %v2174 = vmax.f32 %v2170, 0.0
  %v2175 = vadd.f32 %v2171, 0.001
  %v2176 = vadd.f32 %v2172, 0.001
  %v2177 = vadd.f32 %v2173, 0.001
  %v2178 = vadd.f32 %v2174, 0.001
  %v2179 = vrsqrt.pop %v2175
  %v2180 = vrsqrt.pop %v2176
  %v2181 = vrsqrt.pop %v2177
  %v2182 = vrsqrt.pop %v2178
  %v2183 = vsub.f32 %v2059, %v2151
  %v2184 = vsub.f32 %v2060, %v2151
  %v2185 = vsub.f32 %v2061, %v2152
  %v2186 = vsub.f32 %v2062, %v2152
  %v2187 = vsub.f32 %v2063, %v2153
  %v2188 = vsub.f32 %v2064, %v2153
  %v2189 = vsub.f32 %v2065, %v2154
  %v2190 = vsub.f32 %v2066, %v2154
  %v2191 = vsub.f32 %v2067, %v2151
  %v2192 = vsub.f32 %v2068, %v2151
  %v2193 = vsub.f32 %v2069, %v2152
  %v2194 = vsub.f32 %v2070, %v2152
  %v2195 = vsub.f32 %v2071, %v2153
  %v2196 = vsub.f32 %v2072, %v2153
  %v2197 = vsub.f32 %v2073, %v2154
  %v2198 = vsub.f32 %v2074, %v2154
  %v2199 = vmul.f32 %v2179, %v2075
  %v2200 = vmul.f32 %v2180, %v2076
  %v2201 = vmul.f32 %v2181, %v2077
  %v2202 = vmul.f32 %v2182, %v2078
  %2204 = vset.pattern.permute.xlu0 0
  %2205 = vperm.xlu0 %2204, %v2199
  %v2206 = vpop.permute.xlu0 %2205
  %2209 = vset.pattern.permute.xlu0 0
  %2210 = vperm.xlu0 %2209, %v2200
  %v2211 = vpop.permute.xlu0 %2210
  %2214 = vset.pattern.permute.xlu0 0
  %2215 = vperm.xlu0 %2214, %v2201
  %v2216 = vpop.permute.xlu0 %2215
  %2219 = vset.pattern.permute.xlu0 0
  %2220 = vperm.xlu0 %2219, %v2202
  %v2221 = vpop.permute.xlu0 %2220
  %v2223 = vmul.f32 %v2183, %v2206
  %v2224 = vmul.f32 %v2184, %v2206
  %v2225 = vmul.f32 %v2185, %v2211
  %v2226 = vmul.f32 %v2186, %v2211
  %v2227 = vmul.f32 %v2187, %v2216
  %v2228 = vmul.f32 %v2188, %v2216
  %v2229 = vmul.f32 %v2189, %v2221
  %v2230 = vmul.f32 %v2190, %v2221
  %v2231 = vmul.f32 %v2191, %v2206
  %v2232 = vmul.f32 %v2192, %v2206
  %v2233 = vmul.f32 %v2193, %v2211
  %v2234 = vmul.f32 %v2194, %v2211
  %v2235 = vmul.f32 %v2195, %v2216
  %v2236 = vmul.f32 %v2196, %v2216
  %v2237 = vmul.f32 %v2197, %v2221
  %v2238 = vmul.f32 %v2198, %v2221
  %2240 = vset.pattern.permute.xlu0 0
  %2241 = vperm.xlu0 %2240, %v2079
  %v2242 = vpop.permute.xlu0 %2241
  %2245 = vset.pattern.permute.xlu0 0
  %2246 = vperm.xlu0 %2245, %v2080
  %v2247 = vpop.permute.xlu0 %2246
  %2250 = vset.pattern.permute.xlu0 0
  %2251 = vperm.xlu0 %2250, %v2081
  %v2252 = vpop.permute.xlu0 %2251
  %2255 = vset.pattern.permute.xlu0 0
  %2256 = vperm.xlu0 %2255, %v2082
  %v2257 = vpop.permute.xlu0 %2256
  %v2259 = vadd.f32 %v2223, %v2242
  %v2260 = vadd.f32 %v2224, %v2242
  %v2261 = vadd.f32 %v2225, %v2247
  %v2262 = vadd.f32 %v2226, %v2247
  %v2263 = vadd.f32 %v2227, %v2252
  %v2264 = vadd.f32 %v2228, %v2252
  %v2265 = vadd.f32 %v2229, %v2257
  %v2266 = vadd.f32 %v2230, %v2257
  %v2267 = vadd.f32 %v2231, %v2242
  %v2268 = vadd.f32 %v2232, %v2242
  %v2269 = vadd.f32 %v2233, %v2247
  %v2270 = vadd.f32 %v2234, %v2247
  %v2271 = vadd.f32 %v2235, %v2252
  %v2272 = vadd.f32 %v2236, %v2252
  %v2273 = vadd.f32 %v2237, %v2257
  %v2274 = vadd.f32 %v2238, %v2257
  %v2275 = vxor.u32 %v2259, 2147483648
  %v2276 = vxor.u32 %v2260, 2147483648
  %v2277 = vxor.u32 %v2261, 2147483648
  %v2278 = vxor.u32 %v2262, 2147483648
  %v2279 = vxor.u32 %v2263, 2147483648
  %v2280 = vxor.u32 %v2264, 2147483648
  %v2281 = vxor.u32 %v2265, 2147483648
  %v2282 = vxor.u32 %v2266, 2147483648
  %v2283 = vxor.u32 %v2267, 2147483648
  %v2284 = vxor.u32 %v2268, 2147483648
  %v2285 = vxor.u32 %v2269, 2147483648
  %v2286 = vxor.u32 %v2270, 2147483648
  %v2287 = vxor.u32 %v2271, 2147483648
  %v2288 = vxor.u32 %v2272, 2147483648
  %v2289 = vxor.u32 %v2273, 2147483648
  %v2290 = vxor.u32 %v2274, 2147483648
  %v2291 = vmul.f32 %v2275, 1.442695
  %v2292 = vpow.pop %v2291
  %v2293 = vmul.f32 %v2276, 1.442695
  %v2294 = vpow.pop %v2293
  %v2295 = vmul.f32 %v2277, 1.442695
  %v2296 = vpow.pop %v2295
  %v2297 = vmul.f32 %v2278, 1.442695
  %v2298 = vpow.pop %v2297
  %v2299 = vmul.f32 %v2279, 1.442695
  %v2300 = vpow.pop %v2299
  %v2301 = vmul.f32 %v2280, 1.442695
  %v2302 = vpow.pop %v2301
  %v2303 = vmul.f32 %v2281, 1.442695
  %v2304 = vpow.pop %v2303
  %v2305 = vmul.f32 %v2282, 1.442695
  %v2306 = vpow.pop %v2305
  %v2307 = vmul.f32 %v2283, 1.442695
  %v2308 = vpow.pop %v2307
  %v2309 = vmul.f32 %v2284, 1.442695
  %v2310 = vpow.pop %v2309
  %v2311 = vmul.f32 %v2285, 1.442695
  %v2312 = vpow.pop %v2311
  %v2313 = vmul.f32 %v2286, 1.442695
  %v2314 = vpow.pop %v2313
  %v2315 = vmul.f32 %v2287, 1.442695
  %v2316 = vpow.pop %v2315
  %v2317 = vmul.f32 %v2288, 1.442695
  %v2318 = vpow.pop %v2317
  %v2319 = vmul.f32 %v2289, 1.442695
  %v2320 = vpow.pop %v2319
  %v2321 = vmul.f32 %v2290, 1.442695
  %v2322 = vpow.pop %v2321
  %v2323 = vadd.f32 %v2292, 1.0
  %v2324 = vadd.f32 %v2294, 1.0
  %v2325 = vadd.f32 %v2296, 1.0
  %v2326 = vadd.f32 %v2298, 1.0
  %v2327 = vadd.f32 %v2300, 1.0
  %v2328 = vadd.f32 %v2302, 1.0
  %v2329 = vadd.f32 %v2304, 1.0
  %v2330 = vadd.f32 %v2306, 1.0
  %v2331 = vadd.f32 %v2308, 1.0
  %v2332 = vadd.f32 %v2310, 1.0
  %v2333 = vadd.f32 %v2312, 1.0
  %v2334 = vadd.f32 %v2314, 1.0
  %v2335 = vadd.f32 %v2316, 1.0
  %v2336 = vadd.f32 %v2318, 1.0
  %v2337 = vadd.f32 %v2320, 1.0
  %v2338 = vadd.f32 %v2322, 1.0
  %v2339 = vrcp.pop %v2323
  %v2340 = vmul.f32 1.0, %v2339
  %v2341 = vrcp.pop %v2324
  %v2342 = vmul.f32 1.0, %v2341
  %v2343 = vrcp.pop %v2325
  %v2344 = vmul.f32 1.0, %v2343
  %v2345 = vrcp.pop %v2326
  %v2346 = vmul.f32 1.0, %v2345
  %v2347 = vrcp.pop %v2327
  %v2348 = vmul.f32 1.0, %v2347
  %v2349 = vrcp.pop %v2328
  %v2350 = vmul.f32 1.0, %v2349
  %v2351 = vrcp.pop %v2329
  %v2352 = vmul.f32 1.0, %v2351
  %v2353 = vrcp.pop %v2330
  %v2354 = vmul.f32 1.0, %v2353
  %v2355 = vrcp.pop %v2331
  %v2356 = vmul.f32 1.0, %v2355
  %v2357 = vrcp.pop %v2332
  %v2358 = vmul.f32 1.0, %v2357
  %v2359 = vrcp.pop %v2333
  %v2360 = vmul.f32 1.0, %v2359
  %v2361 = vrcp.pop %v2334
  %v2362 = vmul.f32 1.0, %v2361
  %v2363 = vrcp.pop %v2335
  %v2364 = vmul.f32 1.0, %v2363
  %v2365 = vrcp.pop %v2336
  %v2366 = vmul.f32 1.0, %v2365
  %v2367 = vrcp.pop %v2337
  %v2368 = vmul.f32 1.0, %v2367
  %v2369 = vrcp.pop %v2338
  %v2370 = vmul.f32 1.0, %v2369
  %v2371 = vmul.f32 %v2259, %v2340
  %v2372 = vmul.f32 %v2260, %v2342
  %v2373 = vmul.f32 %v2261, %v2344
  %v2374 = vmul.f32 %v2262, %v2346
  %v2375 = vmul.f32 %v2263, %v2348
  %v2376 = vmul.f32 %v2264, %v2350
  %v2377 = vmul.f32 %v2265, %v2352
  %v2378 = vmul.f32 %v2266, %v2354
  %v2379 = vmul.f32 %v2267, %v2356
  %v2380 = vmul.f32 %v2268, %v2358
  %v2381 = vmul.f32 %v2269, %v2360
  %v2382 = vmul.f32 %v2270, %v2362
  %v2383 = vmul.f32 %v2271, %v2364
  %v2384 = vmul.f32 %v2272, %v2366
  %v2385 = vmul.f32 %v2273, %v2368
  %v2386 = vmul.f32 %v2274, %v2370
  %v2387 = vadd.f32 %v2371, %v2372
  %2388 = vadd.xlane.f32.xlu0 %v2387
  %v2389 = vpop.xlane.xlu0 %2388
  %v2390 = vadd.f32 %v2373, %v2374
  %2391 = vadd.xlane.f32.xlu0 %v2390
  %v2392 = vpop.xlane.xlu0 %2391
  %v2393 = vadd.f32 %v2375, %v2376
  %2394 = vadd.xlane.f32.xlu0 %v2393
  %v2395 = vpop.xlane.xlu0 %2394
  %v2396 = vadd.f32 %v2377, %v2378
  %2397 = vadd.xlane.f32.xlu0 %v2396
  %v2398 = vpop.xlane.xlu0 %2397
  %v2399 = vadd.f32 %v2379, %v2380
  %2400 = vadd.xlane.f32.xlu0 %v2399
  %v2401 = vpop.xlane.xlu0 %2400
  %v2402 = vadd.f32 %v2381, %v2382
  %2403 = vadd.xlane.f32.xlu0 %v2402
  %v2404 = vpop.xlane.xlu0 %2403
  %v2405 = vadd.f32 %v2383, %v2384
  %2406 = vadd.xlane.f32.xlu0 %v2405
  %v2407 = vpop.xlane.xlu0 %2406
  %v2408 = vadd.f32 %v2385, %v2386
  %2409 = vadd.xlane.f32.xlu0 %v2408
  %v2410 = vpop.xlane.xlu0 %2409
  %v2411 = vrcp.pop 256.0
  %v2412 = vmul.f32 %v2389, %v2411
  %v2413 = vmul.f32 %v2392, %v2411
  %v2414 = vmul.f32 %v2395, %v2411
  %v2415 = vmul.f32 %v2398, %v2411
  %v2416 = vmul.f32 %v2401, %v2411
  %v2417 = vmul.f32 %v2404, %v2411
  %v2418 = vmul.f32 %v2407, %v2411
  %v2419 = vmul.f32 %v2410, %v2411
  %v2420 = vld [vmem:[%s7] sm:$0xff]
  %v2421 = vld [vmem:[%s7 + $0x8] sm:$0xff]
  %v2422 = vld [vmem:[%s7 + $0x10] sm:$0xff]
  %v2423 = vld [vmem:[%s7 + $0x18] sm:$0xff]
  %v2424 = vld [vmem:[%s7 + $0x20] sm:$0xff]
  %v2425 = vld [vmem:[%s7 + $0x28] sm:$0xff]
  %v2426 = vld [vmem:[%s7 + $0x30] sm:$0xff]
  %v2427 = vld [vmem:[%s7 + $0x38] sm:$0xff]
  %v2428 = vld [vmem:[%s9] sm:$0xff]
  %v2429 = vld [vmem:[%s9 + $0x8] sm:$0xff]
  %v2430 = vld [vmem:[%s9 + $0x10] sm:$0xff]
  %v2431 = vld [vmem:[%s9 + $0x18] sm:$0xff]
  %v2432 = vld [vmem:[%s9 + $0x20] sm:$0xff]
  %v2433 = vld [vmem:[%s9 + $0x28] sm:$0xff]
  %v2434 = vld [vmem:[%s9 + $0x30] sm:$0xff]
  %v2435 = vld [vmem:[%s9 + $0x38] sm:$0xff]
  %v2436 = vld [vmem:[%s8] sm:$0x1]
  %v2437 = vld [vmem:[%s8 + $0x1] sm:$0x1]
  %v2438 = vld [vmem:[%s10] sm:$0xff]
  %v2439 = vld [vmem:[%s10 + $0x8] sm:$0xff]
  %v2440 = vld [vmem:[%s10 + $0x10] sm:$0xff]
  %v2441 = vld [vmem:[%s10 + $0x18] sm:$0xff]
  %v2442 = vmul.f32 %v2412, %v2420
  %v2443 = vmul.f32 %v2413, %v2421
  %v2444 = vmul.f32 %v2414, %v2422
  %v2445 = vmul.f32 %v2415, %v2423
  %v2446 = vmul.f32 %v2416, %v2420
  %v2447 = vmul.f32 %v2417, %v2421
  %v2448 = vmul.f32 %v2418, %v2422
  %v2449 = vmul.f32 %v2419, %v2423
  %v2450 = vsel %vm999, %v2442, 0.0
  %v2451 = vsel %vm999, %v2443, 0.0
  %v2452 = vadd.f32 %v2450, %v2451
  %v2453 = vsel %vm999, %v2444, 0.0
  %v2454 = vadd.f32 %v2452, %v2453
  %v2455 = vsel %vm999, %v2445, 0.0
  %v2456 = vadd.f32 %v2454, %v2455
  %v2457 = vrot.slane %v2456, 4
  %v2458 = vadd.f32 %v2456, %v2457
  %v2459 = vrot.slane %v2458, 2
  %v2460 = vadd.f32 %v2458, %v2459
  %v2461 = vrot.slane %v2460, 1
  %v2462 = vadd.f32 %v2460, %v2461
  %v2463 = vsel %vm999, %v2446, 0.0
  %v2464 = vsel %vm999, %v2447, 0.0
  %v2465 = vadd.f32 %v2463, %v2464
  %v2466 = vsel %vm999, %v2448, 0.0
  %v2467 = vadd.f32 %v2465, %v2466
  %v2468 = vsel %vm999, %v2449, 0.0
  %v2469 = vadd.f32 %v2467, %v2468
  %v2470 = vrot.slane %v2469, 4
  %v2471 = vadd.f32 %v2469, %v2470
  %v2472 = vrot.slane %v2471, 2
  %v2473 = vadd.f32 %v2471, %v2472
  %v2474 = vrot.slane %v2473, 1
  %v2475 = vadd.f32 %v2473, %v2474
  %v2476 = vadd.f32 %v2462, %v2436
  %v2477 = vadd.f32 %v2475, %v2436
  %v2478 = vxor.u32 %v2476, 2147483648
  %v2479 = vxor.u32 %v2477, 2147483648
  %v2480 = vmul.f32 %v2478, 1.442695
  %v2481 = vpow.pop %v2480
  %v2482 = vmul.f32 %v2479, 1.442695
  %v2483 = vpow.pop %v2482
  %v2484 = vadd.f32 %v2481, 1.0
  %v2485 = vadd.f32 %v2483, 1.0
  %v2486 = vrcp.pop %v2484
  %v2487 = vmul.f32 1.0, %v2486
  %v2488 = vrcp.pop %v2485
  %v2489 = vmul.f32 1.0, %v2488
  %v2490 = vmul.f32 %v2476, %v2487
  %v2491 = vmul.f32 %v2477, %v2489
  %v2492 = vlaneseq
  %v2493 = vshrl.u32 %v2492, 7
  %v2494 = vsub.s32 0, %v2493
  %v2495 = vrot.slane %v2490, %v2494
  %v2496 = vlaneseq
  %v2497 = vshrl.u32 %v2496, 7
  %v2498 = vsub.s32 0, %v2497
  %v2499 = vrot.slane %v2491, %v2498
  %v2500 = vmul.f32 %v2495, %v2428
  %v2501 = vmul.f32 %v2495, %v2429
  %v2502 = vmul.f32 %v2495, %v2430
  %v2503 = vmul.f32 %v2495, %v2431
  %v2504 = vmul.f32 %v2499, %v2428
  %v2505 = vmul.f32 %v2499, %v2429
  %v2506 = vmul.f32 %v2499, %v2430
  %v2507 = vmul.f32 %v2499, %v2431
  %v2508 = vadd.f32 %v2438, %v2500
  %v2509 = vadd.f32 %v2439, %v2501
  %v2510 = vadd.f32 %v2440, %v2502
  %v2511 = vadd.f32 %v2441, %v2503
  %v2512 = vadd.f32 %v2438, %v2504
  %v2513 = vadd.f32 %v2439, %v2505
  %v2514 = vadd.f32 %v2440, %v2506
  %v2515 = vadd.f32 %v2441, %v2507
  %v2516 = vmul.f32 %v2412, %v2424
  %v2517 = vmul.f32 %v2413, %v2425
  %v2518 = vmul.f32 %v2414, %v2426
  %v2519 = vmul.f32 %v2415, %v2427
  %v2520 = vmul.f32 %v2416, %v2424
  %v2521 = vmul.f32 %v2417, %v2425
  %v2522 = vmul.f32 %v2418, %v2426
  %v2523 = vmul.f32 %v2419, %v2427
  %v2524 = vsel %vm999, %v2516, 0.0
  %v2525 = vsel %vm999, %v2517, 0.0
  %v2526 = vadd.f32 %v2524, %v2525
  %v2527 = vsel %vm999, %v2518, 0.0
  %v2528 = vadd.f32 %v2526, %v2527
  %v2529 = vsel %vm999, %v2519, 0.0
  %v2530 = vadd.f32 %v2528, %v2529
  %v2531 = vrot.slane %v2530, 4
  %v2532 = vadd.f32 %v2530, %v2531
  %v2533 = vrot.slane %v2532, 2
  %v2534 = vadd.f32 %v2532, %v2533
  %v2535 = vrot.slane %v2534, 1
  %v2536 = vadd.f32 %v2534, %v2535
  %v2537 = vsel %vm999, %v2520, 0.0
  %v2538 = vsel %vm999, %v2521, 0.0
  %v2539 = vadd.f32 %v2537, %v2538
  %v2540 = vsel %vm999, %v2522, 0.0
  %v2541 = vadd.f32 %v2539, %v2540
  %v2542 = vsel %vm999, %v2523, 0.0
  %v2543 = vadd.f32 %v2541, %v2542
  %v2544 = vrot.slane %v2543, 4
  %v2545 = vadd.f32 %v2543, %v2544
  %v2546 = vrot.slane %v2545, 2
  %v2547 = vadd.f32 %v2545, %v2546
  %v2548 = vrot.slane %v2547, 1
  %v2549 = vadd.f32 %v2547, %v2548
  %v2550 = vadd.f32 %v2536, %v2437
  %v2551 = vadd.f32 %v2549, %v2437
  %v2552 = vxor.u32 %v2550, 2147483648
  %v2553 = vxor.u32 %v2551, 2147483648
  %v2554 = vmul.f32 %v2552, 1.442695
  %v2555 = vpow.pop %v2554
  %v2556 = vmul.f32 %v2553, 1.442695
  %v2557 = vpow.pop %v2556
  %v2558 = vadd.f32 %v2555, 1.0
  %v2559 = vadd.f32 %v2557, 1.0
  %v2560 = vrcp.pop %v2558
  %v2561 = vmul.f32 1.0, %v2560
  %v2562 = vrcp.pop %v2559
  %v2563 = vmul.f32 1.0, %v2562
  %v2564 = vmul.f32 %v2550, %v2561
  %v2565 = vmul.f32 %v2551, %v2563
  %v2566 = vlaneseq
  %v2567 = vshrl.u32 %v2566, 7
  %v2568 = vsub.s32 0, %v2567
  %v2569 = vrot.slane %v2564, %v2568
  %v2570 = vlaneseq
  %v2571 = vshrl.u32 %v2570, 7
  %v2572 = vsub.s32 0, %v2571
  %v2573 = vrot.slane %v2565, %v2572
  %v2574 = vmul.f32 %v2569, %v2432
  %v2575 = vmul.f32 %v2569, %v2433
  %v2576 = vmul.f32 %v2569, %v2434
  %v2577 = vmul.f32 %v2569, %v2435
  %v2578 = vmul.f32 %v2573, %v2432
  %v2579 = vmul.f32 %v2573, %v2433
  %v2580 = vmul.f32 %v2573, %v2434
  %v2581 = vmul.f32 %v2573, %v2435
  %v2582 = vadd.f32 %v2508, %v2574
  %v2583 = vadd.f32 %v2509, %v2575
  %v2584 = vadd.f32 %v2510, %v2576
  %v2585 = vadd.f32 %v2511, %v2577
  %v2586 = vadd.f32 %v2512, %v2578
  %v2587 = vadd.f32 %v2513, %v2579
  %v2588 = vadd.f32 %v2514, %v2580
  %v2589 = vadd.f32 %v2515, %v2581
  %v2590 = vxor.u32 %v2582, 2147483648
  %v2591 = vxor.u32 %v2583, 2147483648
  %v2592 = vxor.u32 %v2584, 2147483648
  %v2593 = vxor.u32 %v2585, 2147483648
  %v2594 = vxor.u32 %v2586, 2147483648
  %v2595 = vxor.u32 %v2587, 2147483648
  %v2596 = vxor.u32 %v2588, 2147483648
  %v2597 = vxor.u32 %v2589, 2147483648
  %v2598 = vmul.f32 %v2590, 1.442695
  %v2599 = vpow.pop %v2598
  %v2600 = vmul.f32 %v2591, 1.442695
  %v2601 = vpow.pop %v2600
  %v2602 = vmul.f32 %v2592, 1.442695
  %v2603 = vpow.pop %v2602
  %v2604 = vmul.f32 %v2593, 1.442695
  %v2605 = vpow.pop %v2604
  %v2606 = vmul.f32 %v2594, 1.442695
  %v2607 = vpow.pop %v2606
  %v2608 = vmul.f32 %v2595, 1.442695
  %v2609 = vpow.pop %v2608
  %v2610 = vmul.f32 %v2596, 1.442695
  %v2611 = vpow.pop %v2610
  %v2612 = vmul.f32 %v2597, 1.442695
  %v2613 = vpow.pop %v2612
  %v2614 = vadd.f32 %v2599, 1.0
  %v2615 = vadd.f32 %v2601, 1.0
  %v2616 = vadd.f32 %v2603, 1.0
  %v2617 = vadd.f32 %v2605, 1.0
  %v2618 = vadd.f32 %v2607, 1.0
  %v2619 = vadd.f32 %v2609, 1.0
  %v2620 = vadd.f32 %v2611, 1.0
  %v2621 = vadd.f32 %v2613, 1.0
  %v2622 = vrcp.pop %v2614
  %v2623 = vmul.f32 1.0, %v2622
  %v2624 = vrcp.pop %v2615
  %v2625 = vmul.f32 1.0, %v2624
  %v2626 = vrcp.pop %v2616
  %v2627 = vmul.f32 1.0, %v2626
  %v2628 = vrcp.pop %v2617
  %v2629 = vmul.f32 1.0, %v2628
  %v2630 = vrcp.pop %v2618
  %v2631 = vmul.f32 1.0, %v2630
  %v2632 = vrcp.pop %v2619
  %v2633 = vmul.f32 1.0, %v2632
  %v2634 = vrcp.pop %v2620
  %v2635 = vmul.f32 1.0, %v2634
  %v2636 = vrcp.pop %v2621
  %v2637 = vmul.f32 1.0, %v2636
  %2639 = vset.pattern.permute.xlu0 0
  %2640 = vperm.xlu0 %2639, %v2623
  %v2641 = vpop.permute.xlu0 %2640
  %2644 = vset.pattern.permute.xlu0 0
  %2645 = vperm.xlu0 %2644, %v2625
  %v2646 = vpop.permute.xlu0 %2645
  %2649 = vset.pattern.permute.xlu0 0
  %2650 = vperm.xlu0 %2649, %v2627
  %v2651 = vpop.permute.xlu0 %2650
  %2654 = vset.pattern.permute.xlu0 0
  %2655 = vperm.xlu0 %2654, %v2629
  %v2656 = vpop.permute.xlu0 %2655
  %2659 = vset.pattern.permute.xlu0 0
  %2660 = vperm.xlu0 %2659, %v2631
  %v2661 = vpop.permute.xlu0 %2660
  %2664 = vset.pattern.permute.xlu0 0
  %2665 = vperm.xlu0 %2664, %v2633
  %v2666 = vpop.permute.xlu0 %2665
  %2669 = vset.pattern.permute.xlu0 0
  %2670 = vperm.xlu0 %2669, %v2635
  %v2671 = vpop.permute.xlu0 %2670
  %2674 = vset.pattern.permute.xlu0 0
  %2675 = vperm.xlu0 %2674, %v2637
  %v2676 = vpop.permute.xlu0 %2675
  %v2678 = vmul.f32 %v2371, %v2641
  %v2679 = vmul.f32 %v2372, %v2641
  %v2680 = vmul.f32 %v2373, %v2646
  %v2681 = vmul.f32 %v2374, %v2646
  %v2682 = vmul.f32 %v2375, %v2651
  %v2683 = vmul.f32 %v2376, %v2651
  %v2684 = vmul.f32 %v2377, %v2656
  %v2685 = vmul.f32 %v2378, %v2656
  %v2686 = vmul.f32 %v2379, %v2661
  %v2687 = vmul.f32 %v2380, %v2661
  %v2688 = vmul.f32 %v2381, %v2666
  %v2689 = vmul.f32 %v2382, %v2666
  %v2690 = vmul.f32 %v2383, %v2671
  %v2691 = vmul.f32 %v2384, %v2671
  %v2692 = vmul.f32 %v2385, %v2676
  %v2693 = vmul.f32 %v2386, %v2676
  %v2694 = vld [vmem:[%s11] sm:$0xff]
  %v2695 = vld [vmem:[%s11 + $0x8] sm:$0xff]
  %v2696 = vld [vmem:[%s11 + $0x10] sm:$0xff]
  %v2697 = vld [vmem:[%s11 + $0x18] sm:$0xff]
  %v2698 = vld [vmem:[%s11 + $0x20] sm:$0xff]
  %v2699 = vld [vmem:[%s11 + $0x28] sm:$0xff]
  %v2700 = vld [vmem:[%s11 + $0x30] sm:$0xff]
  %v2701 = vld [vmem:[%s11 + $0x38] sm:$0xff]
  %v2702 = vld [vmem:[%s11 + $0x40] sm:$0xff]
  %v2703 = vld [vmem:[%s11 + $0x48] sm:$0xff]
  %v2704 = vld [vmem:[%s11 + $0x50] sm:$0xff]
  %v2705 = vld [vmem:[%s11 + $0x58] sm:$0xff]
  %v2706 = vld [vmem:[%s11 + $0x60] sm:$0xff]
  %v2707 = vld [vmem:[%s11 + $0x68] sm:$0xff]
  %v2708 = vld [vmem:[%s11 + $0x70] sm:$0xff]
  %v2709 = vld [vmem:[%s11 + $0x78] sm:$0xff]
  %v2710 = vld [vmem:[%s11 + $0x80] sm:$0xff]
  %v2711 = vld [vmem:[%s11 + $0x88] sm:$0xff]
  %v2712 = vld [vmem:[%s11 + $0x90] sm:$0xff]
  %v2713 = vld [vmem:[%s11 + $0x98] sm:$0xff]
  %v2714 = vld [vmem:[%s11 + $0xa0] sm:$0xff]
  %v2715 = vld [vmem:[%s11 + $0xa8] sm:$0xff]
  %v2716 = vld [vmem:[%s11 + $0xb0] sm:$0xff]
  %v2717 = vld [vmem:[%s11 + $0xb8] sm:$0xff]
  %v2718 = vld [vmem:[%s11 + $0xc0] sm:$0xff]
  %v2719 = vld [vmem:[%s11 + $0xc8] sm:$0xff]
  %v2720 = vld [vmem:[%s11 + $0xd0] sm:$0xff]
  %v2721 = vld [vmem:[%s11 + $0xd8] sm:$0xff]
  %v2722 = vld [vmem:[%s11 + $0xe0] sm:$0xff]
  %v2723 = vld [vmem:[%s11 + $0xe8] sm:$0xff]
  %v2724 = vld [vmem:[%s11 + $0xf0] sm:$0xff]
  %v2725 = vld [vmem:[%s11 + $0xf8] sm:$0xff]
  %v2726 = vlaneseq
  %v2727 = vshrl.u32 %v2726, 7
  %v2728 = vsub.s32 0, %v2727
  %v2729 = vrot.slane %v2678, %v2728
  %v2730 = vlaneseq
  %v2731 = vshrl.u32 %v2730, 7
  %v2732 = vsub.s32 0, %v2731
  %v2733 = vrot.slane %v2679, %v2732
  %v2734 = vlaneseq
  %v2735 = vshrl.u32 %v2734, 7
  %v2736 = vsub.s32 0, %v2735
  %v2737 = vrot.slane %v2686, %v2736
  %v2738 = vlaneseq
  %v2739 = vshrl.u32 %v2738, 7
  %v2740 = vsub.s32 0, %v2739
  %v2741 = vrot.slane %v2687, %v2740
  %2743 = vset.pattern.permute.xlu0 0
  %2744 = vperm.xlu0 %2743, %v2694
  %v2745 = vpop.permute.xlu0 %2744
  %v2747 = vmul.f32 %v2729, %v2745
  %v2748 = vmul.f32 %v2733, %v2745
  %v2749 = vmul.f32 %v2737, %v2745
  %v2750 = vmul.f32 %v2741, %v2745
  %v2751 = vlaneseq
  %v2752 = vshrl.u32 %v2751, 7
  %v2753 = vsub.s32 1, %v2752
  %v2754 = vrot.slane %v2678, %v2753
  %v2755 = vlaneseq
  %v2756 = vshrl.u32 %v2755, 7
  %v2757 = vsub.s32 1, %v2756
  %v2758 = vrot.slane %v2679, %v2757
  %v2759 = vlaneseq
  %v2760 = vshrl.u32 %v2759, 7
  %v2761 = vsub.s32 1, %v2760
  %v2762 = vrot.slane %v2686, %v2761
  %v2763 = vlaneseq
  %v2764 = vshrl.u32 %v2763, 7
  %v2765 = vsub.s32 1, %v2764
  %v2766 = vrot.slane %v2687, %v2765
  %2768 = vset.pattern.permute.xlu0 0
  %2769 = vperm.xlu0 %2768, %v2695
  %v2770 = vpop.permute.xlu0 %2769
  %v2772 = vmul.f32 %v2754, %v2770
  %v2773 = vmul.f32 %v2758, %v2770
  %v2774 = vmul.f32 %v2762, %v2770
  %v2775 = vmul.f32 %v2766, %v2770
  %v2776 = vadd.f32 %v2747, %v2772
  %v2777 = vadd.f32 %v2748, %v2773
  %v2778 = vadd.f32 %v2749, %v2774
  %v2779 = vadd.f32 %v2750, %v2775
  %v2780 = vlaneseq
  %v2781 = vshrl.u32 %v2780, 7
  %v2782 = vsub.s32 2, %v2781
  %v2783 = vrot.slane %v2678, %v2782
  %v2784 = vlaneseq
  %v2785 = vshrl.u32 %v2784, 7
  %v2786 = vsub.s32 2, %v2785
  %v2787 = vrot.slane %v2679, %v2786
  %v2788 = vlaneseq
  %v2789 = vshrl.u32 %v2788, 7
  %v2790 = vsub.s32 2, %v2789
  %v2791 = vrot.slane %v2686, %v2790
  %v2792 = vlaneseq
  %v2793 = vshrl.u32 %v2792, 7
  %v2794 = vsub.s32 2, %v2793
  %v2795 = vrot.slane %v2687, %v2794
  %2797 = vset.pattern.permute.xlu0 0
  %2798 = vperm.xlu0 %2797, %v2696
  %v2799 = vpop.permute.xlu0 %2798
  %v2801 = vmul.f32 %v2783, %v2799
  %v2802 = vmul.f32 %v2787, %v2799
  %v2803 = vmul.f32 %v2791, %v2799
  %v2804 = vmul.f32 %v2795, %v2799
  %v2805 = vadd.f32 %v2776, %v2801
  %v2806 = vadd.f32 %v2777, %v2802
  %v2807 = vadd.f32 %v2778, %v2803
  %v2808 = vadd.f32 %v2779, %v2804
  %v2809 = vlaneseq
  %v2810 = vshrl.u32 %v2809, 7
  %v2811 = vsub.s32 3, %v2810
  %v2812 = vrot.slane %v2678, %v2811
  %v2813 = vlaneseq
  %v2814 = vshrl.u32 %v2813, 7
  %v2815 = vsub.s32 3, %v2814
  %v2816 = vrot.slane %v2679, %v2815
  %v2817 = vlaneseq
  %v2818 = vshrl.u32 %v2817, 7
  %v2819 = vsub.s32 3, %v2818
  %v2820 = vrot.slane %v2686, %v2819
  %v2821 = vlaneseq
  %v2822 = vshrl.u32 %v2821, 7
  %v2823 = vsub.s32 3, %v2822
  %v2824 = vrot.slane %v2687, %v2823
  %2826 = vset.pattern.permute.xlu0 0
  %2827 = vperm.xlu0 %2826, %v2697
  %v2828 = vpop.permute.xlu0 %2827
  %v2830 = vmul.f32 %v2812, %v2828
  %v2831 = vmul.f32 %v2816, %v2828
  %v2832 = vmul.f32 %v2820, %v2828
  %v2833 = vmul.f32 %v2824, %v2828
  %v2834 = vadd.f32 %v2805, %v2830
  %v2835 = vadd.f32 %v2806, %v2831
  %v2836 = vadd.f32 %v2807, %v2832
  %v2837 = vadd.f32 %v2808, %v2833
  %v2838 = vlaneseq
  %v2839 = vshrl.u32 %v2838, 7
  %v2840 = vsub.s32 4, %v2839
  %v2841 = vrot.slane %v2678, %v2840
  %v2842 = vlaneseq
  %v2843 = vshrl.u32 %v2842, 7
  %v2844 = vsub.s32 4, %v2843
  %v2845 = vrot.slane %v2679, %v2844
  %v2846 = vlaneseq
  %v2847 = vshrl.u32 %v2846, 7
  %v2848 = vsub.s32 4, %v2847
  %v2849 = vrot.slane %v2686, %v2848
  %v2850 = vlaneseq
  %v2851 = vshrl.u32 %v2850, 7
  %v2852 = vsub.s32 4, %v2851
  %v2853 = vrot.slane %v2687, %v2852
  %2855 = vset.pattern.permute.xlu0 0
  %2856 = vperm.xlu0 %2855, %v2698
  %v2857 = vpop.permute.xlu0 %2856
  %v2859 = vmul.f32 %v2841, %v2857
  %v2860 = vmul.f32 %v2845, %v2857
  %v2861 = vmul.f32 %v2849, %v2857
  %v2862 = vmul.f32 %v2853, %v2857
  %v2863 = vadd.f32 %v2834, %v2859
  %v2864 = vadd.f32 %v2835, %v2860
  %v2865 = vadd.f32 %v2836, %v2861
  %v2866 = vadd.f32 %v2837, %v2862
  %v2867 = vlaneseq
  %v2868 = vshrl.u32 %v2867, 7
  %v2869 = vsub.s32 5, %v2868
  %v2870 = vrot.slane %v2678, %v2869
  %v2871 = vlaneseq
  %v2872 = vshrl.u32 %v2871, 7
  %v2873 = vsub.s32 5, %v2872
  %v2874 = vrot.slane %v2679, %v2873
  %v2875 = vlaneseq
  %v2876 = vshrl.u32 %v2875, 7
  %v2877 = vsub.s32 5, %v2876
  %v2878 = vrot.slane %v2686, %v2877
  %v2879 = vlaneseq
  %v2880 = vshrl.u32 %v2879, 7
  %v2881 = vsub.s32 5, %v2880
  %v2882 = vrot.slane %v2687, %v2881
  %2884 = vset.pattern.permute.xlu0 0
  %2885 = vperm.xlu0 %2884, %v2699
  %v2886 = vpop.permute.xlu0 %2885
  %v2888 = vmul.f32 %v2870, %v2886
  %v2889 = vmul.f32 %v2874, %v2886
  %v2890 = vmul.f32 %v2878, %v2886
  %v2891 = vmul.f32 %v2882, %v2886
  %v2892 = vadd.f32 %v2863, %v2888
  %v2893 = vadd.f32 %v2864, %v2889
  %v2894 = vadd.f32 %v2865, %v2890
  %v2895 = vadd.f32 %v2866, %v2891
  %v2896 = vlaneseq
  %v2897 = vshrl.u32 %v2896, 7
  %v2898 = vsub.s32 6, %v2897
  %v2899 = vrot.slane %v2678, %v2898
  %v2900 = vlaneseq
  %v2901 = vshrl.u32 %v2900, 7
  %v2902 = vsub.s32 6, %v2901
  %v2903 = vrot.slane %v2679, %v2902
  %v2904 = vlaneseq
  %v2905 = vshrl.u32 %v2904, 7
  %v2906 = vsub.s32 6, %v2905
  %v2907 = vrot.slane %v2686, %v2906
  %v2908 = vlaneseq
  %v2909 = vshrl.u32 %v2908, 7
  %v2910 = vsub.s32 6, %v2909
  %v2911 = vrot.slane %v2687, %v2910
  %2913 = vset.pattern.permute.xlu0 0
  %2914 = vperm.xlu0 %2913, %v2700
  %v2915 = vpop.permute.xlu0 %2914
  %v2917 = vmul.f32 %v2899, %v2915
  %v2918 = vmul.f32 %v2903, %v2915
  %v2919 = vmul.f32 %v2907, %v2915
  %v2920 = vmul.f32 %v2911, %v2915
  %v2921 = vadd.f32 %v2892, %v2917
  %v2922 = vadd.f32 %v2893, %v2918
  %v2923 = vadd.f32 %v2894, %v2919
  %v2924 = vadd.f32 %v2895, %v2920
  %v2925 = vlaneseq
  %v2926 = vshrl.u32 %v2925, 7
  %v2927 = vsub.s32 7, %v2926
  %v2928 = vrot.slane %v2678, %v2927
  %v2929 = vlaneseq
  %v2930 = vshrl.u32 %v2929, 7
  %v2931 = vsub.s32 7, %v2930
  %v2932 = vrot.slane %v2679, %v2931
  %v2933 = vlaneseq
  %v2934 = vshrl.u32 %v2933, 7
  %v2935 = vsub.s32 7, %v2934
  %v2936 = vrot.slane %v2686, %v2935
  %v2937 = vlaneseq
  %v2938 = vshrl.u32 %v2937, 7
  %v2939 = vsub.s32 7, %v2938
  %v2940 = vrot.slane %v2687, %v2939
  %2942 = vset.pattern.permute.xlu0 0
  %2943 = vperm.xlu0 %2942, %v2701
  %v2944 = vpop.permute.xlu0 %2943
  %v2946 = vmul.f32 %v2928, %v2944
  %v2947 = vmul.f32 %v2932, %v2944
  %v2948 = vmul.f32 %v2936, %v2944
  %v2949 = vmul.f32 %v2940, %v2944
  %v2950 = vadd.f32 %v2921, %v2946
  %v2951 = vadd.f32 %v2922, %v2947
  %v2952 = vadd.f32 %v2923, %v2948
  %v2953 = vadd.f32 %v2924, %v2949
  %v2954 = vlaneseq
  %v2955 = vshrl.u32 %v2954, 7
  %v2956 = vsub.s32 0, %v2955
  %v2957 = vrot.slane %v2680, %v2956
  %v2958 = vlaneseq
  %v2959 = vshrl.u32 %v2958, 7
  %v2960 = vsub.s32 0, %v2959
  %v2961 = vrot.slane %v2681, %v2960
  %v2962 = vlaneseq
  %v2963 = vshrl.u32 %v2962, 7
  %v2964 = vsub.s32 0, %v2963
  %v2965 = vrot.slane %v2688, %v2964
  %v2966 = vlaneseq
  %v2967 = vshrl.u32 %v2966, 7
  %v2968 = vsub.s32 0, %v2967
  %v2969 = vrot.slane %v2689, %v2968
  %2971 = vset.pattern.permute.xlu0 0
  %2972 = vperm.xlu0 %2971, %v2702
  %v2973 = vpop.permute.xlu0 %2972
  %v2975 = vmul.f32 %v2957, %v2973
  %v2976 = vmul.f32 %v2961, %v2973
  %v2977 = vmul.f32 %v2965, %v2973
  %v2978 = vmul.f32 %v2969, %v2973
  %v2979 = vadd.f32 %v2950, %v2975
  %v2980 = vadd.f32 %v2951, %v2976
  %v2981 = vadd.f32 %v2952, %v2977
  %v2982 = vadd.f32 %v2953, %v2978
  %v2983 = vlaneseq
  %v2984 = vshrl.u32 %v2983, 7
  %v2985 = vsub.s32 1, %v2984
  %v2986 = vrot.slane %v2680, %v2985
  %v2987 = vlaneseq
  %v2988 = vshrl.u32 %v2987, 7
  %v2989 = vsub.s32 1, %v2988
  %v2990 = vrot.slane %v2681, %v2989
  %v2991 = vlaneseq
  %v2992 = vshrl.u32 %v2991, 7
  %v2993 = vsub.s32 1, %v2992
  %v2994 = vrot.slane %v2688, %v2993
  %v2995 = vlaneseq
  %v2996 = vshrl.u32 %v2995, 7
  %v2997 = vsub.s32 1, %v2996
  %v2998 = vrot.slane %v2689, %v2997
  %3000 = vset.pattern.permute.xlu0 0
  %3001 = vperm.xlu0 %3000, %v2703
  %v3002 = vpop.permute.xlu0 %3001
  %v3004 = vmul.f32 %v2986, %v3002
  %v3005 = vmul.f32 %v2990, %v3002
  %v3006 = vmul.f32 %v2994, %v3002
  %v3007 = vmul.f32 %v2998, %v3002
  %v3008 = vadd.f32 %v2979, %v3004
  %v3009 = vadd.f32 %v2980, %v3005
  %v3010 = vadd.f32 %v2981, %v3006
  %v3011 = vadd.f32 %v2982, %v3007
  %v3012 = vlaneseq
  %v3013 = vshrl.u32 %v3012, 7
  %v3014 = vsub.s32 2, %v3013
  %v3015 = vrot.slane %v2680, %v3014
  %v3016 = vlaneseq
  %v3017 = vshrl.u32 %v3016, 7
  %v3018 = vsub.s32 2, %v3017
  %v3019 = vrot.slane %v2681, %v3018
  %v3020 = vlaneseq
  %v3021 = vshrl.u32 %v3020, 7
  %v3022 = vsub.s32 2, %v3021
  %v3023 = vrot.slane %v2688, %v3022
  %v3024 = vlaneseq
  %v3025 = vshrl.u32 %v3024, 7
  %v3026 = vsub.s32 2, %v3025
  %v3027 = vrot.slane %v2689, %v3026
  %3029 = vset.pattern.permute.xlu0 0
  %3030 = vperm.xlu0 %3029, %v2704
  %v3031 = vpop.permute.xlu0 %3030
  %v3033 = vmul.f32 %v3015, %v3031
  %v3034 = vmul.f32 %v3019, %v3031
  %v3035 = vmul.f32 %v3023, %v3031
  %v3036 = vmul.f32 %v3027, %v3031
  %v3037 = vadd.f32 %v3008, %v3033
  %v3038 = vadd.f32 %v3009, %v3034
  %v3039 = vadd.f32 %v3010, %v3035
  %v3040 = vadd.f32 %v3011, %v3036
  %v3041 = vlaneseq
  %v3042 = vshrl.u32 %v3041, 7
  %v3043 = vsub.s32 3, %v3042
  %v3044 = vrot.slane %v2680, %v3043
  %v3045 = vlaneseq
  %v3046 = vshrl.u32 %v3045, 7
  %v3047 = vsub.s32 3, %v3046
  %v3048 = vrot.slane %v2681, %v3047
  %v3049 = vlaneseq
  %v3050 = vshrl.u32 %v3049, 7
  %v3051 = vsub.s32 3, %v3050
  %v3052 = vrot.slane %v2688, %v3051
  %v3053 = vlaneseq
  %v3054 = vshrl.u32 %v3053, 7
  %v3055 = vsub.s32 3, %v3054
  %v3056 = vrot.slane %v2689, %v3055
  %3058 = vset.pattern.permute.xlu0 0
  %3059 = vperm.xlu0 %3058, %v2705
  %v3060 = vpop.permute.xlu0 %3059
  %v3062 = vmul.f32 %v3044, %v3060
  %v3063 = vmul.f32 %v3048, %v3060
  %v3064 = vmul.f32 %v3052, %v3060
  %v3065 = vmul.f32 %v3056, %v3060
  %v3066 = vadd.f32 %v3037, %v3062
  %v3067 = vadd.f32 %v3038, %v3063
  %v3068 = vadd.f32 %v3039, %v3064
  %v3069 = vadd.f32 %v3040, %v3065
  %v3070 = vlaneseq
  %v3071 = vshrl.u32 %v3070, 7
  %v3072 = vsub.s32 4, %v3071
  %v3073 = vrot.slane %v2680, %v3072
  %v3074 = vlaneseq
  %v3075 = vshrl.u32 %v3074, 7
  %v3076 = vsub.s32 4, %v3075
  %v3077 = vrot.slane %v2681, %v3076
  %v3078 = vlaneseq
  %v3079 = vshrl.u32 %v3078, 7
  %v3080 = vsub.s32 4, %v3079
  %v3081 = vrot.slane %v2688, %v3080
  %v3082 = vlaneseq
  %v3083 = vshrl.u32 %v3082, 7
  %v3084 = vsub.s32 4, %v3083
  %v3085 = vrot.slane %v2689, %v3084
  %3087 = vset.pattern.permute.xlu0 0
  %3088 = vperm.xlu0 %3087, %v2706
  %v3089 = vpop.permute.xlu0 %3088
  %v3091 = vmul.f32 %v3073, %v3089
  %v3092 = vmul.f32 %v3077, %v3089
  %v3093 = vmul.f32 %v3081, %v3089
  %v3094 = vmul.f32 %v3085, %v3089
  %v3095 = vadd.f32 %v3066, %v3091
  %v3096 = vadd.f32 %v3067, %v3092
  %v3097 = vadd.f32 %v3068, %v3093
  %v3098 = vadd.f32 %v3069, %v3094
  %v3099 = vlaneseq
  %v3100 = vshrl.u32 %v3099, 7
  %v3101 = vsub.s32 5, %v3100
  %v3102 = vrot.slane %v2680, %v3101
  %v3103 = vlaneseq
  %v3104 = vshrl.u32 %v3103, 7
  %v3105 = vsub.s32 5, %v3104
  %v3106 = vrot.slane %v2681, %v3105
  %v3107 = vlaneseq
  %v3108 = vshrl.u32 %v3107, 7
  %v3109 = vsub.s32 5, %v3108
  %v3110 = vrot.slane %v2688, %v3109
  %v3111 = vlaneseq
  %v3112 = vshrl.u32 %v3111, 7
  %v3113 = vsub.s32 5, %v3112
  %v3114 = vrot.slane %v2689, %v3113
  %3116 = vset.pattern.permute.xlu0 0
  %3117 = vperm.xlu0 %3116, %v2707
  %v3118 = vpop.permute.xlu0 %3117
  %v3120 = vmul.f32 %v3102, %v3118
  %v3121 = vmul.f32 %v3106, %v3118
  %v3122 = vmul.f32 %v3110, %v3118
  %v3123 = vmul.f32 %v3114, %v3118
  %v3124 = vadd.f32 %v3095, %v3120
  %v3125 = vadd.f32 %v3096, %v3121
  %v3126 = vadd.f32 %v3097, %v3122
  %v3127 = vadd.f32 %v3098, %v3123
  %v3128 = vlaneseq
  %v3129 = vshrl.u32 %v3128, 7
  %v3130 = vsub.s32 6, %v3129
  %v3131 = vrot.slane %v2680, %v3130
  %v3132 = vlaneseq
  %v3133 = vshrl.u32 %v3132, 7
  %v3134 = vsub.s32 6, %v3133
  %v3135 = vrot.slane %v2681, %v3134
  %v3136 = vlaneseq
  %v3137 = vshrl.u32 %v3136, 7
  %v3138 = vsub.s32 6, %v3137
  %v3139 = vrot.slane %v2688, %v3138
  %v3140 = vlaneseq
  %v3141 = vshrl.u32 %v3140, 7
  %v3142 = vsub.s32 6, %v3141
  %v3143 = vrot.slane %v2689, %v3142
  %3145 = vset.pattern.permute.xlu0 0
  %3146 = vperm.xlu0 %3145, %v2708
  %v3147 = vpop.permute.xlu0 %3146
  %v3149 = vmul.f32 %v3131, %v3147
  %v3150 = vmul.f32 %v3135, %v3147
  %v3151 = vmul.f32 %v3139, %v3147
  %v3152 = vmul.f32 %v3143, %v3147
  %v3153 = vadd.f32 %v3124, %v3149
  %v3154 = vadd.f32 %v3125, %v3150
  %v3155 = vadd.f32 %v3126, %v3151
  %v3156 = vadd.f32 %v3127, %v3152
  %v3157 = vlaneseq
  %v3158 = vshrl.u32 %v3157, 7
  %v3159 = vsub.s32 7, %v3158
  %v3160 = vrot.slane %v2680, %v3159
  %v3161 = vlaneseq
  %v3162 = vshrl.u32 %v3161, 7
  %v3163 = vsub.s32 7, %v3162
  %v3164 = vrot.slane %v2681, %v3163
  %v3165 = vlaneseq
  %v3166 = vshrl.u32 %v3165, 7
  %v3167 = vsub.s32 7, %v3166
  %v3168 = vrot.slane %v2688, %v3167
  %v3169 = vlaneseq
  %v3170 = vshrl.u32 %v3169, 7
  %v3171 = vsub.s32 7, %v3170
  %v3172 = vrot.slane %v2689, %v3171
  %3174 = vset.pattern.permute.xlu0 0
  %3175 = vperm.xlu0 %3174, %v2709
  %v3176 = vpop.permute.xlu0 %3175
  %v3178 = vmul.f32 %v3160, %v3176
  %v3179 = vmul.f32 %v3164, %v3176
  %v3180 = vmul.f32 %v3168, %v3176
  %v3181 = vmul.f32 %v3172, %v3176
  %v3182 = vadd.f32 %v3153, %v3178
  %v3183 = vadd.f32 %v3154, %v3179
  %v3184 = vadd.f32 %v3155, %v3180
  %v3185 = vadd.f32 %v3156, %v3181
  %v3186 = vlaneseq
  %v3187 = vshrl.u32 %v3186, 7
  %v3188 = vsub.s32 0, %v3187
  %v3189 = vrot.slane %v2682, %v3188
  %v3190 = vlaneseq
  %v3191 = vshrl.u32 %v3190, 7
  %v3192 = vsub.s32 0, %v3191
  %v3193 = vrot.slane %v2683, %v3192
  %v3194 = vlaneseq
  %v3195 = vshrl.u32 %v3194, 7
  %v3196 = vsub.s32 0, %v3195
  %v3197 = vrot.slane %v2690, %v3196
  %v3198 = vlaneseq
  %v3199 = vshrl.u32 %v3198, 7
  %v3200 = vsub.s32 0, %v3199
  %v3201 = vrot.slane %v2691, %v3200
  %3203 = vset.pattern.permute.xlu0 0
  %3204 = vperm.xlu0 %3203, %v2710
  %v3205 = vpop.permute.xlu0 %3204
  %v3207 = vmul.f32 %v3189, %v3205
  %v3208 = vmul.f32 %v3193, %v3205
  %v3209 = vmul.f32 %v3197, %v3205
  %v3210 = vmul.f32 %v3201, %v3205
  %v3211 = vadd.f32 %v3182, %v3207
  %v3212 = vadd.f32 %v3183, %v3208
  %v3213 = vadd.f32 %v3184, %v3209
  %v3214 = vadd.f32 %v3185, %v3210
  %v3215 = vlaneseq
  %v3216 = vshrl.u32 %v3215, 7
  %v3217 = vsub.s32 1, %v3216
  %v3218 = vrot.slane %v2682, %v3217
  %v3219 = vlaneseq
  %v3220 = vshrl.u32 %v3219, 7
  %v3221 = vsub.s32 1, %v3220
  %v3222 = vrot.slane %v2683, %v3221
  %v3223 = vlaneseq
  %v3224 = vshrl.u32 %v3223, 7
  %v3225 = vsub.s32 1, %v3224
  %v3226 = vrot.slane %v2690, %v3225
  %v3227 = vlaneseq
  %v3228 = vshrl.u32 %v3227, 7
  %v3229 = vsub.s32 1, %v3228
  %v3230 = vrot.slane %v2691, %v3229
  %3232 = vset.pattern.permute.xlu0 0
  %3233 = vperm.xlu0 %3232, %v2711
  %v3234 = vpop.permute.xlu0 %3233
  %v3236 = vmul.f32 %v3218, %v3234
  %v3237 = vmul.f32 %v3222, %v3234
  %v3238 = vmul.f32 %v3226, %v3234
  %v3239 = vmul.f32 %v3230, %v3234
  %v3240 = vadd.f32 %v3211, %v3236
  %v3241 = vadd.f32 %v3212, %v3237
  %v3242 = vadd.f32 %v3213, %v3238
  %v3243 = vadd.f32 %v3214, %v3239
  %v3244 = vlaneseq
  %v3245 = vshrl.u32 %v3244, 7
  %v3246 = vsub.s32 2, %v3245
  %v3247 = vrot.slane %v2682, %v3246
  %v3248 = vlaneseq
  %v3249 = vshrl.u32 %v3248, 7
  %v3250 = vsub.s32 2, %v3249
  %v3251 = vrot.slane %v2683, %v3250
  %v3252 = vlaneseq
  %v3253 = vshrl.u32 %v3252, 7
  %v3254 = vsub.s32 2, %v3253
  %v3255 = vrot.slane %v2690, %v3254
  %v3256 = vlaneseq
  %v3257 = vshrl.u32 %v3256, 7
  %v3258 = vsub.s32 2, %v3257
  %v3259 = vrot.slane %v2691, %v3258
  %3261 = vset.pattern.permute.xlu0 0
  %3262 = vperm.xlu0 %3261, %v2712
  %v3263 = vpop.permute.xlu0 %3262
  %v3265 = vmul.f32 %v3247, %v3263
  %v3266 = vmul.f32 %v3251, %v3263
  %v3267 = vmul.f32 %v3255, %v3263
  %v3268 = vmul.f32 %v3259, %v3263
  %v3269 = vadd.f32 %v3240, %v3265
  %v3270 = vadd.f32 %v3241, %v3266
  %v3271 = vadd.f32 %v3242, %v3267
  %v3272 = vadd.f32 %v3243, %v3268
  %v3273 = vlaneseq
  %v3274 = vshrl.u32 %v3273, 7
  %v3275 = vsub.s32 3, %v3274
  %v3276 = vrot.slane %v2682, %v3275
  %v3277 = vlaneseq
  %v3278 = vshrl.u32 %v3277, 7
  %v3279 = vsub.s32 3, %v3278
  %v3280 = vrot.slane %v2683, %v3279
  %v3281 = vlaneseq
  %v3282 = vshrl.u32 %v3281, 7
  %v3283 = vsub.s32 3, %v3282
  %v3284 = vrot.slane %v2690, %v3283
  %v3285 = vlaneseq
  %v3286 = vshrl.u32 %v3285, 7
  %v3287 = vsub.s32 3, %v3286
  %v3288 = vrot.slane %v2691, %v3287
  %3290 = vset.pattern.permute.xlu0 0
  %3291 = vperm.xlu0 %3290, %v2713
  %v3292 = vpop.permute.xlu0 %3291
  %v3294 = vmul.f32 %v3276, %v3292
  %v3295 = vmul.f32 %v3280, %v3292
  %v3296 = vmul.f32 %v3284, %v3292
  %v3297 = vmul.f32 %v3288, %v3292
  %v3298 = vadd.f32 %v3269, %v3294
  %v3299 = vadd.f32 %v3270, %v3295
  %v3300 = vadd.f32 %v3271, %v3296
  %v3301 = vadd.f32 %v3272, %v3297
  %v3302 = vlaneseq
  %v3303 = vshrl.u32 %v3302, 7
  %v3304 = vsub.s32 4, %v3303
  %v3305 = vrot.slane %v2682, %v3304
  %v3306 = vlaneseq
  %v3307 = vshrl.u32 %v3306, 7
  %v3308 = vsub.s32 4, %v3307
  %v3309 = vrot.slane %v2683, %v3308
  %v3310 = vlaneseq
  %v3311 = vshrl.u32 %v3310, 7
  %v3312 = vsub.s32 4, %v3311
  %v3313 = vrot.slane %v2690, %v3312
  %v3314 = vlaneseq
  %v3315 = vshrl.u32 %v3314, 7
  %v3316 = vsub.s32 4, %v3315
  %v3317 = vrot.slane %v2691, %v3316
  %3319 = vset.pattern.permute.xlu0 0
  %3320 = vperm.xlu0 %3319, %v2714
  %v3321 = vpop.permute.xlu0 %3320
  %v3323 = vmul.f32 %v3305, %v3321
  %v3324 = vmul.f32 %v3309, %v3321
  %v3325 = vmul.f32 %v3313, %v3321
  %v3326 = vmul.f32 %v3317, %v3321
  %v3327 = vadd.f32 %v3298, %v3323
  %v3328 = vadd.f32 %v3299, %v3324
  %v3329 = vadd.f32 %v3300, %v3325
  %v3330 = vadd.f32 %v3301, %v3326
  %v3331 = vlaneseq
  %v3332 = vshrl.u32 %v3331, 7
  %v3333 = vsub.s32 5, %v3332
  %v3334 = vrot.slane %v2682, %v3333
  %v3335 = vlaneseq
  %v3336 = vshrl.u32 %v3335, 7
  %v3337 = vsub.s32 5, %v3336
  %v3338 = vrot.slane %v2683, %v3337
  %v3339 = vlaneseq
  %v3340 = vshrl.u32 %v3339, 7
  %v3341 = vsub.s32 5, %v3340
  %v3342 = vrot.slane %v2690, %v3341
  %v3343 = vlaneseq
  %v3344 = vshrl.u32 %v3343, 7
  %v3345 = vsub.s32 5, %v3344
  %v3346 = vrot.slane %v2691, %v3345
  %3348 = vset.pattern.permute.xlu0 0
  %3349 = vperm.xlu0 %3348, %v2715
  %v3350 = vpop.permute.xlu0 %3349
  %v3352 = vmul.f32 %v3334, %v3350
  %v3353 = vmul.f32 %v3338, %v3350
  %v3354 = vmul.f32 %v3342, %v3350
  %v3355 = vmul.f32 %v3346, %v3350
  %v3356 = vadd.f32 %v3327, %v3352
  %v3357 = vadd.f32 %v3328, %v3353
  %v3358 = vadd.f32 %v3329, %v3354
  %v3359 = vadd.f32 %v3330, %v3355
  %v3360 = vlaneseq
  %v3361 = vshrl.u32 %v3360, 7
  %v3362 = vsub.s32 6, %v3361
  %v3363 = vrot.slane %v2682, %v3362
  %v3364 = vlaneseq
  %v3365 = vshrl.u32 %v3364, 7
  %v3366 = vsub.s32 6, %v3365
  %v3367 = vrot.slane %v2683, %v3366
  %v3368 = vlaneseq
  %v3369 = vshrl.u32 %v3368, 7
  %v3370 = vsub.s32 6, %v3369
  %v3371 = vrot.slane %v2690, %v3370
  %v3372 = vlaneseq
  %v3373 = vshrl.u32 %v3372, 7
  %v3374 = vsub.s32 6, %v3373
  %v3375 = vrot.slane %v2691, %v3374
  %3377 = vset.pattern.permute.xlu0 0
  %3378 = vperm.xlu0 %3377, %v2716
  %v3379 = vpop.permute.xlu0 %3378
  %v3381 = vmul.f32 %v3363, %v3379
  %v3382 = vmul.f32 %v3367, %v3379
  %v3383 = vmul.f32 %v3371, %v3379
  %v3384 = vmul.f32 %v3375, %v3379
  %v3385 = vadd.f32 %v3356, %v3381
  %v3386 = vadd.f32 %v3357, %v3382
  %v3387 = vadd.f32 %v3358, %v3383
  %v3388 = vadd.f32 %v3359, %v3384
  %v3389 = vlaneseq
  %v3390 = vshrl.u32 %v3389, 7
  %v3391 = vsub.s32 7, %v3390
  %v3392 = vrot.slane %v2682, %v3391
  %v3393 = vlaneseq
  %v3394 = vshrl.u32 %v3393, 7
  %v3395 = vsub.s32 7, %v3394
  %v3396 = vrot.slane %v2683, %v3395
  %v3397 = vlaneseq
  %v3398 = vshrl.u32 %v3397, 7
  %v3399 = vsub.s32 7, %v3398
  %v3400 = vrot.slane %v2690, %v3399
  %v3401 = vlaneseq
  %v3402 = vshrl.u32 %v3401, 7
  %v3403 = vsub.s32 7, %v3402
  %v3404 = vrot.slane %v2691, %v3403
  %3406 = vset.pattern.permute.xlu0 0
  %3407 = vperm.xlu0 %3406, %v2717
  %v3408 = vpop.permute.xlu0 %3407
  %v3410 = vmul.f32 %v3392, %v3408
  %v3411 = vmul.f32 %v3396, %v3408
  %v3412 = vmul.f32 %v3400, %v3408
  %v3413 = vmul.f32 %v3404, %v3408
  %v3414 = vadd.f32 %v3385, %v3410
  %v3415 = vadd.f32 %v3386, %v3411
  %v3416 = vadd.f32 %v3387, %v3412
  %v3417 = vadd.f32 %v3388, %v3413
  %v3418 = vlaneseq
  %v3419 = vshrl.u32 %v3418, 7
  %v3420 = vsub.s32 0, %v3419
  %v3421 = vrot.slane %v2684, %v3420
  %v3422 = vlaneseq
  %v3423 = vshrl.u32 %v3422, 7
  %v3424 = vsub.s32 0, %v3423
  %v3425 = vrot.slane %v2685, %v3424
  %v3426 = vlaneseq
  %v3427 = vshrl.u32 %v3426, 7
  %v3428 = vsub.s32 0, %v3427
  %v3429 = vrot.slane %v2692, %v3428
  %v3430 = vlaneseq
  %v3431 = vshrl.u32 %v3430, 7
  %v3432 = vsub.s32 0, %v3431
  %v3433 = vrot.slane %v2693, %v3432
  %3435 = vset.pattern.permute.xlu0 0
  %3436 = vperm.xlu0 %3435, %v2718
  %v3437 = vpop.permute.xlu0 %3436
  %v3439 = vmul.f32 %v3421, %v3437
  %v3440 = vmul.f32 %v3425, %v3437
  %v3441 = vmul.f32 %v3429, %v3437
  %v3442 = vmul.f32 %v3433, %v3437
  %v3443 = vadd.f32 %v3414, %v3439
  %v3444 = vadd.f32 %v3415, %v3440
  %v3445 = vadd.f32 %v3416, %v3441
  %v3446 = vadd.f32 %v3417, %v3442
  %v3447 = vlaneseq
  %v3448 = vshrl.u32 %v3447, 7
  %v3449 = vsub.s32 1, %v3448
  %v3450 = vrot.slane %v2684, %v3449
  %v3451 = vlaneseq
  %v3452 = vshrl.u32 %v3451, 7
  %v3453 = vsub.s32 1, %v3452
  %v3454 = vrot.slane %v2685, %v3453
  %v3455 = vlaneseq
  %v3456 = vshrl.u32 %v3455, 7
  %v3457 = vsub.s32 1, %v3456
  %v3458 = vrot.slane %v2692, %v3457
  %v3459 = vlaneseq
  %v3460 = vshrl.u32 %v3459, 7
  %v3461 = vsub.s32 1, %v3460
  %v3462 = vrot.slane %v2693, %v3461
  %3464 = vset.pattern.permute.xlu0 0
  %3465 = vperm.xlu0 %3464, %v2719
  %v3466 = vpop.permute.xlu0 %3465
  %v3468 = vmul.f32 %v3450, %v3466
  %v3469 = vmul.f32 %v3454, %v3466
  %v3470 = vmul.f32 %v3458, %v3466
  %v3471 = vmul.f32 %v3462, %v3466
  %v3472 = vadd.f32 %v3443, %v3468
  %v3473 = vadd.f32 %v3444, %v3469
  %v3474 = vadd.f32 %v3445, %v3470
  %v3475 = vadd.f32 %v3446, %v3471
  %v3476 = vlaneseq
  %v3477 = vshrl.u32 %v3476, 7
  %v3478 = vsub.s32 2, %v3477
  %v3479 = vrot.slane %v2684, %v3478
  %v3480 = vlaneseq
  %v3481 = vshrl.u32 %v3480, 7
  %v3482 = vsub.s32 2, %v3481
  %v3483 = vrot.slane %v2685, %v3482
  %v3484 = vlaneseq
  %v3485 = vshrl.u32 %v3484, 7
  %v3486 = vsub.s32 2, %v3485
  %v3487 = vrot.slane %v2692, %v3486
  %v3488 = vlaneseq
  %v3489 = vshrl.u32 %v3488, 7
  %v3490 = vsub.s32 2, %v3489
  %v3491 = vrot.slane %v2693, %v3490
  %3493 = vset.pattern.permute.xlu0 0
  %3494 = vperm.xlu0 %3493, %v2720
  %v3495 = vpop.permute.xlu0 %3494
  %v3497 = vmul.f32 %v3479, %v3495
  %v3498 = vmul.f32 %v3483, %v3495
  %v3499 = vmul.f32 %v3487, %v3495
  %v3500 = vmul.f32 %v3491, %v3495
  %v3501 = vadd.f32 %v3472, %v3497
  %v3502 = vadd.f32 %v3473, %v3498
  %v3503 = vadd.f32 %v3474, %v3499
  %v3504 = vadd.f32 %v3475, %v3500
  %v3505 = vlaneseq
  %v3506 = vshrl.u32 %v3505, 7
  %v3507 = vsub.s32 3, %v3506
  %v3508 = vrot.slane %v2684, %v3507
  %v3509 = vlaneseq
  %v3510 = vshrl.u32 %v3509, 7
  %v3511 = vsub.s32 3, %v3510
  %v3512 = vrot.slane %v2685, %v3511
  %v3513 = vlaneseq
  %v3514 = vshrl.u32 %v3513, 7
  %v3515 = vsub.s32 3, %v3514
  %v3516 = vrot.slane %v2692, %v3515
  %v3517 = vlaneseq
  %v3518 = vshrl.u32 %v3517, 7
  %v3519 = vsub.s32 3, %v3518
  %v3520 = vrot.slane %v2693, %v3519
  %3522 = vset.pattern.permute.xlu0 0
  %3523 = vperm.xlu0 %3522, %v2721
  %v3524 = vpop.permute.xlu0 %3523
  %v3526 = vmul.f32 %v3508, %v3524
  %v3527 = vmul.f32 %v3512, %v3524
  %v3528 = vmul.f32 %v3516, %v3524
  %v3529 = vmul.f32 %v3520, %v3524
  %v3530 = vadd.f32 %v3501, %v3526
  %v3531 = vadd.f32 %v3502, %v3527
  %v3532 = vadd.f32 %v3503, %v3528
  %v3533 = vadd.f32 %v3504, %v3529
  %v3534 = vlaneseq
  %v3535 = vshrl.u32 %v3534, 7
  %v3536 = vsub.s32 4, %v3535
  %v3537 = vrot.slane %v2684, %v3536
  %v3538 = vlaneseq
  %v3539 = vshrl.u32 %v3538, 7
  %v3540 = vsub.s32 4, %v3539
  %v3541 = vrot.slane %v2685, %v3540
  %v3542 = vlaneseq
  %v3543 = vshrl.u32 %v3542, 7
  %v3544 = vsub.s32 4, %v3543
  %v3545 = vrot.slane %v2692, %v3544
  %v3546 = vlaneseq
  %v3547 = vshrl.u32 %v3546, 7
  %v3548 = vsub.s32 4, %v3547
  %v3549 = vrot.slane %v2693, %v3548
  %3551 = vset.pattern.permute.xlu0 0
  %3552 = vperm.xlu0 %3551, %v2722
  %v3553 = vpop.permute.xlu0 %3552
  %v3555 = vmul.f32 %v3537, %v3553
  %v3556 = vmul.f32 %v3541, %v3553
  %v3557 = vmul.f32 %v3545, %v3553
  %v3558 = vmul.f32 %v3549, %v3553
  %v3559 = vadd.f32 %v3530, %v3555
  %v3560 = vadd.f32 %v3531, %v3556
  %v3561 = vadd.f32 %v3532, %v3557
  %v3562 = vadd.f32 %v3533, %v3558
  %v3563 = vlaneseq
  %v3564 = vshrl.u32 %v3563, 7
  %v3565 = vsub.s32 5, %v3564
  %v3566 = vrot.slane %v2684, %v3565
  %v3567 = vlaneseq
  %v3568 = vshrl.u32 %v3567, 7
  %v3569 = vsub.s32 5, %v3568
  %v3570 = vrot.slane %v2685, %v3569
  %v3571 = vlaneseq
  %v3572 = vshrl.u32 %v3571, 7
  %v3573 = vsub.s32 5, %v3572
  %v3574 = vrot.slane %v2692, %v3573
  %v3575 = vlaneseq
  %v3576 = vshrl.u32 %v3575, 7
  %v3577 = vsub.s32 5, %v3576
  %v3578 = vrot.slane %v2693, %v3577
  %3580 = vset.pattern.permute.xlu0 0
  %3581 = vperm.xlu0 %3580, %v2723
  %v3582 = vpop.permute.xlu0 %3581
  %v3584 = vmul.f32 %v3566, %v3582
  %v3585 = vmul.f32 %v3570, %v3582
  %v3586 = vmul.f32 %v3574, %v3582
  %v3587 = vmul.f32 %v3578, %v3582
  %v3588 = vadd.f32 %v3559, %v3584
  %v3589 = vadd.f32 %v3560, %v3585
  %v3590 = vadd.f32 %v3561, %v3586
  %v3591 = vadd.f32 %v3562, %v3587
  %v3592 = vlaneseq
  %v3593 = vshrl.u32 %v3592, 7
  %v3594 = vsub.s32 6, %v3593
  %v3595 = vrot.slane %v2684, %v3594
  %v3596 = vlaneseq
  %v3597 = vshrl.u32 %v3596, 7
  %v3598 = vsub.s32 6, %v3597
  %v3599 = vrot.slane %v2685, %v3598
  %v3600 = vlaneseq
  %v3601 = vshrl.u32 %v3600, 7
  %v3602 = vsub.s32 6, %v3601
  %v3603 = vrot.slane %v2692, %v3602
  %v3604 = vlaneseq
  %v3605 = vshrl.u32 %v3604, 7
  %v3606 = vsub.s32 6, %v3605
  %v3607 = vrot.slane %v2693, %v3606
  %3609 = vset.pattern.permute.xlu0 0
  %3610 = vperm.xlu0 %3609, %v2724
  %v3611 = vpop.permute.xlu0 %3610
  %v3613 = vmul.f32 %v3595, %v3611
  %v3614 = vmul.f32 %v3599, %v3611
  %v3615 = vmul.f32 %v3603, %v3611
  %v3616 = vmul.f32 %v3607, %v3611
  %v3617 = vadd.f32 %v3588, %v3613
  %v3618 = vadd.f32 %v3589, %v3614
  %v3619 = vadd.f32 %v3590, %v3615
  %v3620 = vadd.f32 %v3591, %v3616
  %v3621 = vlaneseq
  %v3622 = vshrl.u32 %v3621, 7
  %v3623 = vsub.s32 7, %v3622
  %v3624 = vrot.slane %v2684, %v3623
  %v3625 = vlaneseq
  %v3626 = vshrl.u32 %v3625, 7
  %v3627 = vsub.s32 7, %v3626
  %v3628 = vrot.slane %v2685, %v3627
  %v3629 = vlaneseq
  %v3630 = vshrl.u32 %v3629, 7
  %v3631 = vsub.s32 7, %v3630
  %v3632 = vrot.slane %v2692, %v3631
  %v3633 = vlaneseq
  %v3634 = vshrl.u32 %v3633, 7
  %v3635 = vsub.s32 7, %v3634
  %v3636 = vrot.slane %v2693, %v3635
  %3638 = vset.pattern.permute.xlu0 0
  %3639 = vperm.xlu0 %3638, %v2725
  %v3640 = vpop.permute.xlu0 %3639
  %v3642 = vmul.f32 %v3624, %v3640
  %v3643 = vmul.f32 %v3628, %v3640
  %v3644 = vmul.f32 %v3632, %v3640
  %v3645 = vmul.f32 %v3636, %v3640
  %v3646 = vadd.f32 %v3617, %v3642
  %v3647 = vadd.f32 %v3618, %v3643
  %v3648 = vadd.f32 %v3619, %v3644
  %v3649 = vadd.f32 %v3620, %v3645
  %v3650 = vld [vmem:[%s12] sm:$0xff]
  %v3651 = vld [vmem:[%s13] sm:$0xff]
  %v3652 = vadd.f32 %v3646, %v3647
  %3653 = vadd.xlane.f32.xlu0 %v3652
  %v3654 = vpop.xlane.xlu0 %3653
  %v3655 = vadd.f32 %v3648, %v3649
  %3656 = vadd.xlane.f32.xlu0 %v3655
  %v3657 = vpop.xlane.xlu0 %3656
  %v3658 = vmul.f32 %v3646, %v3646
  %v3659 = vmul.f32 %v3647, %v3647
  %v3660 = vmul.f32 %v3648, %v3648
  %v3661 = vmul.f32 %v3649, %v3649
  %v3662 = vadd.f32 %v3658, %v3659
  %3663 = vadd.xlane.f32.xlu0 %v3662
  %v3664 = vpop.xlane.xlu0 %3663
  %v3665 = vadd.f32 %v3660, %v3661
  %3666 = vadd.xlane.f32.xlu0 %v3665
  %v3667 = vpop.xlane.xlu0 %3666
  %v3668 = vadd.f32 %v3654, %v3657
  %v3669 = vmul.f32 %v3668, %v687
  %v3670 = vadd.f32 %v3664, %v3667
  %v3671 = vmul.f32 %v3670, %v687
  %v3672 = vmul.f32 %v3669, %v3669
  %v3673 = vsub.f32 %v3671, %v3672
  %v3674 = vmax.f32 %v3673, 0.0
  %v3675 = vadd.f32 %v3674, 0.001
  %v3676 = vrsqrt.pop %v3675
  %v3677 = vsub.f32 %v3646, %v3669
  %v3678 = vsub.f32 %v3647, %v3669
  %v3679 = vsub.f32 %v3648, %v3669
  %v3680 = vsub.f32 %v3649, %v3669
  %v3681 = vmul.f32 %v3676, %v3650
  %3683 = vset.pattern.permute.xlu0 0
  %3684 = vperm.xlu0 %3683, %v3681
  %v3685 = vpop.permute.xlu0 %3684
  %v3687 = vmul.f32 %v3677, %v3685
  %v3688 = vmul.f32 %v3678, %v3685
  %v3689 = vmul.f32 %v3679, %v3685
  %v3690 = vmul.f32 %v3680, %v3685
  %3692 = vset.pattern.permute.xlu0 0
  %3693 = vperm.xlu0 %3692, %v3651
  %v3694 = vpop.permute.xlu0 %3693
  %v3696 = vadd.f32 %v3687, %v3694
  %v3697 = vadd.f32 %v3688, %v3694
  %v3698 = vadd.f32 %v3689, %v3694
  %v3699 = vadd.f32 %v3690, %v3694
  %v3700 = vadd.f32 %v3696, %v47
  %v3701 = vadd.f32 %v3697, %v48
  %v3702 = vadd.f32 %v3698, %v49
  %v3703 = vadd.f32 %v3699, %v50
  %3704 = vst [vmem:[%s14] sm:$0xff] %v3700
  %3705 = vst [vmem:[%s14 + $0x8] sm:$0xff] %v3701
  %3706 = vst [vmem:[%s14 + $0x10] sm:$0xff] %v3702
  %3707 = vst [vmem:[%s14 + $0x18] sm:$0xff] %v3703
  // Predicated region
  $region58: #{mbconv_block.1} parent=0 // pred_check
    _
  $region59: #{mbconv_block.1} parent=0 // pred_check_branch
    %3709 = sbr.rel (0) target = $region61
  $region60: #{mbconv_block.1} parent=0 // pred_region
    _
  $region61: #{mbconv_block.1} parent=0 // pred_fallthru
    _
  // Predicated region
  $region62: #{mbconv_block.1} parent=0 // pred_check
    _
  $region63: #{mbconv_block.1} parent=0 // pred_check_branch
    %3711 = sbr.rel (0) target = $region65
  $region64: #{mbconv_block.1} parent=0 // pred_region
    _
  $region65: #{mbconv_block.1} parent=0 // pred_fallthru
    _

</llo_original>
